<compile_context>
chip_gen: v7x
topology: tpu7x:2x2x1
jax: 0.10.0
libtpu: 0.0.40
codegen_flags: <defaults>
</compile_context>

<pallas_src>
import functools

import jax
import jax.numpy as jnp
from jax.experimental import pallas as pl
from jax.experimental.pallas import tpu as pltpu


# ----------------------------------------------------------------------------
# device-aware tiling configuration
# ----------------------------------------------------------------------------
def _cdiv(a, b):
    return -(-a // b)


def _round_up(a, q):
    return _cdiv(a, q) * q


@functools.lru_cache(maxsize=None)
def _device_cfg():
    """Generation-gated tile targets + scoped-VMEM limit.
    v5e/v6e have 128 MiB VMEM; v7x has 64 MiB -> smaller tiles, smaller limit.
    Falls back to the conservative (v7x-safe) config if the query fails."""
    vmem_cap = 64 * 2**20
    try:
        vmem_cap = int(pltpu.get_tpu_info().vmem_capacity_bytes)
    except Exception:
        pass
    if vmem_cap >= 100 * 2**20:                       # v5e / v6e (128 MiB)
        return {"tm": 512, "tn": 512, "tk": 2048, "vmem": 80 * 2**20}
    return {"tm": 256, "tn": 512, "tk": 1024, "vmem": 40 * 2**20}   # v7x


def _tile(dim, target, quantum):
    """Pick (tile, padded_dim).  Prefer a tile that divides `dim` exactly
    (zero pad waste); otherwise size the tile to track dim/ceil(dim/target)."""
    if dim <= target:
        return dim, dim
    if dim % quantum == 0:
        cand = (min(target, dim) // quantum) * quantum
        lo = max(quantum, (target // (2 * quantum)) * quantum)
        while cand >= lo:
            if dim % cand == 0:
                return cand, dim
            cand -= quantum
    n = _cdiv(dim, target)
    t = _round_up(_cdiv(dim, n), quantum)
    return t, _round_up(dim, t)


def _pad2(a, m, n):
    M, N = a.shape
    if M == m and N == n:
        return a
    return jnp.pad(a, ((0, m - M), (0, n - N)))


# ----------------------------------------------------------------------------
# fused (LayerNorm) -> matmul -> (+bias, activation, +residual) kernel
# ----------------------------------------------------------------------------
def _fused_linear_kernel(*refs, nk, activation, fuse_ln, fuse_res, eps):
    it = iter(refs)
    x_ref = next(it)
    w_ref = next(it)
    b_ref = next(it)
    g_ref = be_ref = r_ref = None
    if fuse_ln:
        g_ref = next(it)
        be_ref = next(it)
    if fuse_res:
        r_ref = next(it)
    o_ref = next(it)
    acc_ref = next(it)
    xn_ref = next(it) if fuse_ln else None

    j = pl.program_id(1)
    k = pl.program_id(2)

    @pl.when(k == 0)
    def _():
        acc_ref[...] = jnp.zeros_like(acc_ref)

    if fuse_ln:
        # LayerNorm once per row block (j == 0, nk == 1); the normalized bf16
        # rows stay in VMEM scratch and are reused for every column tile j.
        @pl.when(j == 0)
        def _():
            xf = x_ref[...].astype(jnp.float32)
            mu = jnp.mean(xf, axis=-1, keepdims=True)
            var = jnp.mean(jnp.square(xf - mu), axis=-1, keepdims=True)
            xn = (xf - mu) * jax.lax.rsqrt(var + eps)
            xn = xn * g_ref[...].astype(jnp.float32) + be_ref[...].astype(jnp.float32)
            xn_ref[...] = xn.astype(jnp.bfloat16)

        x = xn_ref[...]
    else:
        x = x_ref[...].astype(jnp.bfloat16)

    # bf16 operands on the MXU, f32 accumulation in VMEM scratch.
    acc_ref[...] += jnp.dot(x, w_ref[...].astype(jnp.bfloat16),
                            preferred_element_type=jnp.float32)

    @pl.when(k == nk - 1)
    def _():
        y = acc_ref[...] + b_ref[...].astype(jnp.float32)
        if activation == "quick_gelu":
            y = y * jax.nn.sigmoid(1.702 * y)
        elif activation == "relu":
            y = jnp.maximum(y, 0.0)
        if fuse_res:
            y = y + r_ref[...].astype(jnp.float32)   # residual add in f32
        o_ref[...] = y.astype(o_ref.dtype)


def fused_linear(x, w, b, *, activation="none", residual=None, ln=None, eps=1e-5,
                 out_dtype=jnp.bfloat16, tm_target=None, cfg=None):
    """y = [LN](x) @ w + b (+activation) (+residual).  x:(M,K) w:(K,N) b:(N,)."""
    cfg = cfg or _device_cfg()
    M, K = x.shape
    K2, N = w.shape
    assert K2 == K
    fuse_ln = ln is not None
    fuse_res = residual is not None

    tm, Mp = _tile(M, tm_target if tm_target else cfg["tm"], 8)
    tn, Npad = _tile(N, cfg["tn"], 128)
    if fuse_ln:
        tk, Kp = K, K                    # LN needs the full feature dim
    else:
        tk, Kp = _tile(K, cfg["tk"], 128)
    nk = Kp // tk

    # On the residual-stream path these are no-ops (dims pre-aligned once).
    xp = _pad2(x, Mp, Kp)
    wp = _pad2(w, Kp, Npad)
    bp = _pad2(b.reshape(1, N), 1, Npad)

    inputs = [xp, wp, bp]
    in_specs = [
        pl.BlockSpec((tm, tk),
                     (lambda i, j, k: (i, 0)) if fuse_ln else (lambda i, j, k: (i, k))),
        pl.BlockSpec((tk, tn), lambda i, j, k: (k, j)),
        pl.BlockSpec((1, tn), lambda i, j, k: (0, j)),
    ]
    if fuse_ln:
        g, be = ln
        inputs += [g.reshape(1, K), be.reshape(1, K)]
        in_specs += [pl.BlockSpec((1, K), lambda i, j, k: (0, 0)),
                     pl.BlockSpec((1, K), lambda i, j, k: (0, 0))]
    if fuse_res:
        inputs.append(_pad2(residual, Mp, Npad))
        in_specs.append(pl.BlockSpec((tm, tn), lambda i, j, k: (i, j)))

    scratch = [pltpu.VMEM((tm, tn), jnp.float32)]
    if fuse_ln:
        scratch.append(pltpu.VMEM((tm, K), jnp.bfloat16))

    # With the LN-once scratch the j axis must stay on one core ("arbitrary" so
    # megacore never splits it); the i (row) axis still shards across cores.
    dims = (("parallel", "arbitrary", "arbitrary") if fuse_ln
            else ("parallel", "parallel", "arbitrary"))

    out = pl.pallas_call(
        functools.partial(_fused_linear_kernel, nk=nk, activation=activation,
                          fuse_ln=fuse_ln, fuse_res=fuse_res, eps=eps),
        out_shape=jax.ShapeDtypeStruct((Mp, Npad), out_dtype),
        grid=(Mp // tm, Npad // tn, nk),
        in_specs=in_specs,
        out_specs=pl.BlockSpec((tm, tn), lambda i, j, k: (i, j)),
        scratch_shapes=scratch,
        compiler_params=pltpu.CompilerParams(
            dimension_semantics=dims, vmem_limit_bytes=cfg["vmem"]),
    )(*inputs)
    if Mp != M or Npad != N:
        out = out[:M, :N]
    return out


# ----------------------------------------------------------------------------
# embeddings pre-LayerNorm: fuses the positional-embedding add into LN
# ----------------------------------------------------------------------------
def _embed_ln_kernel(emb_ref, pos_ref, g_ref, b_ref, o_ref, *, eps):
    x = emb_ref[0].astype(jnp.float32) + pos_ref[...].astype(jnp.float32)
    mu = jnp.mean(x, axis=-1, keepdims=True)
    var = jnp.mean(jnp.square(x - mu), axis=-1, keepdims=True)
    y = (x - mu) * jax.lax.rsqrt(var + eps)
    y = y * g_ref[...].astype(jnp.float32) + b_ref[...].astype(jnp.float32)
    o_ref[0] = y.astype(o_ref.dtype)


def embed_layernorm(emb, pos, gamma, beta, cfg, eps=1e-5):
    """emb: (B, Tp, D) padded class+patch embeddings; pos: (Tp, D)."""
    B, Tp, D = emb.shape
    return pl.pallas_call(
        functools.partial(_embed_ln_kernel, eps=eps),
        out_shape=jax.ShapeDtypeStruct((B, Tp, D), jnp.bfloat16),
        grid=(B,),
        in_specs=[pl.BlockSpec((1, Tp, D), lambda b: (b, 0, 0)),
                  pl.BlockSpec((Tp, D), lambda b: (0, 0)),
                  pl.BlockSpec((1, D), lambda b: (0, 0)),
                  pl.BlockSpec((1, D), lambda b: (0, 0))],
        out_specs=pl.BlockSpec((1, Tp, D), lambda b: (b, 0, 0)),
        compiler_params=pltpu.CompilerParams(
            dimension_semantics=("parallel",), vmem_limit_bytes=cfg["vmem"]),
    )(emb, pos, gamma.reshape(1, D), beta.reshape(1, D))


# ----------------------------------------------------------------------------
# attention: heads indexed inside the kernel, no HBM head transposes,
# lane-dense (B, Tp, D) output; padded key positions masked to -inf.
# ----------------------------------------------------------------------------
def _attn_kernel(qkv_ref, o_ref, *, heads, Dh, D, T, scale):
    qkv = qkv_ref[0]                                   # (Tp, 3D) bf16
    Tp = qkv.shape[0]
    mask = None
    if Tp != T:
        mask = jax.lax.broadcasted_iota(jnp.int32, (Tp, Tp), 1) < T
    for h in range(heads):                             # unrolled per head
        q = qkv[:, h * Dh:(h + 1) * Dh]
        k = qkv[:, D + h * Dh:D + (h + 1) * Dh]
        v = qkv[:, 2 * D + h * Dh:2 * D + (h + 1) * Dh]
        s = jax.lax.dot_general(q, k, (((1,), (1,)), ((), ())),
                                preferred_element_type=jnp.float32) * scale
        if mask is not None:
            s = jnp.where(mask, s, -1e30)
        s = s - jnp.max(s, axis=-1, keepdims=True)
        p = jnp.exp(s)
        # approx reciprocal (EUP); use approx=False for bit-level parity tests
        p = p * pl.reciprocal(jnp.sum(p, axis=-1, keepdims=True), approx=True)
        o = jnp.dot(p.astype(jnp.bfloat16), v, preferred_element_type=jnp.float32)
        o_ref[0, :, h * Dh:(h + 1) * Dh] = o.astype(o_ref.dtype)


def attention(qkv2d, *, B, Tp, T, heads, Dh, scale, cfg):
    """qkv2d: (B*Tp, 3D) fused projection; returns (B*Tp, D) bf16."""
    D = heads * Dh
    qkv = qkv2d.reshape(B, Tp, 3 * D)                  # free reshape
    out = pl.pallas_call(
        functools.partial(_attn_kernel, heads=heads, Dh=Dh, D=D, T=T, scale=scale),
        out_shape=jax.ShapeDtypeStruct((B, Tp, D), jnp.bfloat16),
        grid=(B,),
        in_specs=[pl.BlockSpec((1, Tp, 3 * D), lambda b: (b, 0, 0))],
        out_specs=pl.BlockSpec((1, Tp, D), lambda b: (b, 0, 0)),
        compiler_params=pltpu.CompilerParams(
            dimension_semantics=("parallel",), vmem_limit_bytes=cfg["vmem"]),
    )(qkv)
    return out.reshape(B * Tp, D)                      # free reshape


# ----------------------------------------------------------------------------
# SAE: (x - b_dec) -> encode -> ReLU -> decode (+ b_dec), d_sae reduction split
# over a leading "parallel" axis (both v7x TensorCores), partials summed in XLA.
# ----------------------------------------------------------------------------
def _sae_kernel(x_ref, bdec_ref, wenc_ref, benc_ref, wdec_ref, o_ref, acc_ref, *, ns):
    s = pl.program_id(1)

    @pl.when(s == 0)
    def _():
        acc_ref[...] = jnp.zeros_like(acc_ref)

    xc = x_ref[...].astype(jnp.float32) - bdec_ref[...].astype(jnp.float32)
    pre = jnp.dot(xc.astype(jnp.bfloat16), wenc_ref[...].astype(jnp.bfloat16),
                  preferred_element_type=jnp.float32) + benc_ref[...].astype(jnp.float32)
    acts = jnp.maximum(pre, 0.0)
    acc_ref[...] += jnp.dot(acts.astype(jnp.bfloat16),
                            wdec_ref[...].astype(jnp.bfloat16),
                            preferred_element_type=jnp.float32)

    @pl.when(s == ns - 1)
    def _():
        o_ref[0] = acc_ref[...].astype(o_ref.dtype)


def sae_forward(cls_tok, params, cfg, ts_target=1024):
    # TODO(synk): the concrete SAE forward is injected in the original module;
    # a standard encoder/ReLU/decoder SAE (reconstruction) is implemented here.
    Bc, D = cls_tok.shape
    wenc, benc, wdec = params["sae_w_enc"], params["sae_b_enc"], params["sae_w_dec"]
    S = wenc.shape[1]

    NC = 2 if (S % 256 == 0 and S >= 512) else 1       # parallel split of d_sae
    chunk = S // NC
    ts = None
    if chunk % 128 == 0:
        cand = max(128, (min(ts_target, chunk) // 128) * 128)
        while cand >= 128 and chunk % cand != 0:
            cand -= 128
        if cand >= 128:
            ts, chunk_p = cand, chunk
    if ts is None:
        ts, chunk_p = _tile(chunk, ts_target, 128)
    if chunk_p != chunk:                               # only reachable when NC == 1
        pad = chunk_p - chunk
        wenc = jnp.pad(wenc, ((0, 0), (0, pad)))
        benc = jnp.pad(benc, (0, pad))
        wdec = jnp.pad(wdec, ((0, pad), (0, 0)))
    ns = chunk_p // ts

    partials = pl.pallas_call(
        functools.partial(_sae_kernel, ns=ns),
        out_shape=jax.ShapeDtypeStruct((NC, Bc, D), jnp.float32),
        grid=(NC, ns),
        in_specs=[pl.BlockSpec((Bc, D), lambda c, s: (0, 0)),
                  pl.BlockSpec((1, D), lambda c, s: (0, 0)),
                  pl.BlockSpec((D, ts), lambda c, s: (0, c * ns + s)),
                  pl.BlockSpec((1, ts), lambda c, s: (0, c * ns + s)),
                  pl.BlockSpec((ts, D), lambda c, s: (c * ns + s, 0))],
        out_specs=pl.BlockSpec((1, Bc, D), lambda c, s: (c, 0, 0)),
        scratch_shapes=[pltpu.VMEM((Bc, D), jnp.float32)],
        compiler_params=pltpu.CompilerParams(
            dimension_semantics=("parallel", "arbitrary"),
            vmem_limit_bytes=cfg["vmem"]),
    )(cls_tok, params["sae_b_dec"].reshape(1, D), wenc, benc.reshape(1, -1), wdec)
    return partials.sum(axis=0) + params["sae_b_dec"][None, :]


# ----------------------------------------------------------------------------
# Model: CLIP vision embeddings + pre-LN + encoder layers[0..block_layer] + SAE
# ----------------------------------------------------------------------------
def init_params(key, *, C, P, D, heads, inter, n_layers, d_sae, num_pos):
    ks = iter(jax.random.split(key, 5 + 4 * n_layers))
    nrm = lambda k, s, sc: jax.random.normal(k, s, jnp.float32) * sc

    patch_w = nrm(next(ks), (D, C, P, P), 0.02)        # PyTorch conv weight, bias=False
    p = {
        "patch_w_mat": patch_w.reshape(D, C * P * P).T.astype(jnp.bfloat16),
        "patch_b": jnp.zeros((D,), jnp.float32),
        "class_emb": nrm(next(ks), (D,), 0.02),
        "pos_emb": nrm(next(ks), (num_pos, D), 0.02),
        "pre_ln_g": jnp.ones((D,), jnp.float32),
        "pre_ln_b": jnp.zeros((D,), jnp.float32),
        "layers": [],
        "sae_w_enc": nrm(next(ks), (D, d_sae), 0.05).astype(jnp.bfloat16),
        "sae_b_enc": jnp.zeros((d_sae,), jnp.float32),
        "sae_w_dec": nrm(next(ks), (d_sae, D), 0.05).astype(jnp.bfloat16),
        "sae_b_dec": jnp.zeros((D,), jnp.float32),
    }
    for _ in range(n_layers):
        lyr = {
            "ln1_g": jnp.ones((D,), jnp.float32), "ln1_b": jnp.zeros((D,), jnp.float32),
            "w_qkv": nrm(next(ks), (D, 3 * D), 0.02).astype(jnp.bfloat16),
            "b_qkv": jnp.zeros((3 * D,), jnp.float32),
            "wo": nrm(next(ks), (D, D), 0.02).astype(jnp.bfloat16),
            "bo": jnp.zeros((D,), jnp.float32),
            "ln2_g": jnp.ones((D,), jnp.float32), "ln2_b": jnp.zeros((D,), jnp.float32),
            "w1": nrm(next(ks), (D, inter), 0.02).astype(jnp.bfloat16),
            "b1": jnp.zeros((inter,), jnp.float32),
            "w2": nrm(next(ks), (inter, D), 0.02).astype(jnp.bfloat16),
            "b2": jnp.zeros((D,), jnp.float32),
        }
        p["layers"].append(lyr)
    return p


def encoder_layer(h2d, lyr, *, B, Tp, T, D, heads, cfg):
    Dh = D // heads
    scale = Dh ** -0.5
    residual = h2d

    # self-attention block: LN1 fused into a single QKV projection
    qkv = fused_linear(h2d, lyr["w_qkv"], lyr["b_qkv"],
                       ln=(lyr["ln1_g"], lyr["ln1_b"]), tm_target=Tp, cfg=cfg)
    attn = attention(qkv, B=B, Tp=Tp, T=T, heads=heads, Dh=Dh, scale=scale, cfg=cfg)
    h2d = fused_linear(attn, lyr["wo"], lyr["bo"], residual=residual,
                       tm_target=Tp, cfg=cfg)

    # MLP block: LN2 + W1 + quick_gelu fused; W2 + residual fused
    m = fused_linear(h2d, lyr["w1"], lyr["b1"], activation="quick_gelu",
                     ln=(lyr["ln2_g"], lyr["ln2_b"]), tm_target=Tp, cfg=cfg)
    h2d = fused_linear(m, lyr["w2"], lyr["b2"], residual=h2d, tm_target=Tp, cfg=cfg)
    return h2d


def partial_model_forward(x, params, *, P, heads, block_layer, n_layers):
    B, C, H, W = x.shape
    D = params["class_emb"].shape[0]
    Hp, Wp = H // P, W // P
    Npatch = Hp * Wp
    T = Npatch + 1
    Tp = _round_up(T, 8)                 # pad the token axis ONCE; keep it padded
    cfg = _device_cfg()

    # vision_model.embeddings: patch conv (stride==kernel) as unfold + matmul
    patches = (x.reshape(B, C, Hp, P, Wp, P)
                .transpose(0, 2, 4, 1, 3, 5)           # (B, Hp, Wp, C, P, P)
                .reshape(B * Npatch, C * P * P)).astype(jnp.bfloat16)
    patch_emb = fused_linear(patches, params["patch_w_mat"], params["patch_b"], cfg=cfg)
    patch_emb = patch_emb.reshape(B, Npatch, D)
    cls = jnp.broadcast_to(params["class_emb"].astype(jnp.bfloat16).reshape(1, 1, D),
                           (B, 1, D))
    emb = jnp.concatenate([cls, patch_emb], axis=1)    # (B, T, D)
    pos = params["pos_emb"]
    if Tp != T:
        emb = jnp.pad(emb, ((0, 0), (0, Tp - T), (0, 0)))
        pos = jnp.pad(pos, ((0, Tp - T), (0, 0)))

    # pre_layrnorm with the positional-embedding add fused in
    h = embed_layernorm(emb, pos, params["pre_ln_g"], params["pre_ln_b"], cfg)
    h = h.reshape(B * Tp, D)                           # free reshape, stays padded

    # encoder layers 0 .. block_layer % num_layers
    last = block_layer % n_layers
    for idx in range(n_layers):
        if idx <= last:
            h = encoder_layer(h, params["layers"][idx],
                              B=B, Tp=Tp, T=T, D=D, heads=heads, cfg=cfg)

    # SAE on the CLS token
    cls_tok = h.reshape(B, Tp, D)[:, 0, :]             # (B, D)
    return sae_forward(cls_tok, params, cfg)           # (B, D) f32


# ----------------------------------------------------------------------------
if __name__ == "__main__":
    # small synthetic config
    B, C, H, W = 2, 3, 16, 16
    P = 8                 # patch size -> 2x2 = 4 patches, T = 5 tokens (Tp = 8)
    D = 32                # hidden size
    heads = 4             # head_dim = 8
    inter = 64            # MLP intermediate size
    n_layers = 2
    block_layer = 1       # run layers 0 and 1
    d_sae = 64
    num_pos = (H // P) * (W // P) + 1

    key = jax.random.PRNGKey(0)
    k_img, k_par = jax.random.split(key)
    x = jax.random.normal(k_img, (B, C, H, W), jnp.float32)
    params = init_params(k_par, C=C, P=P, D=D, heads=heads, inter=inter,
                         n_layers=n_layers, d_sae=d_sae, num_pos=num_pos)

    fwd = jax.jit(functools.partial(partial_model_forward, P=P, heads=heads,
                                    block_layer=block_layer, n_layers=n_layers))
    out = jax.block_until_ready(fwd(x, params))
    assert out.shape == (B, D)
    print("KERNEL_OK")
</pallas_src>

<mosaic_0001>
module attributes {stable_mosaic.version = 11 : i64} {
  func.func @_fused_linear_kernel(%arg0: i32, %arg1: i32, %arg2: i32, %arg3: memref<8x192xbf16, #tpu.memory_space<vmem>>, %arg4: memref<192x32xbf16, #tpu.memory_space<vmem>>, %arg5: memref<1x32xf32, #tpu.memory_space<vmem>>, %arg6: memref<8x32xbf16, #tpu.memory_space<vmem>>, %arg7: memref<8x32xf32, #tpu.memory_space<vmem>>) attributes {dimension_semantics = [#tpu.dimension_semantics<parallel>, #tpu.dimension_semantics<parallel>, #tpu.dimension_semantics<arbitrary>], iteration_bounds = array<i64: 1, 1, 1>, scalar_prefetch = 0 : i64, scratch_operands = 1 : i64, tpu.core_type = #tpu.core_type<tc>, window_params = [{transform_indices = @transform_0, window_bounds = array<i64: 8, 192>}, {transform_indices = @transform_1, window_bounds = array<i64: 192, 32>}, {transform_indices = @transform_2, window_bounds = array<i64: 1, 32>}, {transform_indices = @transform_3, window_bounds = array<i64: 8, 32>}]} {
    %c0_i32 = arith.constant 0 : i32
    %0 = arith.cmpi eq, %arg2, %c0_i32 : i32
    %1 = arith.extui %0 : i1 to i32
    %c0_i32_0 = arith.constant 0 : i32
    %2 = arith.cmpi ne, %1, %c0_i32_0 : i32
    scf.if %2 {
      %cst_10 = arith.constant 0.000000e+00 : f32
      %12 = vector.broadcast %cst_10 : f32 to vector<8x32xf32>
      %c0_11 = arith.constant 0 : index
      %c0_12 = arith.constant 0 : index
      %13 = vector.load %arg7[%c0_11, %c0_12] : memref<8x32xf32, #tpu.memory_space<vmem>>, vector<8x32xf32>
      tpu.vector_store %arg7[%c0_11, %c0_12], %12 {strides = array<i32>} : memref<8x32xf32, #tpu.memory_space<vmem>>, vector<8x32xf32>,
    } else {
    }
    %c0 = arith.constant 0 : index
    %c0_1 = arith.constant 0 : index
    %3 = vector.load %arg3[%c0, %c0_1] : memref<8x192xbf16, #tpu.memory_space<vmem>>, vector<8x192xbf16>
    %c0_2 = arith.constant 0 : index
    %c0_3 = arith.constant 0 : index
    %4 = vector.load %arg7[%c0_2, %c0_3] : memref<8x32xf32, #tpu.memory_space<vmem>>, vector<8x32xf32>
    %c0_4 = arith.constant 0 : index
    %c0_5 = arith.constant 0 : index
    %5 = vector.load %arg4[%c0_4, %c0_5] : memref<192x32xbf16, #tpu.memory_space<vmem>>, vector<192x32xbf16>
    %cst = arith.constant dense<0.000000e+00> : vector<8x32xf32>
    %6 = tpu.matmul %3, %5, %cst {dimension_numbers = #tpu.dot_dimension_numbers<[1], [0], [0], [1], [0, 0, 1, 1], [], []>} : vector<8x192xbf16>, vector<192x32xbf16>, vector<8x32xf32> -> vector<8x32xf32>
    %7 = arith.addf %4, %6 : vector<8x32xf32>
    %c0_6 = arith.constant 0 : index
    %c0_7 = arith.constant 0 : index
    %8 = vector.load %arg7[%c0_6, %c0_7] : memref<8x32xf32, #tpu.memory_space<vmem>>, vector<8x32xf32>
    tpu.vector_store %arg7[%c0_6, %c0_7], %7 {strides = array<i32>} : memref<8x32xf32, #tpu.memory_space<vmem>>, vector<8x32xf32>,
    %c0_i32_8 = arith.constant 0 : i32
    %9 = arith.cmpi eq, %arg2, %c0_i32_8 : i32
    %10 = arith.extui %9 : i1 to i32
    %c0_i32_9 = arith.constant 0 : i32
    %11 = arith.cmpi ne, %10, %c0_i32_9 : i32
    scf.if %11 {
      %c0_10 = arith.constant 0 : index
      %c0_11 = arith.constant 0 : index
      %12 = vector.load %arg7[%c0_10, %c0_11] : memref<8x32xf32, #tpu.memory_space<vmem>>, vector<8x32xf32>
      %c0_12 = arith.constant 0 : index
      %c0_13 = arith.constant 0 : index
      %13 = vector.load %arg5[%c0_12, %c0_13] : memref<1x32xf32, #tpu.memory_space<vmem>>, vector<1x32xf32>
      %14 = vector.broadcast %13 : vector<1x32xf32> to vector<8x32xf32>
      %15 = arith.addf %12, %14 : vector<8x32xf32>
      %16 = arith.truncf %15 : vector<8x32xf32> to vector<8x32xbf16>
      %c0_14 = arith.constant 0 : index
      %c0_15 = arith.constant 0 : index
      %17 = vector.load %arg6[%c0_14, %c0_15] : memref<8x32xbf16, #tpu.memory_space<vmem>>, vector<8x32xbf16>
      tpu.vector_store %arg6[%c0_14, %c0_15], %16 {strides = array<i32>} : memref<8x32xbf16, #tpu.memory_space<vmem>>, vector<8x32xbf16>,
    } else {
    }
    return
  }
  func.func @transform_0(%arg0: i32, %arg1: i32, %arg2: i32) -> (i32, i32) {
    %c0_i32 = arith.constant 0 : i32
    return %arg0, %arg2 : i32, i32
  }
  func.func @transform_1(%arg0: i32, %arg1: i32, %arg2: i32) -> (i32, i32) {
    %c0_i32 = arith.constant 0 : i32
    return %arg2, %arg1 : i32, i32
  }
  func.func @transform_2(%arg0: i32, %arg1: i32, %arg2: i32) -> (i32, i32) {
    %c0_i32 = arith.constant 0 : i32
    %c0_i32_0 = arith.constant 0 : i32
    return %c0_i32, %arg1 : i32, i32
  }
  func.func @transform_3(%arg0: i32, %arg1: i32, %arg2: i32) -> (i32, i32) {
    %c0_i32 = arith.constant 0 : i32
    return %arg0, %arg1 : i32, i32
  }
}

module attributes {stable_mosaic.version = 11 : i64} {
  func.func @_embed_ln_kernel(%arg0: i32, %arg1: memref<1x8x32xbf16, #tpu.memory_space<vmem>>, %arg2: memref<8x32xf32, #tpu.memory_space<vmem>>, %arg3: memref<1x32xf32, #tpu.memory_space<vmem>>, %arg4: memref<1x32xf32, #tpu.memory_space<vmem>>, %arg5: memref<1x8x32xbf16, #tpu.memory_space<vmem>>) attributes {dimension_semantics = [#tpu.dimension_semantics<parallel>], iteration_bounds = array<i64: 2>, scalar_prefetch = 0 : i64, scratch_operands = 0 : i64, tpu.core_type = #tpu.core_type<tc>, window_params = [{transform_indices = @transform_0, window_bounds = array<i64: 1, 8, 32>}, {pipeline_mode = #tpu.pipeline_mode<synchronous>, transform_indices = @transform_1, window_bounds = array<i64: 8, 32>}, {pipeline_mode = #tpu.pipeline_mode<synchronous>, transform_indices = @transform_2, window_bounds = array<i64: 1, 32>}, {pipeline_mode = #tpu.pipeline_mode<synchronous>, transform_indices = @transform_3, window_bounds = array<i64: 1, 32>}, {transform_indices = @transform_4, window_bounds = array<i64: 1, 8, 32>}]} {
    %c0 = arith.constant 0 : index
    %c0_0 = arith.constant 0 : index
    %c0_1 = arith.constant 0 : index
    %0 = vector.load %arg1[%c0, %c0_0, %c0_1] : memref<1x8x32xbf16, #tpu.memory_space<vmem>>, vector<1x8x32xbf16>
    %1 = vector.shape_cast %0 : vector<1x8x32xbf16> to vector<8x32xbf16>
    %2 = arith.extf %1 : vector<8x32xbf16> to vector<8x32xf32>
    %c0_2 = arith.constant 0 : index
    %c0_3 = arith.constant 0 : index
    %3 = vector.load %arg2[%c0_2, %c0_3] : memref<8x32xf32, #tpu.memory_space<vmem>>, vector<8x32xf32>
    %4 = arith.addf %2, %3 : vector<8x32xf32>
    %cst = arith.constant dense<0.000000e+00> : vector<8xf32>
    %5 = vector.multi_reduction <add>, %4, %cst [1] : vector<8x32xf32> to vector<8xf32>
    %6 = vector.shape_cast %5 : vector<8xf32> to vector<8x1xf32>
    %cst_4 = arith.constant 3.200000e+01 : f32
    %7 = vector.broadcast %cst_4 : f32 to vector<8x1xf32>
    %8 = arith.divf %6, %7 : vector<8x1xf32>
    %9 = vector.broadcast %8 : vector<8x1xf32> to vector<8x32xf32>
    %10 = arith.subf %4, %9 : vector<8x32xf32>
    %11 = arith.mulf %10, %10 : vector<8x32xf32>
    %cst_5 = arith.constant dense<0.000000e+00> : vector<8xf32>
    %12 = vector.multi_reduction <add>, %11, %cst_5 [1] : vector<8x32xf32> to vector<8xf32>
    %13 = vector.shape_cast %12 : vector<8xf32> to vector<8x1xf32>
    %cst_6 = arith.constant 3.200000e+01 : f32
    %14 = vector.broadcast %cst_6 : f32 to vector<8x1xf32>
    %15 = arith.divf %13, %14 : vector<8x1xf32>
    %16 = vector.broadcast %8 : vector<8x1xf32> to vector<8x32xf32>
    %17 = arith.subf %4, %16 : vector<8x32xf32>
    %cst_7 = arith.constant 9.99999974E-6 : f32
    %18 = vector.broadcast %cst_7 : f32 to vector<8x1xf32>
    %19 = arith.addf %15, %18 : vector<8x1xf32>
    %20 = math.rsqrt %19 : vector<8x1xf32>
    %21 = vector.broadcast %20 : vector<8x1xf32> to vector<8x32xf32>
    %22 = arith.mulf %17, %21 : vector<8x32xf32>
    %c0_8 = arith.constant 0 : index
    %c0_9 = arith.constant 0 : index
    %23 = vector.load %arg3[%c0_8, %c0_9] : memref<1x32xf32, #tpu.memory_space<vmem>>, vector<1x32xf32>
    %24 = vector.broadcast %23 : vector<1x32xf32> to vector<8x32xf32>
    %25 = arith.mulf %22, %24 : vector<8x32xf32>
    %c0_10 = arith.constant 0 : index
    %c0_11 = arith.constant 0 : index
    %26 = vector.load %arg4[%c0_10, %c0_11] : memref<1x32xf32, #tpu.memory_space<vmem>>, vector<1x32xf32>
    %27 = vector.broadcast %26 : vector<1x32xf32> to vector<8x32xf32>
    %28 = arith.addf %25, %27 : vector<8x32xf32>
    %29 = arith.truncf %28 : vector<8x32xf32> to vector<8x32xbf16>
    %c0_12 = arith.constant 0 : index
    %c0_13 = arith.constant 0 : index
    %c0_14 = arith.constant 0 : index
    %30 = vector.load %arg5[%c0_12, %c0_13, %c0_14] : memref<1x8x32xbf16, #tpu.memory_space<vmem>>, vector<1x8x32xbf16>
    %31 = vector.shape_cast %30 : vector<1x8x32xbf16> to vector<8x32xbf16>
    %32 = vector.shape_cast %29 : vector<8x32xbf16> to vector<1x8x32xbf16>
    tpu.vector_store %arg5[%c0_12, %c0_13, %c0_14], %32 {strides = array<i32>} : memref<1x8x32xbf16, #tpu.memory_space<vmem>>, vector<1x8x32xbf16>,
    return
  }
  func.func @transform_0(%arg0: i32) -> (i32, i32, i32) {
    %c0_i32 = arith.constant 0 : i32
    %c0_i32_0 = arith.constant 0 : i32
    %c0_i32_1 = arith.constant 0 : i32
    return %arg0, %c0_i32, %c0_i32_0 : i32, i32, i32
  }
  func.func @transform_1(%arg0: i32) -> (i32, i32) {
    %c0_i32 = arith.constant 0 : i32
    %c0_i32_0 = arith.constant 0 : i32
    %c0_i32_1 = arith.constant 0 : i32
    return %c0_i32, %c0_i32_0 : i32, i32
  }
  func.func @transform_2(%arg0: i32) -> (i32, i32) {
    %c0_i32 = arith.constant 0 : i32
    %c0_i32_0 = arith.constant 0 : i32
    %c0_i32_1 = arith.constant 0 : i32
    return %c0_i32, %c0_i32_0 : i32, i32
  }
  func.func @transform_3(%arg0: i32) -> (i32, i32) {
    %c0_i32 = arith.constant 0 : i32
    %c0_i32_0 = arith.constant 0 : i32
    %c0_i32_1 = arith.constant 0 : i32
    return %c0_i32, %c0_i32_0 : i32, i32
  }
  func.func @transform_4(%arg0: i32) -> (i32, i32, i32) {
    %c0_i32 = arith.constant 0 : i32
    %c0_i32_0 = arith.constant 0 : i32
    %c0_i32_1 = arith.constant 0 : i32
    return %arg0, %c0_i32, %c0_i32_0 : i32, i32, i32
  }
}

module attributes {stable_mosaic.version = 11 : i64} {
  func.func @_fused_linear_kernel(%arg0: i32, %arg1: i32, %arg2: i32, %arg3: memref<8x32xbf16, #tpu.memory_space<vmem>>, %arg4: memref<32x96xbf16, #tpu.memory_space<vmem>>, %arg5: memref<1x96xf32, #tpu.memory_space<vmem>>, %arg6: memref<1x32xf32, #tpu.memory_space<vmem>>, %arg7: memref<1x32xf32, #tpu.memory_space<vmem>>, %arg8: memref<8x96xbf16, #tpu.memory_space<vmem>>, %arg9: memref<8x96xf32, #tpu.memory_space<vmem>>, %arg10: memref<8x32xbf16, #tpu.memory_space<vmem>>) attributes {dimension_semantics = [#tpu.dimension_semantics<parallel>, #tpu.dimension_semantics<arbitrary>, #tpu.dimension_semantics<arbitrary>], iteration_bounds = array<i64: 2, 1, 1>, scalar_prefetch = 0 : i64, scratch_operands = 2 : i64, tpu.core_type = #tpu.core_type<tc>, window_params = [{transform_indices = @transform_0, window_bounds = array<i64: 8, 32>}, {transform_indices = @transform_1, window_bounds = array<i64: 32, 96>}, {transform_indices = @transform_2, window_bounds = array<i64: 1, 96>}, {pipeline_mode = #tpu.pipeline_mode<synchronous>, transform_indices = @transform_3, window_bounds = array<i64: 1, 32>}, {pipeline_mode = #tpu.pipeline_mode<synchronous>, transform_indices = @transform_4, window_bounds = array<i64: 1, 32>}, {transform_indices = @transform_5, window_bounds = array<i64: 8, 96>}]} {
    %c0_i32 = arith.constant 0 : i32
    %0 = arith.cmpi eq, %arg2, %c0_i32 : i32
    %1 = arith.extui %0 : i1 to i32
    %c0_i32_0 = arith.constant 0 : i32
    %2 = arith.cmpi ne, %1, %c0_i32_0 : i32
    scf.if %2 {
      %cst_12 = arith.constant 0.000000e+00 : f32
      %15 = vector.broadcast %cst_12 : f32 to vector<8x96xf32>
      %c0_13 = arith.constant 0 : index
      %c0_14 = arith.constant 0 : index
      %16 = vector.load %arg9[%c0_13, %c0_14] : memref<8x96xf32, #tpu.memory_space<vmem>>, vector<8x96xf32>
      tpu.vector_store %arg9[%c0_13, %c0_14], %15 {strides = array<i32>} : memref<8x96xf32, #tpu.memory_space<vmem>>, vector<8x96xf32>,
    } else {
    }
    %c0_i32_1 = arith.constant 0 : i32
    %3 = arith.cmpi eq, %arg1, %c0_i32_1 : i32
    %4 = arith.extui %3 : i1 to i32
    %c0_i32_2 = arith.constant 0 : i32
    %5 = arith.cmpi ne, %4, %c0_i32_2 : i32
    scf.if %5 {
      %c0_12 = arith.constant 0 : index
      %c0_13 = arith.constant 0 : index
      %15 = vector.load %arg3[%c0_12, %c0_13] : memref<8x32xbf16, #tpu.memory_space<vmem>>, vector<8x32xbf16>
      %16 = arith.extf %15 : vector<8x32xbf16> to vector<8x32xf32>
      %cst_14 = arith.constant dense<0.000000e+00> : vector<8xf32>
      %17 = vector.multi_reduction <add>, %16, %cst_14 [1] : vector<8x32xf32> to vector<8xf32>
      %18 = vector.shape_cast %17 : vector<8xf32> to vector<8x1xf32>
      %cst_15 = arith.constant 3.200000e+01 : f32
      %19 = vector.broadcast %cst_15 : f32 to vector<8x1xf32>
      %20 = arith.divf %18, %19 : vector<8x1xf32>
      %21 = vector.broadcast %20 : vector<8x1xf32> to vector<8x32xf32>
      %22 = arith.subf %16, %21 : vector<8x32xf32>
      %23 = arith.mulf %22, %22 : vector<8x32xf32>
      %cst_16 = arith.constant dense<0.000000e+00> : vector<8xf32>
      %24 = vector.multi_reduction <add>, %23, %cst_16 [1] : vector<8x32xf32> to vector<8xf32>
      %25 = vector.shape_cast %24 : vector<8xf32> to vector<8x1xf32>
      %cst_17 = arith.constant 3.200000e+01 : f32
      %26 = vector.broadcast %cst_17 : f32 to vector<8x1xf32>
      %27 = arith.divf %25, %26 : vector<8x1xf32>
      %28 = vector.broadcast %20 : vector<8x1xf32> to vector<8x32xf32>
      %29 = arith.subf %16, %28 : vector<8x32xf32>
      %cst_18 = arith.constant 9.99999974E-6 : f32
      %30 = vector.broadcast %cst_18 : f32 to vector<8x1xf32>
      %31 = arith.addf %27, %30 : vector<8x1xf32>
      %32 = math.rsqrt %31 : vector<8x1xf32>
      %33 = vector.broadcast %32 : vector<8x1xf32> to vector<8x32xf32>
      %34 = arith.mulf %29, %33 : vector<8x32xf32>
      %c0_19 = arith.constant 0 : index
      %c0_20 = arith.constant 0 : index
      %35 = vector.load %arg6[%c0_19, %c0_20] : memref<1x32xf32, #tpu.memory_space<vmem>>, vector<1x32xf32>
      %36 = vector.broadcast %35 : vector<1x32xf32> to vector<8x32xf32>
      %37 = arith.mulf %34, %36 : vector<8x32xf32>
      %c0_21 = arith.constant 0 : index
      %c0_22 = arith.constant 0 : index
      %38 = vector.load %arg7[%c0_21, %c0_22] : memref<1x32xf32, #tpu.memory_space<vmem>>, vector<1x32xf32>
      %39 = vector.broadcast %38 : vector<1x32xf32> to vector<8x32xf32>
      %40 = arith.addf %37, %39 : vector<8x32xf32>
      %41 = arith.truncf %40 : vector<8x32xf32> to vector<8x32xbf16>
      %c0_23 = arith.constant 0 : index
      %c0_24 = arith.constant 0 : index
      %42 = vector.load %arg10[%c0_23, %c0_24] : memref<8x32xbf16, #tpu.memory_space<vmem>>, vector<8x32xbf16>
      tpu.vector_store %arg10[%c0_23, %c0_24], %41 {strides = array<i32>} : memref<8x32xbf16, #tpu.memory_space<vmem>>, vector<8x32xbf16>,
    } else {
    }
    %c0 = arith.constant 0 : index
    %c0_3 = arith.constant 0 : index
    %6 = vector.load %arg10[%c0, %c0_3] : memref<8x32xbf16, #tpu.memory_space<vmem>>, vector<8x32xbf16>
    %c0_4 = arith.constant 0 : index
    %c0_5 = arith.constant 0 : index
    %7 = vector.load %arg9[%c0_4, %c0_5] : memref<8x96xf32, #tpu.memory_space<vmem>>, vector<8x96xf32>
    %c0_6 = arith.constant 0 : index
    %c0_7 = arith.constant 0 : index
    %8 = vector.load %arg4[%c0_6, %c0_7] : memref<32x96xbf16, #tpu.memory_space<vmem>>, vector<32x96xbf16>
    %cst = arith.constant dense<0.000000e+00> : vector<8x96xf32>
    %9 = tpu.matmul %6, %8, %cst {dimension_numbers = #tpu.dot_dimension_numbers<[1], [0], [0], [1], [0, 0, 1, 1], [], []>} : vector<8x32xbf16>, vector<32x96xbf16>, vector<8x96xf32> -> vector<8x96xf32>
    %10 = arith.addf %7, %9 : vector<8x96xf32>
    %c0_8 = arith.constant 0 : index
    %c0_9 = arith.constant 0 : index
    %11 = vector.load %arg9[%c0_8, %c0_9] : memref<8x96xf32, #tpu.memory_space<vmem>>, vector<8x96xf32>
    tpu.vector_store %arg9[%c0_8, %c0_9], %10 {strides = array<i32>} : memref<8x96xf32, #tpu.memory_space<vmem>>, vector<8x96xf32>,
    %c0_i32_10 = arith.constant 0 : i32
    %12 = arith.cmpi eq, %arg2, %c0_i32_10 : i32
    %13 = arith.extui %12 : i1 to i32
    %c0_i32_11 = arith.constant 0 : i32
    %14 = arith.cmpi ne, %13, %c0_i32_11 : i32
    scf.if %14 {
      %c0_12 = arith.constant 0 : index
      %c0_13 = arith.constant 0 : index
      %15 = vector.load %arg9[%c0_12, %c0_13] : memref<8x96xf32, #tpu.memory_space<vmem>>, vector<8x96xf32>
      %c0_14 = arith.constant 0 : index
      %c0_15 = arith.constant 0 : index
      %16 = vector.load %arg5[%c0_14, %c0_15] : memref<1x96xf32, #tpu.memory_space<vmem>>, vector<1x96xf32>
      %17 = vector.broadcast %16 : vector<1x96xf32> to vector<8x96xf32>
      %18 = arith.addf %15, %17 : vector<8x96xf32>
      %19 = arith.truncf %18 : vector<8x96xf32> to vector<8x96xbf16>
      %c0_16 = arith.constant 0 : index
      %c0_17 = arith.constant 0 : index
      %20 = vector.load %arg8[%c0_16, %c0_17] : memref<8x96xbf16, #tpu.memory_space<vmem>>, vector<8x96xbf16>
      tpu.vector_store %arg8[%c0_16, %c0_17], %19 {strides = array<i32>} : memref<8x96xbf16, #tpu.memory_space<vmem>>, vector<8x96xbf16>,
    } else {
    }
    return
  }
  func.func @transform_0(%arg0: i32, %arg1: i32, %arg2: i32) -> (i32, i32) {
    %c0_i32 = arith.constant 0 : i32
    %c0_i32_0 = arith.constant 0 : i32
    return %arg0, %c0_i32 : i32, i32
  }
  func.func @transform_1(%arg0: i32, %arg1: i32, %arg2: i32) -> (i32, i32) {
    %c0_i32 = arith.constant 0 : i32
    return %arg2, %arg1 : i32, i32
  }
  func.func @transform_2(%arg0: i32, %arg1: i32, %arg2: i32) -> (i32, i32) {
    %c0_i32 = arith.constant 0 : i32
    %c0_i32_0 = arith.constant 0 : i32
    return %c0_i32, %arg1 : i32, i32
  }
  func.func @transform_3(%arg0: i32, %arg1: i32, %arg2: i32) -> (i32, i32) {
    %c0_i32 = arith.constant 0 : i32
    %c0_i32_0 = arith.constant 0 : i32
    %c0_i32_1 = arith.constant 0 : i32
    return %c0_i32, %c0_i32_0 : i32, i32
  }
  func.func @transform_4(%arg0: i32, %arg1: i32, %arg2: i32) -> (i32, i32) {
    %c0_i32 = arith.constant 0 : i32
    %c0_i32_0 = arith.constant 0 : i32
    %c0_i32_1 = arith.constant 0 : i32
    return %c0_i32, %c0_i32_0 : i32, i32
  }
  func.func @transform_5(%arg0: i32, %arg1: i32, %arg2: i32) -> (i32, i32) {
    %c0_i32 = arith.constant 0 : i32
    return %arg0, %arg1 : i32, i32
  }
}

module attributes {stable_mosaic.version = 11 : i64} {
  func.func @_attn_kernel(%arg0: i32, %arg1: memref<1x8x96xbf16, #tpu.memory_space<vmem>>, %arg2: memref<1x8x32xbf16, #tpu.memory_space<vmem>>) attributes {dimension_semantics = [#tpu.dimension_semantics<parallel>], iteration_bounds = array<i64: 2>, scalar_prefetch = 0 : i64, scratch_operands = 0 : i64, tpu.core_type = #tpu.core_type<tc>, window_params = [{transform_indices = @transform_0, window_bounds = array<i64: 1, 8, 96>}, {transform_indices = @transform_1, window_bounds = array<i64: 1, 8, 32>}]} {
    %c0 = arith.constant 0 : index
    %c0_0 = arith.constant 0 : index
    %c0_1 = arith.constant 0 : index
    %0 = vector.load %arg1[%c0, %c0_0, %c0_1] : memref<1x8x96xbf16, #tpu.memory_space<vmem>>, vector<1x8x96xbf16>
    %1 = vector.shape_cast %0 : vector<1x8x96xbf16> to vector<8x96xbf16>
    %2 = tpu.iota {dimensions = array<i32: 1>} : vector<8x8xi32>
    %c5_i32 = arith.constant 5 : i32
    %3 = vector.broadcast %c5_i32 : i32 to vector<8x8xi32>
    %4 = arith.cmpi slt, %2, %3 : vector<8x8xi32>
    %5 = vector.extract_strided_slice %1 {offsets = [0, 0], sizes = [8, 8], strides = [1, 1]} : vector<8x96xbf16> to vector<8x8xbf16>
    %6 = vector.extract_strided_slice %1 {offsets = [0, 32], sizes = [8, 8], strides = [1, 1]} : vector<8x96xbf16> to vector<8x8xbf16>
    %7 = vector.extract_strided_slice %1 {offsets = [0, 64], sizes = [8, 8], strides = [1, 1]} : vector<8x96xbf16> to vector<8x8xbf16>
    %cst = arith.constant dense<0.000000e+00> : vector<8x8xf32>
    %8 = tpu.matmul %5, %6, %cst {dimension_numbers = #tpu.dot_dimension_numbers<[1], [1], [0], [0], [0, 0, 1, 0], [], []>} : vector<8x8xbf16>, vector<8x8xbf16>, vector<8x8xf32> -> vector<8x8xf32>
    %cst_2 = arith.constant 0.353553385 : f32
    %9 = vector.broadcast %cst_2 : f32 to vector<8x8xf32>
    %10 = arith.mulf %8, %9 : vector<8x8xf32>
    %cst_3 = arith.constant -1.000000e+30 : f32
    %11 = vector.broadcast %cst_3 : f32 to vector<8x8xf32>
    %12 = arith.select %4, %10, %11 : vector<8x8xi1>, vector<8x8xf32>
    %cst_4 = arith.constant dense<0xFF800000> : vector<8xf32>
    %13 = vector.multi_reduction <maximumf>, %12, %cst_4 [1] : vector<8x8xf32> to vector<8xf32>
    %14 = vector.shape_cast %13 : vector<8xf32> to vector<8x1xf32>
    %15 = vector.broadcast %14 : vector<8x1xf32> to vector<8x8xf32>
    %16 = arith.subf %12, %15 : vector<8x8xf32>
    %17 = math.exp %16 : vector<8x8xf32>
    %cst_5 = arith.constant dense<0.000000e+00> : vector<8xf32>
    %18 = vector.multi_reduction <add>, %17, %cst_5 [1] : vector<8x8xf32> to vector<8xf32>
    %19 = vector.shape_cast %18 : vector<8xf32> to vector<8x1xf32>
    %20 = tpu.reciprocal %19 {approx = true} : vector<8x1xf32> -> vector<8x1xf32>
    %21 = vector.broadcast %20 : vector<8x1xf32> to vector<8x8xf32>
    %22 = arith.mulf %17, %21 : vector<8x8xf32>
    %23 = arith.truncf %22 : vector<8x8xf32> to vector<8x8xbf16>
    %cst_6 = arith.constant dense<0.000000e+00> : vector<8x8xf32>
    %24 = tpu.matmul %23, %7, %cst_6 {dimension_numbers = #tpu.dot_dimension_numbers<[1], [0], [0], [1], [0, 0, 1, 1], [], []>} : vector<8x8xbf16>, vector<8x8xbf16>, vector<8x8xf32> -> vector<8x8xf32>
    %25 = arith.truncf %24 : vector<8x8xf32> to vector<8x8xbf16>
    %c0_7 = arith.constant 0 : index
    %c0_8 = arith.constant 0 : index
    %c0_9 = arith.constant 0 : index
    %26 = vector.load %arg2[%c0_7, %c0_8, %c0_9] : memref<1x8x32xbf16, #tpu.memory_space<vmem>>, vector<1x8x8xbf16>
    %27 = vector.shape_cast %26 : vector<1x8x8xbf16> to vector<8x8xbf16>
    %28 = vector.shape_cast %25 : vector<8x8xbf16> to vector<1x8x8xbf16>
    tpu.vector_store %arg2[%c0_7, %c0_8, %c0_9], %28 {strides = array<i32>} : memref<1x8x32xbf16, #tpu.memory_space<vmem>>, vector<1x8x8xbf16>,
    %29 = vector.extract_strided_slice %1 {offsets = [0, 8], sizes = [8, 8], strides = [1, 1]} : vector<8x96xbf16> to vector<8x8xbf16>
    %30 = vector.extract_strided_slice %1 {offsets = [0, 40], sizes = [8, 8], strides = [1, 1]} : vector<8x96xbf16> to vector<8x8xbf16>
    %31 = vector.extract_strided_slice %1 {offsets = [0, 72], sizes = [8, 8], strides = [1, 1]} : vector<8x96xbf16> to vector<8x8xbf16>
    %cst_10 = arith.constant dense<0.000000e+00> : vector<8x8xf32>
    %32 = tpu.matmul %29, %30, %cst_10 {dimension_numbers = #tpu.dot_dimension_numbers<[1], [1], [0], [0], [0, 0, 1, 0], [], []>} : vector<8x8xbf16>, vector<8x8xbf16>, vector<8x8xf32> -> vector<8x8xf32>
    %cst_11 = arith.constant 0.353553385 : f32
    %33 = vector.broadcast %cst_11 : f32 to vector<8x8xf32>
    %34 = arith.mulf %32, %33 : vector<8x8xf32>
    %cst_12 = arith.constant -1.000000e+30 : f32
    %35 = vector.broadcast %cst_12 : f32 to vector<8x8xf32>
    %36 = arith.select %4, %34, %35 : vector<8x8xi1>, vector<8x8xf32>
    %cst_13 = arith.constant dense<0xFF800000> : vector<8xf32>
    %37 = vector.multi_reduction <maximumf>, %36, %cst_13 [1] : vector<8x8xf32> to vector<8xf32>
    %38 = vector.shape_cast %37 : vector<8xf32> to vector<8x1xf32>
    %39 = vector.broadcast %38 : vector<8x1xf32> to vector<8x8xf32>
    %40 = arith.subf %36, %39 : vector<8x8xf32>
    %41 = math.exp %40 : vector<8x8xf32>
    %cst_14 = arith.constant dense<0.000000e+00> : vector<8xf32>
    %42 = vector.multi_reduction <add>, %41, %cst_14 [1] : vector<8x8xf32> to vector<8xf32>
    %43 = vector.shape_cast %42 : vector<8xf32> to vector<8x1xf32>
    %44 = tpu.reciprocal %43 {approx = true} : vector<8x1xf32> -> vector<8x1xf32>
    %45 = vector.broadcast %44 : vector<8x1xf32> to vector<8x8xf32>
    %46 = arith.mulf %41, %45 : vector<8x8xf32>
    %47 = arith.truncf %46 : vector<8x8xf32> to vector<8x8xbf16>
    %cst_15 = arith.constant dense<0.000000e+00> : vector<8x8xf32>
    %48 = tpu.matmul %47, %31, %cst_15 {dimension_numbers = #tpu.dot_dimension_numbers<[1], [0], [0], [1], [0, 0, 1, 1], [], []>} : vector<8x8xbf16>, vector<8x8xbf16>, vector<8x8xf32> -> vector<8x8xf32>
    %49 = arith.truncf %48 : vector<8x8xf32> to vector<8x8xbf16>
    %c0_16 = arith.constant 0 : index
    %c0_17 = arith.constant 0 : index
    %c8 = arith.constant 8 : index
    %50 = vector.load %arg2[%c0_16, %c0_17, %c8] : memref<1x8x32xbf16, #tpu.memory_space<vmem>>, vector<1x8x8xbf16>
    %51 = vector.shape_cast %50 : vector<1x8x8xbf16> to vector<8x8xbf16>
    %52 = vector.shape_cast %49 : vector<8x8xbf16> to vector<1x8x8xbf16>
    tpu.vector_store %arg2[%c0_16, %c0_17, %c8], %52 {strides = array<i32>} : memref<1x8x32xbf16, #tpu.memory_space<vmem>>, vector<1x8x8xbf16>,
    %53 = vector.extract_strided_slice %1 {offsets = [0, 16], sizes = [8, 8], strides = [1, 1]} : vector<8x96xbf16> to vector<8x8xbf16>
    %54 = vector.extract_strided_slice %1 {offsets = [0, 48], sizes = [8, 8], strides = [1, 1]} : vector<8x96xbf16> to vector<8x8xbf16>
    %55 = vector.extract_strided_slice %1 {offsets = [0, 80], sizes = [8, 8], strides = [1, 1]} : vector<8x96xbf16> to vector<8x8xbf16>
    %cst_18 = arith.constant dense<0.000000e+00> : vector<8x8xf32>
    %56 = tpu.matmul %53, %54, %cst_18 {dimension_numbers = #tpu.dot_dimension_numbers<[1], [1], [0], [0], [0, 0, 1, 0], [], []>} : vector<8x8xbf16>, vector<8x8xbf16>, vector<8x8xf32> -> vector<8x8xf32>
    %cst_19 = arith.constant 0.353553385 : f32
    %57 = vector.broadcast %cst_19 : f32 to vector<8x8xf32>
    %58 = arith.mulf %56, %57 : vector<8x8xf32>
    %cst_20 = arith.constant -1.000000e+30 : f32
    %59 = vector.broadcast %cst_20 : f32 to vector<8x8xf32>
    %60 = arith.select %4, %58, %59 : vector<8x8xi1>, vector<8x8xf32>
    %cst_21 = arith.constant dense<0xFF800000> : vector<8xf32>
    %61 = vector.multi_reduction <maximumf>, %60, %cst_21 [1] : vector<8x8xf32> to vector<8xf32>
    %62 = vector.shape_cast %61 : vector<8xf32> to vector<8x1xf32>
    %63 = vector.broadcast %62 : vector<8x1xf32> to vector<8x8xf32>
    %64 = arith.subf %60, %63 : vector<8x8xf32>
    %65 = math.exp %64 : vector<8x8xf32>
    %cst_22 = arith.constant dense<0.000000e+00> : vector<8xf32>
    %66 = vector.multi_reduction <add>, %65, %cst_22 [1] : vector<8x8xf32> to vector<8xf32>
    %67 = vector.shape_cast %66 : vector<8xf32> to vector<8x1xf32>
    %68 = tpu.reciprocal %67 {approx = true} : vector<8x1xf32> -> vector<8x1xf32>
    %69 = vector.broadcast %68 : vector<8x1xf32> to vector<8x8xf32>
    %70 = arith.mulf %65, %69 : vector<8x8xf32>
    %71 = arith.truncf %70 : vector<8x8xf32> to vector<8x8xbf16>
    %cst_23 = arith.constant dense<0.000000e+00> : vector<8x8xf32>
    %72 = tpu.matmul %71, %55, %cst_23 {dimension_numbers = #tpu.dot_dimension_numbers<[1], [0], [0], [1], [0, 0, 1, 1], [], []>} : vector<8x8xbf16>, vector<8x8xbf16>, vector<8x8xf32> -> vector<8x8xf32>
    %73 = arith.truncf %72 : vector<8x8xf32> to vector<8x8xbf16>
    %c0_24 = arith.constant 0 : index
    %c0_25 = arith.constant 0 : index
    %c16 = arith.constant 16 : index
    %74 = vector.load %arg2[%c0_24, %c0_25, %c16] : memref<1x8x32xbf16, #tpu.memory_space<vmem>>, vector<1x8x8xbf16>
    %75 = vector.shape_cast %74 : vector<1x8x8xbf16> to vector<8x8xbf16>
    %76 = vector.shape_cast %73 : vector<8x8xbf16> to vector<1x8x8xbf16>
    tpu.vector_store %arg2[%c0_24, %c0_25, %c16], %76 {strides = array<i32>} : memref<1x8x32xbf16, #tpu.memory_space<vmem>>, vector<1x8x8xbf16>,
    %77 = vector.extract_strided_slice %1 {offsets = [0, 24], sizes = [8, 8], strides = [1, 1]} : vector<8x96xbf16> to vector<8x8xbf16>
    %78 = vector.extract_strided_slice %1 {offsets = [0, 56], sizes = [8, 8], strides = [1, 1]} : vector<8x96xbf16> to vector<8x8xbf16>
    %79 = vector.extract_strided_slice %1 {offsets = [0, 88], sizes = [8, 8], strides = [1, 1]} : vector<8x96xbf16> to vector<8x8xbf16>
    %cst_26 = arith.constant dense<0.000000e+00> : vector<8x8xf32>
    %80 = tpu.matmul %77, %78, %cst_26 {dimension_numbers = #tpu.dot_dimension_numbers<[1], [1], [0], [0], [0, 0, 1, 0], [], []>} : vector<8x8xbf16>, vector<8x8xbf16>, vector<8x8xf32> -> vector<8x8xf32>
    %cst_27 = arith.constant 0.353553385 : f32
    %81 = vector.broadcast %cst_27 : f32 to vector<8x8xf32>
    %82 = arith.mulf %80, %81 : vector<8x8xf32>
    %cst_28 = arith.constant -1.000000e+30 : f32
    %83 = vector.broadcast %cst_28 : f32 to vector<8x8xf32>
    %84 = arith.select %4, %82, %83 : vector<8x8xi1>, vector<8x8xf32>
    %cst_29 = arith.constant dense<0xFF800000> : vector<8xf32>
    %85 = vector.multi_reduction <maximumf>, %84, %cst_29 [1] : vector<8x8xf32> to vector<8xf32>
    %86 = vector.shape_cast %85 : vector<8xf32> to vector<8x1xf32>
    %87 = vector.broadcast %86 : vector<8x1xf32> to vector<8x8xf32>
    %88 = arith.subf %84, %87 : vector<8x8xf32>
    %89 = math.exp %88 : vector<8x8xf32>
    %cst_30 = arith.constant dense<0.000000e+00> : vector<8xf32>
    %90 = vector.multi_reduction <add>, %89, %cst_30 [1] : vector<8x8xf32> to vector<8xf32>
    %91 = vector.shape_cast %90 : vector<8xf32> to vector<8x1xf32>
    %92 = tpu.reciprocal %91 {approx = true} : vector<8x1xf32> -> vector<8x1xf32>
    %93 = vector.broadcast %92 : vector<8x1xf32> to vector<8x8xf32>
    %94 = arith.mulf %89, %93 : vector<8x8xf32>
    %95 = arith.truncf %94 : vector<8x8xf32> to vector<8x8xbf16>
    %cst_31 = arith.constant dense<0.000000e+00> : vector<8x8xf32>
    %96 = tpu.matmul %95, %79, %cst_31 {dimension_numbers = #tpu.dot_dimension_numbers<[1], [0], [0], [1], [0, 0, 1, 1], [], []>} : vector<8x8xbf16>, vector<8x8xbf16>, vector<8x8xf32> -> vector<8x8xf32>
    %97 = arith.truncf %96 : vector<8x8xf32> to vector<8x8xbf16>
    %c0_32 = arith.constant 0 : index
    %c0_33 = arith.constant 0 : index
    %c24 = arith.constant 24 : index
    %98 = vector.load %arg2[%c0_32, %c0_33, %c24] : memref<1x8x32xbf16, #tpu.memory_space<vmem>>, vector<1x8x8xbf16>
    %99 = vector.shape_cast %98 : vector<1x8x8xbf16> to vector<8x8xbf16>
    %100 = vector.shape_cast %97 : vector<8x8xbf16> to vector<1x8x8xbf16>
    tpu.vector_store %arg2[%c0_32, %c0_33, %c24], %100 {strides = array<i32>} : memref<1x8x32xbf16, #tpu.memory_space<vmem>>, vector<1x8x8xbf16>,
    return
  }
  func.func @transform_0(%arg0: i32) -> (i32, i32, i32) {
    %c0_i32 = arith.constant 0 : i32
    %c0_i32_0 = arith.constant 0 : i32
    %c0_i32_1 = arith.constant 0 : i32
    return %arg0, %c0_i32, %c0_i32_0 : i32, i32, i32
  }
  func.func @transform_1(%arg0: i32) -> (i32, i32, i32) {
    %c0_i32 = arith.constant 0 : i32
    %c0_i32_0 = arith.constant 0 : i32
    %c0_i32_1 = arith.constant 0 : i32
    return %arg0, %c0_i32, %c0_i32_0 : i32, i32, i32
  }
}

module attributes {stable_mosaic.version = 11 : i64} {
  func.func @_fused_linear_kernel(%arg0: i32, %arg1: i32, %arg2: i32, %arg3: memref<8x32xbf16, #tpu.memory_space<vmem>>, %arg4: memref<32x32xbf16, #tpu.memory_space<vmem>>, %arg5: memref<1x32xf32, #tpu.memory_space<vmem>>, %arg6: memref<8x32xbf16, #tpu.memory_space<vmem>>, %arg7: memref<8x32xbf16, #tpu.memory_space<vmem>>, %arg8: memref<8x32xf32, #tpu.memory_space<vmem>>) attributes {dimension_semantics = [#tpu.dimension_semantics<parallel>, #tpu.dimension_semantics<parallel>, #tpu.dimension_semantics<arbitrary>], iteration_bounds = array<i64: 2, 1, 1>, scalar_prefetch = 0 : i64, scratch_operands = 1 : i64, tpu.core_type = #tpu.core_type<tc>, window_params = [{transform_indices = @transform_0, window_bounds = array<i64: 8, 32>}, {transform_indices = @transform_1, window_bounds = array<i64: 32, 32>}, {transform_indices = @transform_2, window_bounds = array<i64: 1, 32>}, {transform_indices = @transform_3, window_bounds = array<i64: 8, 32>}, {transform_indices = @transform_4, window_bounds = array<i64: 8, 32>}]} {
    %c0_i32 = arith.constant 0 : i32
    %0 = arith.cmpi eq, %arg2, %c0_i32 : i32
    %1 = arith.extui %0 : i1 to i32
    %c0_i32_0 = arith.constant 0 : i32
    %2 = arith.cmpi ne, %1, %c0_i32_0 : i32
    scf.if %2 {
      %cst_10 = arith.constant 0.000000e+00 : f32
      %12 = vector.broadcast %cst_10 : f32 to vector<8x32xf32>
      %c0_11 = arith.constant 0 : index
      %c0_12 = arith.constant 0 : index
      %13 = vector.load %arg8[%c0_11, %c0_12] : memref<8x32xf32, #tpu.memory_space<vmem>>, vector<8x32xf32>
      tpu.vector_store %arg8[%c0_11, %c0_12], %12 {strides = array<i32>} : memref<8x32xf32, #tpu.memory_space<vmem>>, vector<8x32xf32>,
    } else {
    }
    %c0 = arith.constant 0 : index
    %c0_1 = arith.constant 0 : index
    %3 = vector.load %arg3[%c0, %c0_1] : memref<8x32xbf16, #tpu.memory_space<vmem>>, vector<8x32xbf16>
    %c0_2 = arith.constant 0 : index
    %c0_3 = arith.constant 0 : index
    %4 = vector.load %arg8[%c0_2, %c0_3] : memref<8x32xf32, #tpu.memory_space<vmem>>, vector<8x32xf32>
    %c0_4 = arith.constant 0 : index
    %c0_5 = arith.constant 0 : index
    %5 = vector.load %arg4[%c0_4, %c0_5] : memref<32x32xbf16, #tpu.memory_space<vmem>>, vector<32x32xbf16>
    %cst = arith.constant dense<0.000000e+00> : vector<8x32xf32>
    %6 = tpu.matmul %3, %5, %cst {dimension_numbers = #tpu.dot_dimension_numbers<[1], [0], [0], [1], [0, 0, 1, 1], [], []>} : vector<8x32xbf16>, vector<32x32xbf16>, vector<8x32xf32> -> vector<8x32xf32>
    %7 = arith.addf %4, %6 : vector<8x32xf32>
    %c0_6 = arith.constant 0 : index
    %c0_7 = arith.constant 0 : index
    %8 = vector.load %arg8[%c0_6, %c0_7] : memref<8x32xf32, #tpu.memory_space<vmem>>, vector<8x32xf32>
    tpu.vector_store %arg8[%c0_6, %c0_7], %7 {strides = array<i32>} : memref<8x32xf32, #tpu.memory_space<vmem>>, vector<8x32xf32>,
    %c0_i32_8 = arith.constant 0 : i32
    %9 = arith.cmpi eq, %arg2, %c0_i32_8 : i32
    %10 = arith.extui %9 : i1 to i32
    %c0_i32_9 = arith.constant 0 : i32
    %11 = arith.cmpi ne, %10, %c0_i32_9 : i32
    scf.if %11 {
      %c0_10 = arith.constant 0 : index
      %c0_11 = arith.constant 0 : index
      %12 = vector.load %arg8[%c0_10, %c0_11] : memref<8x32xf32, #tpu.memory_space<vmem>>, vector<8x32xf32>
      %c0_12 = arith.constant 0 : index
      %c0_13 = arith.constant 0 : index
      %13 = vector.load %arg5[%c0_12, %c0_13] : memref<1x32xf32, #tpu.memory_space<vmem>>, vector<1x32xf32>
      %14 = vector.broadcast %13 : vector<1x32xf32> to vector<8x32xf32>
      %15 = arith.addf %12, %14 : vector<8x32xf32>
      %c0_14 = arith.constant 0 : index
      %c0_15 = arith.constant 0 : index
      %16 = vector.load %arg6[%c0_14, %c0_15] : memref<8x32xbf16, #tpu.memory_space<vmem>>, vector<8x32xbf16>
      %17 = arith.extf %16 : vector<8x32xbf16> to vector<8x32xf32>
      %18 = arith.addf %15, %17 : vector<8x32xf32>
      %19 = arith.truncf %18 : vector<8x32xf32> to vector<8x32xbf16>
      %c0_16 = arith.constant 0 : index
      %c0_17 = arith.constant 0 : index
      %20 = vector.load %arg7[%c0_16, %c0_17] : memref<8x32xbf16, #tpu.memory_space<vmem>>, vector<8x32xbf16>
      tpu.vector_store %arg7[%c0_16, %c0_17], %19 {strides = array<i32>} : memref<8x32xbf16, #tpu.memory_space<vmem>>, vector<8x32xbf16>,
    } else {
    }
    return
  }
  func.func @transform_0(%arg0: i32, %arg1: i32, %arg2: i32) -> (i32, i32) {
    %c0_i32 = arith.constant 0 : i32
    return %arg0, %arg2 : i32, i32
  }
  func.func @transform_1(%arg0: i32, %arg1: i32, %arg2: i32) -> (i32, i32) {
    %c0_i32 = arith.constant 0 : i32
    return %arg2, %arg1 : i32, i32
  }
  func.func @transform_2(%arg0: i32, %arg1: i32, %arg2: i32) -> (i32, i32) {
    %c0_i32 = arith.constant 0 : i32
    %c0_i32_0 = arith.constant 0 : i32
    return %c0_i32, %arg1 : i32, i32
  }
  func.func @transform_3(%arg0: i32, %arg1: i32, %arg2: i32) -> (i32, i32) {
    %c0_i32 = arith.constant 0 : i32
    return %arg0, %arg1 : i32, i32
  }
  func.func @transform_4(%arg0: i32, %arg1: i32, %arg2: i32) -> (i32, i32) {
    %c0_i32 = arith.constant 0 : i32
    return %arg0, %arg1 : i32, i32
  }
}

module attributes {stable_mosaic.version = 11 : i64} {
  func.func @_fused_linear_kernel(%arg0: i32, %arg1: i32, %arg2: i32, %arg3: memref<8x32xbf16, #tpu.memory_space<vmem>>, %arg4: memref<32x64xbf16, #tpu.memory_space<vmem>>, %arg5: memref<1x64xf32, #tpu.memory_space<vmem>>, %arg6: memref<1x32xf32, #tpu.memory_space<vmem>>, %arg7: memref<1x32xf32, #tpu.memory_space<vmem>>, %arg8: memref<8x64xbf16, #tpu.memory_space<vmem>>, %arg9: memref<8x64xf32, #tpu.memory_space<vmem>>, %arg10: memref<8x32xbf16, #tpu.memory_space<vmem>>) attributes {dimension_semantics = [#tpu.dimension_semantics<parallel>, #tpu.dimension_semantics<arbitrary>, #tpu.dimension_semantics<arbitrary>], iteration_bounds = array<i64: 2, 1, 1>, scalar_prefetch = 0 : i64, scratch_operands = 2 : i64, tpu.core_type = #tpu.core_type<tc>, window_params = [{transform_indices = @transform_0, window_bounds = array<i64: 8, 32>}, {transform_indices = @transform_1, window_bounds = array<i64: 32, 64>}, {transform_indices = @transform_2, window_bounds = array<i64: 1, 64>}, {pipeline_mode = #tpu.pipeline_mode<synchronous>, transform_indices = @transform_3, window_bounds = array<i64: 1, 32>}, {pipeline_mode = #tpu.pipeline_mode<synchronous>, transform_indices = @transform_4, window_bounds = array<i64: 1, 32>}, {transform_indices = @transform_5, window_bounds = array<i64: 8, 64>}]} {
    %c0_i32 = arith.constant 0 : i32
    %0 = arith.cmpi eq, %arg2, %c0_i32 : i32
    %1 = arith.extui %0 : i1 to i32
    %c0_i32_0 = arith.constant 0 : i32
    %2 = arith.cmpi ne, %1, %c0_i32_0 : i32
    scf.if %2 {
      %cst_12 = arith.constant 0.000000e+00 : f32
      %15 = vector.broadcast %cst_12 : f32 to vector<8x64xf32>
      %c0_13 = arith.constant 0 : index
      %c0_14 = arith.constant 0 : index
      %16 = vector.load %arg9[%c0_13, %c0_14] : memref<8x64xf32, #tpu.memory_space<vmem>>, vector<8x64xf32>
      tpu.vector_store %arg9[%c0_13, %c0_14], %15 {strides = array<i32>} : memref<8x64xf32, #tpu.memory_space<vmem>>, vector<8x64xf32>,
    } else {
    }
    %c0_i32_1 = arith.constant 0 : i32
    %3 = arith.cmpi eq, %arg1, %c0_i32_1 : i32
    %4 = arith.extui %3 : i1 to i32
    %c0_i32_2 = arith.constant 0 : i32
    %5 = arith.cmpi ne, %4, %c0_i32_2 : i32
    scf.if %5 {
      %c0_12 = arith.constant 0 : index
      %c0_13 = arith.constant 0 : index
      %15 = vector.load %arg3[%c0_12, %c0_13] : memref<8x32xbf16, #tpu.memory_space<vmem>>, vector<8x32xbf16>
      %16 = arith.extf %15 : vector<8x32xbf16> to vector<8x32xf32>
      %cst_14 = arith.constant dense<0.000000e+00> : vector<8xf32>
      %17 = vector.multi_reduction <add>, %16, %cst_14 [1] : vector<8x32xf32> to vector<8xf32>
      %18 = vector.shape_cast %17 : vector<8xf32> to vector<8x1xf32>
      %cst_15 = arith.constant 3.200000e+01 : f32
      %19 = vector.broadcast %cst_15 : f32 to vector<8x1xf32>
      %20 = arith.divf %18, %19 : vector<8x1xf32>
      %21 = vector.broadcast %20 : vector<8x1xf32> to vector<8x32xf32>
      %22 = arith.subf %16, %21 : vector<8x32xf32>
      %23 = arith.mulf %22, %22 : vector<8x32xf32>
      %cst_16 = arith.constant dense<0.000000e+00> : vector<8xf32>
      %24 = vector.multi_reduction <add>, %23, %cst_16 [1] : vector<8x32xf32> to vector<8xf32>
      %25 = vector.shape_cast %24 : vector<8xf32> to vector<8x1xf32>
      %cst_17 = arith.constant 3.200000e+01 : f32
      %26 = vector.broadcast %cst_17 : f32 to vector<8x1xf32>
      %27 = arith.divf %25, %26 : vector<8x1xf32>
      %28 = vector.broadcast %20 : vector<8x1xf32> to vector<8x32xf32>
      %29 = arith.subf %16, %28 : vector<8x32xf32>
      %cst_18 = arith.constant 9.99999974E-6 : f32
      %30 = vector.broadcast %cst_18 : f32 to vector<8x1xf32>
      %31 = arith.addf %27, %30 : vector<8x1xf32>
      %32 = math.rsqrt %31 : vector<8x1xf32>
      %33 = vector.broadcast %32 : vector<8x1xf32> to vector<8x32xf32>
      %34 = arith.mulf %29, %33 : vector<8x32xf32>
      %c0_19 = arith.constant 0 : index
      %c0_20 = arith.constant 0 : index
      %35 = vector.load %arg6[%c0_19, %c0_20] : memref<1x32xf32, #tpu.memory_space<vmem>>, vector<1x32xf32>
      %36 = vector.broadcast %35 : vector<1x32xf32> to vector<8x32xf32>
      %37 = arith.mulf %34, %36 : vector<8x32xf32>
      %c0_21 = arith.constant 0 : index
      %c0_22 = arith.constant 0 : index
      %38 = vector.load %arg7[%c0_21, %c0_22] : memref<1x32xf32, #tpu.memory_space<vmem>>, vector<1x32xf32>
      %39 = vector.broadcast %38 : vector<1x32xf32> to vector<8x32xf32>
      %40 = arith.addf %37, %39 : vector<8x32xf32>
      %41 = arith.truncf %40 : vector<8x32xf32> to vector<8x32xbf16>
      %c0_23 = arith.constant 0 : index
      %c0_24 = arith.constant 0 : index
      %42 = vector.load %arg10[%c0_23, %c0_24] : memref<8x32xbf16, #tpu.memory_space<vmem>>, vector<8x32xbf16>
      tpu.vector_store %arg10[%c0_23, %c0_24], %41 {strides = array<i32>} : memref<8x32xbf16, #tpu.memory_space<vmem>>, vector<8x32xbf16>,
    } else {
    }
    %c0 = arith.constant 0 : index
    %c0_3 = arith.constant 0 : index
    %6 = vector.load %arg10[%c0, %c0_3] : memref<8x32xbf16, #tpu.memory_space<vmem>>, vector<8x32xbf16>
    %c0_4 = arith.constant 0 : index
    %c0_5 = arith.constant 0 : index
    %7 = vector.load %arg9[%c0_4, %c0_5] : memref<8x64xf32, #tpu.memory_space<vmem>>, vector<8x64xf32>
    %c0_6 = arith.constant 0 : index
    %c0_7 = arith.constant 0 : index
    %8 = vector.load %arg4[%c0_6, %c0_7] : memref<32x64xbf16, #tpu.memory_space<vmem>>, vector<32x64xbf16>
    %cst = arith.constant dense<0.000000e+00> : vector<8x64xf32>
    %9 = tpu.matmul %6, %8, %cst {dimension_numbers = #tpu.dot_dimension_numbers<[1], [0], [0], [1], [0, 0, 1, 1], [], []>} : vector<8x32xbf16>, vector<32x64xbf16>, vector<8x64xf32> -> vector<8x64xf32>
    %10 = arith.addf %7, %9 : vector<8x64xf32>
    %c0_8 = arith.constant 0 : index
    %c0_9 = arith.constant 0 : index
    %11 = vector.load %arg9[%c0_8, %c0_9] : memref<8x64xf32, #tpu.memory_space<vmem>>, vector<8x64xf32>
    tpu.vector_store %arg9[%c0_8, %c0_9], %10 {strides = array<i32>} : memref<8x64xf32, #tpu.memory_space<vmem>>, vector<8x64xf32>,
    %c0_i32_10 = arith.constant 0 : i32
    %12 = arith.cmpi eq, %arg2, %c0_i32_10 : i32
    %13 = arith.extui %12 : i1 to i32
    %c0_i32_11 = arith.constant 0 : i32
    %14 = arith.cmpi ne, %13, %c0_i32_11 : i32
    scf.if %14 {
      %c0_12 = arith.constant 0 : index
      %c0_13 = arith.constant 0 : index
      %15 = vector.load %arg9[%c0_12, %c0_13] : memref<8x64xf32, #tpu.memory_space<vmem>>, vector<8x64xf32>
      %c0_14 = arith.constant 0 : index
      %c0_15 = arith.constant 0 : index
      %16 = vector.load %arg5[%c0_14, %c0_15] : memref<1x64xf32, #tpu.memory_space<vmem>>, vector<1x64xf32>
      %17 = vector.broadcast %16 : vector<1x64xf32> to vector<8x64xf32>
      %18 = arith.addf %15, %17 : vector<8x64xf32>
      %cst_16 = arith.constant 1.702000e+00 : f32
      %19 = vector.broadcast %cst_16 : f32 to vector<8x64xf32>
      %20 = arith.mulf %19, %18 : vector<8x64xf32>
      %21 = arith.negf %20 : vector<8x64xf32>
      %22 = math.exp %21 : vector<8x64xf32>
      %cst_17 = arith.constant 1.000000e+00 : f32
      %23 = vector.broadcast %cst_17 : f32 to vector<8x64xf32>
      %24 = arith.addf %23, %22 : vector<8x64xf32>
      %25 = arith.divf %23, %24 : vector<8x64xf32>
      %26 = arith.mulf %18, %25 : vector<8x64xf32>
      %27 = arith.truncf %26 : vector<8x64xf32> to vector<8x64xbf16>
      %c0_18 = arith.constant 0 : index
      %c0_19 = arith.constant 0 : index
      %28 = vector.load %arg8[%c0_18, %c0_19] : memref<8x64xbf16, #tpu.memory_space<vmem>>, vector<8x64xbf16>
      tpu.vector_store %arg8[%c0_18, %c0_19], %27 {strides = array<i32>} : memref<8x64xbf16, #tpu.memory_space<vmem>>, vector<8x64xbf16>,
    } else {
    }
    return
  }
  func.func @transform_0(%arg0: i32, %arg1: i32, %arg2: i32) -> (i32, i32) {
    %c0_i32 = arith.constant 0 : i32
    %c0_i32_0 = arith.constant 0 : i32
    return %arg0, %c0_i32 : i32, i32
  }
  func.func @transform_1(%arg0: i32, %arg1: i32, %arg2: i32) -> (i32, i32) {
    %c0_i32 = arith.constant 0 : i32
    return %arg2, %arg1 : i32, i32
  }
  func.func @transform_2(%arg0: i32, %arg1: i32, %arg2: i32) -> (i32, i32) {
    %c0_i32 = arith.constant 0 : i32
    %c0_i32_0 = arith.constant 0 : i32
    return %c0_i32, %arg1 : i32, i32
  }
  func.func @transform_3(%arg0: i32, %arg1: i32, %arg2: i32) -> (i32, i32) {
    %c0_i32 = arith.constant 0 : i32
    %c0_i32_0 = arith.constant 0 : i32
    %c0_i32_1 = arith.constant 0 : i32
    return %c0_i32, %c0_i32_0 : i32, i32
  }
  func.func @transform_4(%arg0: i32, %arg1: i32, %arg2: i32) -> (i32, i32) {
    %c0_i32 = arith.constant 0 : i32
    %c0_i32_0 = arith.constant 0 : i32
    %c0_i32_1 = arith.constant 0 : i32
    return %c0_i32, %c0_i32_0 : i32, i32
  }
  func.func @transform_5(%arg0: i32, %arg1: i32, %arg2: i32) -> (i32, i32) {
    %c0_i32 = arith.constant 0 : i32
    return %arg0, %arg1 : i32, i32
  }
}

module attributes {stable_mosaic.version = 11 : i64} {
  func.func @_fused_linear_kernel(%arg0: i32, %arg1: i32, %arg2: i32, %arg3: memref<8x64xbf16, #tpu.memory_space<vmem>>, %arg4: memref<64x32xbf16, #tpu.memory_space<vmem>>, %arg5: memref<1x32xf32, #tpu.memory_space<vmem>>, %arg6: memref<8x32xbf16, #tpu.memory_space<vmem>>, %arg7: memref<8x32xbf16, #tpu.memory_space<vmem>>, %arg8: memref<8x32xf32, #tpu.memory_space<vmem>>) attributes {dimension_semantics = [#tpu.dimension_semantics<parallel>, #tpu.dimension_semantics<parallel>, #tpu.dimension_semantics<arbitrary>], iteration_bounds = array<i64: 2, 1, 1>, scalar_prefetch = 0 : i64, scratch_operands = 1 : i64, tpu.core_type = #tpu.core_type<tc>, window_params = [{transform_indices = @transform_0, window_bounds = array<i64: 8, 64>}, {transform_indices = @transform_1, window_bounds = array<i64: 64, 32>}, {transform_indices = @transform_2, window_bounds = array<i64: 1, 32>}, {transform_indices = @transform_3, window_bounds = array<i64: 8, 32>}, {transform_indices = @transform_4, window_bounds = array<i64: 8, 32>}]} {
    %c0_i32 = arith.constant 0 : i32
    %0 = arith.cmpi eq, %arg2, %c0_i32 : i32
    %1 = arith.extui %0 : i1 to i32
    %c0_i32_0 = arith.constant 0 : i32
    %2 = arith.cmpi ne, %1, %c0_i32_0 : i32
    scf.if %2 {
      %cst_10 = arith.constant 0.000000e+00 : f32
      %12 = vector.broadcast %cst_10 : f32 to vector<8x32xf32>
      %c0_11 = arith.constant 0 : index
      %c0_12 = arith.constant 0 : index
      %13 = vector.load %arg8[%c0_11, %c0_12] : memref<8x32xf32, #tpu.memory_space<vmem>>, vector<8x32xf32>
      tpu.vector_store %arg8[%c0_11, %c0_12], %12 {strides = array<i32>} : memref<8x32xf32, #tpu.memory_space<vmem>>, vector<8x32xf32>,
    } else {
    }
    %c0 = arith.constant 0 : index
    %c0_1 = arith.constant 0 : index
    %3 = vector.load %arg3[%c0, %c0_1] : memref<8x64xbf16, #tpu.memory_space<vmem>>, vector<8x64xbf16>
    %c0_2 = arith.constant 0 : index
    %c0_3 = arith.constant 0 : index
    %4 = vector.load %arg8[%c0_2, %c0_3] : memref<8x32xf32, #tpu.memory_space<vmem>>, vector<8x32xf32>
    %c0_4 = arith.constant 0 : index
    %c0_5 = arith.constant 0 : index
    %5 = vector.load %arg4[%c0_4, %c0_5] : memref<64x32xbf16, #tpu.memory_space<vmem>>, vector<64x32xbf16>
    %cst = arith.constant dense<0.000000e+00> : vector<8x32xf32>
    %6 = tpu.matmul %3, %5, %cst {dimension_numbers = #tpu.dot_dimension_numbers<[1], [0], [0], [1], [0, 0, 1, 1], [], []>} : vector<8x64xbf16>, vector<64x32xbf16>, vector<8x32xf32> -> vector<8x32xf32>
    %7 = arith.addf %4, %6 : vector<8x32xf32>
    %c0_6 = arith.constant 0 : index
    %c0_7 = arith.constant 0 : index
    %8 = vector.load %arg8[%c0_6, %c0_7] : memref<8x32xf32, #tpu.memory_space<vmem>>, vector<8x32xf32>
    tpu.vector_store %arg8[%c0_6, %c0_7], %7 {strides = array<i32>} : memref<8x32xf32, #tpu.memory_space<vmem>>, vector<8x32xf32>,
    %c0_i32_8 = arith.constant 0 : i32
    %9 = arith.cmpi eq, %arg2, %c0_i32_8 : i32
    %10 = arith.extui %9 : i1 to i32
    %c0_i32_9 = arith.constant 0 : i32
    %11 = arith.cmpi ne, %10, %c0_i32_9 : i32
    scf.if %11 {
      %c0_10 = arith.constant 0 : index
      %c0_11 = arith.constant 0 : index
      %12 = vector.load %arg8[%c0_10, %c0_11] : memref<8x32xf32, #tpu.memory_space<vmem>>, vector<8x32xf32>
      %c0_12 = arith.constant 0 : index
      %c0_13 = arith.constant 0 : index
      %13 = vector.load %arg5[%c0_12, %c0_13] : memref<1x32xf32, #tpu.memory_space<vmem>>, vector<1x32xf32>
      %14 = vector.broadcast %13 : vector<1x32xf32> to vector<8x32xf32>
      %15 = arith.addf %12, %14 : vector<8x32xf32>
      %c0_14 = arith.constant 0 : index
      %c0_15 = arith.constant 0 : index
      %16 = vector.load %arg6[%c0_14, %c0_15] : memref<8x32xbf16, #tpu.memory_space<vmem>>, vector<8x32xbf16>
      %17 = arith.extf %16 : vector<8x32xbf16> to vector<8x32xf32>
      %18 = arith.addf %15, %17 : vector<8x32xf32>
      %19 = arith.truncf %18 : vector<8x32xf32> to vector<8x32xbf16>
      %c0_16 = arith.constant 0 : index
      %c0_17 = arith.constant 0 : index
      %20 = vector.load %arg7[%c0_16, %c0_17] : memref<8x32xbf16, #tpu.memory_space<vmem>>, vector<8x32xbf16>
      tpu.vector_store %arg7[%c0_16, %c0_17], %19 {strides = array<i32>} : memref<8x32xbf16, #tpu.memory_space<vmem>>, vector<8x32xbf16>,
    } else {
    }
    return
  }
  func.func @transform_0(%arg0: i32, %arg1: i32, %arg2: i32) -> (i32, i32) {
    %c0_i32 = arith.constant 0 : i32
    return %arg0, %arg2 : i32, i32
  }
  func.func @transform_1(%arg0: i32, %arg1: i32, %arg2: i32) -> (i32, i32) {
    %c0_i32 = arith.constant 0 : i32
    return %arg2, %arg1 : i32, i32
  }
  func.func @transform_2(%arg0: i32, %arg1: i32, %arg2: i32) -> (i32, i32) {
    %c0_i32 = arith.constant 0 : i32
    %c0_i32_0 = arith.constant 0 : i32
    return %c0_i32, %arg1 : i32, i32
  }
  func.func @transform_3(%arg0: i32, %arg1: i32, %arg2: i32) -> (i32, i32) {
    %c0_i32 = arith.constant 0 : i32
    return %arg0, %arg1 : i32, i32
  }
  func.func @transform_4(%arg0: i32, %arg1: i32, %arg2: i32) -> (i32, i32) {
    %c0_i32 = arith.constant 0 : i32
    return %arg0, %arg1 : i32, i32
  }
}

module attributes {stable_mosaic.version = 11 : i64} {
  func.func @_sae_kernel(%arg0: i32, %arg1: i32, %arg2: memref<2x32xbf16, #tpu.memory_space<vmem>>, %arg3: memref<1x32xf32, #tpu.memory_space<vmem>>, %arg4: memref<32x64xbf16, #tpu.memory_space<vmem>>, %arg5: memref<1x64xf32, #tpu.memory_space<vmem>>, %arg6: memref<64x32xbf16, #tpu.memory_space<vmem>>, %arg7: memref<1x2x32xf32, #tpu.memory_space<vmem>>, %arg8: memref<2x32xf32, #tpu.memory_space<vmem>>) attributes {dimension_semantics = [#tpu.dimension_semantics<parallel>, #tpu.dimension_semantics<arbitrary>], iteration_bounds = array<i64: 1, 1>, scalar_prefetch = 0 : i64, scratch_operands = 1 : i64, tpu.core_type = #tpu.core_type<tc>, window_params = [{pipeline_mode = #tpu.pipeline_mode<synchronous>, transform_indices = @transform_0, window_bounds = array<i64: 2, 32>}, {pipeline_mode = #tpu.pipeline_mode<synchronous>, transform_indices = @transform_1, window_bounds = array<i64: 1, 32>}, {transform_indices = @transform_2, window_bounds = array<i64: 32, 64>}, {transform_indices = @transform_3, window_bounds = array<i64: 1, 64>}, {transform_indices = @transform_4, window_bounds = array<i64: 64, 32>}, {transform_indices = @transform_5, window_bounds = array<i64: 1, 2, 32>}]} {
    %c0_i32 = arith.constant 0 : i32
    %0 = arith.cmpi eq, %arg1, %c0_i32 : i32
    %1 = arith.extui %0 : i1 to i32
    %c0_i32_0 = arith.constant 0 : i32
    %2 = arith.cmpi ne, %1, %c0_i32_0 : i32
    scf.if %2 {
      %cst_18 = arith.constant 0.000000e+00 : f32
      %25 = vector.broadcast %cst_18 : f32 to vector<2x32xf32>
      %c0_19 = arith.constant 0 : index
      %c0_20 = arith.constant 0 : index
      %26 = vector.load %arg8[%c0_19, %c0_20] : memref<2x32xf32, #tpu.memory_space<vmem>>, vector<2x32xf32>
      tpu.vector_store %arg8[%c0_19, %c0_20], %25 {strides = array<i32>} : memref<2x32xf32, #tpu.memory_space<vmem>>, vector<2x32xf32>,
    } else {
    }
    %c0 = arith.constant 0 : index
    %c0_1 = arith.constant 0 : index
    %3 = vector.load %arg2[%c0, %c0_1] : memref<2x32xbf16, #tpu.memory_space<vmem>>, vector<2x32xbf16>
    %4 = arith.extf %3 : vector<2x32xbf16> to vector<2x32xf32>
    %c0_2 = arith.constant 0 : index
    %c0_3 = arith.constant 0 : index
    %5 = vector.load %arg3[%c0_2, %c0_3] : memref<1x32xf32, #tpu.memory_space<vmem>>, vector<1x32xf32>
    %6 = vector.broadcast %5 : vector<1x32xf32> to vector<2x32xf32>
    %7 = arith.subf %4, %6 : vector<2x32xf32>
    %8 = arith.truncf %7 : vector<2x32xf32> to vector<2x32xbf16>
    %c0_4 = arith.constant 0 : index
    %c0_5 = arith.constant 0 : index
    %9 = vector.load %arg4[%c0_4, %c0_5] : memref<32x64xbf16, #tpu.memory_space<vmem>>, vector<32x64xbf16>
    %cst = arith.constant dense<0.000000e+00> : vector<2x64xf32>
    %10 = tpu.matmul %8, %9, %cst {dimension_numbers = #tpu.dot_dimension_numbers<[1], [0], [0], [1], [0, 0, 1, 1], [], []>} : vector<2x32xbf16>, vector<32x64xbf16>, vector<2x64xf32> -> vector<2x64xf32>
    %c0_6 = arith.constant 0 : index
    %c0_7 = arith.constant 0 : index
    %11 = vector.load %arg5[%c0_6, %c0_7] : memref<1x64xf32, #tpu.memory_space<vmem>>, vector<1x64xf32>
    %12 = vector.broadcast %11 : vector<1x64xf32> to vector<2x64xf32>
    %13 = arith.addf %10, %12 : vector<2x64xf32>
    %cst_8 = arith.constant 0.000000e+00 : f32
    %14 = vector.broadcast %cst_8 : f32 to vector<2x64xf32>
    %15 = arith.maximumf %13, %14 : vector<2x64xf32>
    %c0_9 = arith.constant 0 : index
    %c0_10 = arith.constant 0 : index
    %16 = vector.load %arg8[%c0_9, %c0_10] : memref<2x32xf32, #tpu.memory_space<vmem>>, vector<2x32xf32>
    %17 = arith.truncf %15 : vector<2x64xf32> to vector<2x64xbf16>
    %c0_11 = arith.constant 0 : index
    %c0_12 = arith.constant 0 : index
    %18 = vector.load %arg6[%c0_11, %c0_12] : memref<64x32xbf16, #tpu.memory_space<vmem>>, vector<64x32xbf16>
    %cst_13 = arith.constant dense<0.000000e+00> : vector<2x32xf32>
    %19 = tpu.matmul %17, %18, %cst_13 {dimension_numbers = #tpu.dot_dimension_numbers<[1], [0], [0], [1], [0, 0, 1, 1], [], []>} : vector<2x64xbf16>, vector<64x32xbf16>, vector<2x32xf32> -> vector<2x32xf32>
    %20 = arith.addf %16, %19 : vector<2x32xf32>
    %c0_14 = arith.constant 0 : index
    %c0_15 = arith.constant 0 : index
    %21 = vector.load %arg8[%c0_14, %c0_15] : memref<2x32xf32, #tpu.memory_space<vmem>>, vector<2x32xf32>
    tpu.vector_store %arg8[%c0_14, %c0_15], %20 {strides = array<i32>} : memref<2x32xf32, #tpu.memory_space<vmem>>, vector<2x32xf32>,
    %c0_i32_16 = arith.constant 0 : i32
    %22 = arith.cmpi eq, %arg1, %c0_i32_16 : i32
    %23 = arith.extui %22 : i1 to i32
    %c0_i32_17 = arith.constant 0 : i32
    %24 = arith.cmpi ne, %23, %c0_i32_17 : i32
    scf.if %24 {
      %c0_18 = arith.constant 0 : index
      %c0_19 = arith.constant 0 : index
      %25 = vector.load %arg8[%c0_18, %c0_19] : memref<2x32xf32, #tpu.memory_space<vmem>>, vector<2x32xf32>
      %c0_20 = arith.constant 0 : index
      %c0_21 = arith.constant 0 : index
      %c0_22 = arith.constant 0 : index
      %26 = vector.load %arg7[%c0_20, %c0_21, %c0_22] : memref<1x2x32xf32, #tpu.memory_space<vmem>>, vector<1x2x32xf32>
      %27 = vector.shape_cast %26 : vector<1x2x32xf32> to vector<2x32xf32>
      %28 = vector.shape_cast %25 : vector<2x32xf32> to vector<1x2x32xf32>
      tpu.vector_store %arg7[%c0_20, %c0_21, %c0_22], %28 {strides = array<i32>} : memref<1x2x32xf32, #tpu.memory_space<vmem>>, vector<1x2x32xf32>,
    } else {
    }
    return
  }
  func.func @transform_0(%arg0: i32, %arg1: i32) -> (i32, i32) {
    %c0_i32 = arith.constant 0 : i32
    %c0_i32_0 = arith.constant 0 : i32
    %c0_i32_1 = arith.constant 0 : i32
    return %c0_i32, %c0_i32_0 : i32, i32
  }
  func.func @transform_1(%arg0: i32, %arg1: i32) -> (i32, i32) {
    %c0_i32 = arith.constant 0 : i32
    %c0_i32_0 = arith.constant 0 : i32
    %c0_i32_1 = arith.constant 0 : i32
    return %c0_i32, %c0_i32_0 : i32, i32
  }
  func.func @transform_2(%arg0: i32, %arg1: i32) -> (i32, i32) {
    %c1_i32 = arith.constant 1 : i32
    %0 = arith.muli %arg0, %c1_i32 : i32
    %1 = arith.addi %0, %arg1 : i32
    %c0_i32 = arith.constant 0 : i32
    %c0_i32_0 = arith.constant 0 : i32
    return %c0_i32, %1 : i32, i32
  }
  func.func @transform_3(%arg0: i32, %arg1: i32) -> (i32, i32) {
    %c1_i32 = arith.constant 1 : i32
    %0 = arith.muli %arg0, %c1_i32 : i32
    %1 = arith.addi %0, %arg1 : i32
    %c0_i32 = arith.constant 0 : i32
    %c0_i32_0 = arith.constant 0 : i32
    return %c0_i32, %1 : i32, i32
  }
  func.func @transform_4(%arg0: i32, %arg1: i32) -> (i32, i32) {
    %c1_i32 = arith.constant 1 : i32
    %0 = arith.muli %arg0, %c1_i32 : i32
    %1 = arith.addi %0, %arg1 : i32
    %c0_i32 = arith.constant 0 : i32
    %c0_i32_0 = arith.constant 0 : i32
    return %1, %c0_i32 : i32, i32
  }
  func.func @transform_5(%arg0: i32, %arg1: i32) -> (i32, i32, i32) {
    %c0_i32 = arith.constant 0 : i32
    %c0_i32_0 = arith.constant 0 : i32
    %c0_i32_1 = arith.constant 0 : i32
    return %arg0, %c0_i32, %c0_i32_0 : i32, i32, i32
  }
}

</mosaic_0001>

<llo_original>
// kernel: partial_model_forward.14
$region0: #{partial_model_forward.14}
  #allocation0 [shape = 'u32[]', space=smem, size = 0x4, offset = 0x4, fixed_abs, tag = 'smem constant byte address 0x4 - core index']
  #allocation1 [shape = 'u32[144,128]{1,0:T(1,128)}', space=vmem, size = 0x12000, scoped, tag = 'internal scratch']
  %s0 = inlined_call_operand.vmem [shape: bf16[2,8,32], index: 0, kind: input, shape index: {}]
  %s1 = inlined_call_operand.vmem [shape: f32[8,32], index: 1, kind: input, shape index: {}]
  %s2 = inlined_call_operand.vmem [shape: f32[1,32], index: 2, kind: input, shape index: {}]
  %s3 = inlined_call_operand.vmem [shape: f32[1,32], index: 3, kind: input, shape index: {}]
  %s4 = inlined_call_operand.vmem [shape: bf16[2,8,32], index: 4, kind: output, shape index: {}]
  %s5 = sld [smem:[#allocation0]]
  $region49: #{partial_model_forward.14} parent=0
    _
  %s7 = ssub.s32 1, %s5
  %s8 = scalar_select 0, %s7, %s5
  loop: start=0, step=1, limit=4
  $region2: #{partial_model_forward.14} parent=0 // loop_pre_header
    _
  $region3: #{partial_model_forward.14} parent=0 // loop_header
    %s10 = sphi 0, %s14
    %p11 = scmp.ge.s32.totalorder %s10, 4
    %s20 = sphi 0, %s22
    %s23 = sphi 0, %s20
    %s24 = sphi 0, %s23
    %s40 = sphi 0, %s24
    %s44 = sphi 0, %s44
    %s46 = sphi 0, %s44
    %s47 = sphi 0, %s46
    %s61 = sphi 0, %s47
    %s65 = sphi 0, %s65
    %s67 = sphi 0, %s65
    %s68 = sphi 0, %s67
    %s82 = sphi 0, %s68
    %s86 = sphi 0, %s86
    %s88 = sphi 0, %s86
    %s89 = sphi 0, %s88
    %s103 = sphi 0, %s89
    %s109 = sphi 0, %s111
    %s112 = sphi 0, %s109
    %s113 = sphi 0, %s112
    %s129 = sphi 0, %s113
  $region4: #{partial_model_forward.14} parent=0 // loop_header_branch
    %13 = sbr.rel (%p11) target = $region8
  $region5: #{partial_model_forward.14} parent=0 // loop_body
    %s15 = ssub.s32 %s10, 1
    %s16 = ssub.s32 %s10, 2
    %s17 = sadd.s32 %s10, 1
    %s18 = ssub.s32 %s10, %s17
    %p19 = scmp.eq.s32.totalorder %s18, 0
    %s21 = sadd.s32 %s20, 1
    %s22 = scalar_select %p19, %s20, %s21
    %p25 = pneg %p19
    %p26 = scmp.eq.s32.totalorder %s10, 1
    %p27 = por %p25, %p26
    %p28 = scmp.ne.s32.totalorder %s20, %s23
    %p29 = scmp.eq.s32.totalorder %s10, 0
    %p30 = por %p28, %p29
    %p31 = scmp.ne.s32.totalorder %s20, %s23
    %p32 = scmp.eq.s32.totalorder %s15, 1
    %p33 = por %p31, %p32
    %p34 = scmp.ne.s32.totalorder %s23, %s24
    %p35 = scmp.eq.s32.totalorder %s15, 0
    %p36 = por %p34, %p35
    %p37 = scmp.ne.s32.totalorder %s23, %s24
    %p38 = scmp.eq.s32.totalorder %s16, 1
    %p39 = por %p37, %p38
    %p41 = scmp.ne.s32.totalorder %s24, %s40
    %p42 = scmp.eq.s32.totalorder %s16, 0
    %p43 = por %p41, %p42
    %s45 = sadd.s32 %s44, 1
    %p48 = scmp.eq.s32.totalorder %s10, 1
    %p49 = scmp.ne.s32.totalorder %s44, %s46
    %p50 = scmp.eq.s32.totalorder %s10, 0
    %p51 = por %p49, %p50
    %p52 = scmp.ne.s32.totalorder %s44, %s46
    %p53 = scmp.eq.s32.totalorder %s15, 1
    %p54 = por %p52, %p53
    %p55 = scmp.ne.s32.totalorder %s46, %s47
    %p56 = scmp.eq.s32.totalorder %s15, 0
    %p57 = por %p55, %p56
    %p58 = scmp.ne.s32.totalorder %s46, %s47
    %p59 = scmp.eq.s32.totalorder %s16, 1
    %p60 = por %p58, %p59
    %p62 = scmp.ne.s32.totalorder %s47, %s61
    %p63 = scmp.eq.s32.totalorder %s16, 0
    %p64 = por %p62, %p63
    %s66 = sadd.s32 %s65, 1
    %p69 = scmp.eq.s32.totalorder %s10, 1
    %p70 = scmp.ne.s32.totalorder %s65, %s67
    %p71 = scmp.eq.s32.totalorder %s10, 0
    %p72 = por %p70, %p71
    %p73 = scmp.ne.s32.totalorder %s65, %s67
    %p74 = scmp.eq.s32.totalorder %s15, 1
    %p75 = por %p73, %p74
    %p76 = scmp.ne.s32.totalorder %s67, %s68
    %p77 = scmp.eq.s32.totalorder %s15, 0
    %p78 = por %p76, %p77
    %p79 = scmp.ne.s32.totalorder %s67, %s68
    %p80 = scmp.eq.s32.totalorder %s16, 1
    %p81 = por %p79, %p80
    %p83 = scmp.ne.s32.totalorder %s68, %s82
    %p84 = scmp.eq.s32.totalorder %s16, 0
    %p85 = por %p83, %p84
    %s87 = sadd.s32 %s86, 1
    %p90 = scmp.eq.s32.totalorder %s10, 1
    %p91 = scmp.ne.s32.totalorder %s86, %s88
    %p92 = scmp.eq.s32.totalorder %s10, 0
    %p93 = por %p91, %p92
    %p94 = scmp.ne.s32.totalorder %s86, %s88
    %p95 = scmp.eq.s32.totalorder %s15, 1
    %p96 = por %p94, %p95
    %p97 = scmp.ne.s32.totalorder %s88, %s89
    %p98 = scmp.eq.s32.totalorder %s15, 0
    %p99 = por %p97, %p98
    %p100 = scmp.ne.s32.totalorder %s88, %s89
    %p101 = scmp.eq.s32.totalorder %s16, 1
    %p102 = por %p100, %p101
    %p104 = scmp.ne.s32.totalorder %s89, %s103
    %p105 = scmp.eq.s32.totalorder %s16, 0
    %p106 = por %p104, %p105
    %s107 = ssub.s32 %s10, %s17
    %p108 = scmp.eq.s32.totalorder %s107, 0
    %s110 = sadd.s32 %s109, 1
    %s111 = scalar_select %p108, %s109, %s110
    %p114 = pneg %p108
    %p115 = scmp.eq.s32.totalorder %s10, 1
    %p116 = por %p114, %p115
    %p117 = scmp.ne.s32.totalorder %s109, %s112
    %p118 = scmp.eq.s32.totalorder %s10, 0
    %p119 = por %p117, %p118
    %p120 = scmp.ne.s32.totalorder %s109, %s112
    %p121 = scmp.eq.s32.totalorder %s15, 1
    %p122 = por %p120, %p121
    %p123 = scmp.ne.s32.totalorder %s112, %s113
    %p124 = scmp.eq.s32.totalorder %s15, 0
    %p125 = por %p123, %p124
    %p126 = scmp.ne.s32.totalorder %s112, %s113
    %p127 = scmp.eq.s32.totalorder %s16, 1
    %p128 = por %p126, %p127
    %p130 = scmp.ne.s32.totalorder %s113, %s129
    %p131 = scmp.eq.s32.totalorder %s16, 0
    %p132 = por %p130, %p131
    %p133 = scmp.le.s32.totalorder 1, %s10
    %p134 = scmp.lt.s32.totalorder %s10, 3
    %p135 = pnand %p133, %p134
    %p136 = pneg %p135
    // Predicated region
    $region9: #{partial_model_forward.14} parent=5 // pred_check
      _
    $region10: #{partial_model_forward.14} parent=5 // pred_check_branch
      %138 = sbr.rel (%p135) target = $region12
    $region11: #{partial_model_forward.14} parent=5 // pred_region
      %s139 = ssub.s32 %s10, 1
      // Predicated region
      $region13: #{partial_model_forward.14} parent=11 // pred_check
        %p140 = pneg %p57
      $region14: #{partial_model_forward.14} parent=11 // pred_check_branch
        %142 = sbr.rel (%p140) target = $region16
      $region15: #{partial_model_forward.14} parent=11 // pred_region
        _
      $region16: #{partial_model_forward.14} parent=11 // pred_fallthru
        _
      // Predicated region
      $region17: #{partial_model_forward.14} parent=11 // pred_check
        %p143 = pneg %p78
      $region18: #{partial_model_forward.14} parent=11 // pred_check_branch
        %145 = sbr.rel (%p143) target = $region20
      $region19: #{partial_model_forward.14} parent=11 // pred_region
        _
      $region20: #{partial_model_forward.14} parent=11 // pred_fallthru
        _
      // Predicated region
      $region21: #{partial_model_forward.14} parent=11 // pred_check
        %p146 = pneg %p99
      $region22: #{partial_model_forward.14} parent=11 // pred_check_branch
        %148 = sbr.rel (%p146) target = $region24
      $region23: #{partial_model_forward.14} parent=11 // pred_region
        _
      $region24: #{partial_model_forward.14} parent=11 // pred_fallthru
        _
    $region12: #{partial_model_forward.14} parent=5 // pred_fallthru
      _
    %p149 = scmp.lt.s32.totalorder %s10, 2
    // Predicated region
    $region25: #{partial_model_forward.14} parent=5 // pred_check
      %p150 = pneg %p149
    $region26: #{partial_model_forward.14} parent=5 // pred_check_branch
      %152 = sbr.rel (%p150) target = $region28
    $region27: #{partial_model_forward.14} parent=5 // pred_region
      // Predicated region
      $region29: #{partial_model_forward.14} parent=27 // pred_check
        %p153 = pneg %p30
      $region30: #{partial_model_forward.14} parent=27 // pred_check_branch
        %155 = sbr.rel (%p153) target = $region32
      $region31: #{partial_model_forward.14} parent=27 // pred_region
        %p156 = scmp.lt.s32.totalorder %s10, 1
        %s157 = scalar_select %p156, %s10, 1
        %s158 = smul.addr %s157, 4
        %s159 = scalar_lea.vmem %s0, %s158
      $region32: #{partial_model_forward.14} parent=27 // pred_fallthru
        _
    $region28: #{partial_model_forward.14} parent=5 // pred_fallthru
      _
    %p160 = scmp.le.s32.totalorder 1, %s10
    %p161 = scmp.lt.s32.totalorder %s10, 3
    %p162 = pnand %p160, %p161
    %p163 = pneg %p162
    // Predicated region
    $region33: #{partial_model_forward.14} parent=5 // pred_check
      _
    $region34: #{partial_model_forward.14} parent=5 // pred_check_branch
      %165 = sbr.rel (%p162) target = $region36
    $region35: #{partial_model_forward.14} parent=5 // pred_region
      %s166 = ssub.s32 %s10, 1
      %p167 = scmp.lt.s32.totalorder %s15, 1
      %s168 = scalar_select %p167, %s15, 1
      %s169 = smul.addr %s168, 4
      %s170 = scalar_lea.vmem %s0, %s169
      %p171 = pneg %p36
      %p172 = pneg %p33
      %p173 = pneg %p57
      %p174 = pneg %p54
      %p175 = pneg %p78
      %p176 = pneg %p75
      %p177 = pneg %p99
      %p178 = pneg %p96
      %p179 = pneg %p125
      %p180 = pneg %p122
      %p181 = scmp.lt.s32.totalorder %s15, 1
      %s182 = scalar_select %p181, %s15, 1
      %s183 = smul.addr %s182, 4
      %s184 = scalar_lea.vmem %s4, %s183
      %p185 = scmp.lt.s32.totalorder %s15, 1
      %s186 = scalar_select %p185, %s15, 1
      %s187 = smul.addr %s186, 4
      %s188 = scalar_lea.vmem %s0, %s187
      %p189 = scmp.lt.s32.totalorder %s15, 1
      %s190 = scalar_select %p189, %s15, 1
      %s191 = smul.addr %s190, 4
      %s192 = scalar_lea.vmem %s4, %s191
      %v193 = vld [vmem:[%s188] sm:$0xf]
      %v194 = vunpack.c.l.bf16 %v193
      %v195 = vld [vmem:[%s1] sm:$0xff]
      %v196 = vadd.f32 %v194, %v195
      %vm197 = vcmask 261120
      %v198 = vsel %vm197, %v196, 0.0
      %199 = vadd.xlane.f32.xlu0 %v198
      %v200 = vpop.xlane.xlu0 %199
      %v201 = vrcp.pop 32.0
      %v202 = vmul.f32 %v200, %v201
      %v203 = vsub.f32 %v196, %v202
      %v204 = vmul.f32 %v203, %v203
      %v205 = vsel %vm197, %v204, 0.0
      %206 = vadd.xlane.f32.xlu0 %v205
      %v207 = vpop.xlane.xlu0 %206
      %v208 = vmul.f32 %v207, %v201
      %v209 = vadd.f32 %v208, 1e-05
      %v210 = vrsqrt.pop %v209
      %v211 = vmul.f32 %v203, %v210
      %v212 = vld [vmem:[%s2] sm:$0x1]
      %v214 = vlaneseq
      %v215 = vshrl.u32 %v214, 7
      %v216 = vsub.s32 0, %v215
      %v217 = vrot.slane %v212, %v216
      %v219 = vmul.f32 %v211, %v217
      %v220 = vld [vmem:[%s3] sm:$0x1]
      %v222 = vlaneseq
      %v223 = vshrl.u32 %v222, 7
      %v224 = vsub.s32 0, %v223
      %v225 = vrot.slane %v220, %v224
      %v227 = vadd.f32 %v219, %v225
      %v228 = vpack.c.bf16 %v227, %v227
      %vm229 = vcmask 257024
      %230 = vst.msk [vmem:[%s192] sm:$0xf] %vm229, %v228
      %p231 = scmp.lt.s32.totalorder %s15, 1
      %s232 = scalar_select %p231, %s15, 1
      %s233 = smul.addr %s232, 4
      %s234 = scalar_lea.vmem %s4, %s233
      // Predicated region
      $region37: #{partial_model_forward.14} parent=35 // pred_check
        %p235 = pneg %p122
      $region38: #{partial_model_forward.14} parent=35 // pred_check_branch
        %237 = sbr.rel (%p235) target = $region40
      $region39: #{partial_model_forward.14} parent=35 // pred_region
        _
      $region40: #{partial_model_forward.14} parent=35 // pred_fallthru
        _
    $region36: #{partial_model_forward.14} parent=5 // pred_fallthru
      _
    %p238 = scmp.le.s32.totalorder 2, %s10
    // Predicated region
    $region41: #{partial_model_forward.14} parent=5 // pred_check
      %p239 = pneg %p238
    $region42: #{partial_model_forward.14} parent=5 // pred_check_branch
      %241 = sbr.rel (%p239) target = $region44
    $region43: #{partial_model_forward.14} parent=5 // pred_region
      %s242 = ssub.s32 %s10, 2
      // Predicated region
      $region45: #{partial_model_forward.14} parent=43 // pred_check
        %p243 = pneg %p128
      $region46: #{partial_model_forward.14} parent=43 // pred_check_branch
        %245 = sbr.rel (%p243) target = $region48
      $region47: #{partial_model_forward.14} parent=43 // pred_region
        %p246 = scmp.lt.s32.totalorder %s16, 1
        %s247 = scalar_select %p246, %s16, 1
        %s248 = smul.addr %s247, 4
        %s249 = scalar_lea.vmem %s4, %s248
      $region48: #{partial_model_forward.14} parent=43 // pred_fallthru
        _
    $region44: #{partial_model_forward.14} parent=5 // pred_fallthru
      _
  $region6: #{partial_model_forward.14} parent=0 // loop_footer
    %s14 = sadd.s32 1, %s10
  $region7: #{partial_model_forward.14} parent=0 // loop_footer_branch
    %9 = sbr.rel target = $region3
  $region8: #{partial_model_forward.14} parent=0 // loop_exit
    _

// kernel: partial_model_forward.15
$region0: #{partial_model_forward.15}
  #allocation0 [shape = 'u32[]', space=smem, size = 0x4, offset = 0x4, fixed_abs, tag = 'smem constant byte address 0x4 - core index']
  #allocation1 [shape = 'u32[144,128]{1,0:T(1,128)}', space=vmem, size = 0x12000, scoped, tag = 'internal scratch']
  #allocation2 [shape = 'f32[8,96]{1,0:T(8,128)}', space=vmem, size = 0x1000, scoped, tag = 'scratch operand']
  #allocation3 [shape = 'bf16[8,32]{1,0:T(8,128)(2,1)}', space=vmem, size = 0x800, scoped, tag = 'scratch operand']
  %s0 = inlined_call_operand.vmem [shape: bf16[16,32], index: 0, kind: input, shape index: {}]
  %s1 = inlined_call_operand.vmem [shape: bf16[32,96], index: 1, kind: input, shape index: {}]
  %s2 = inlined_call_operand.vmem [shape: f32[1,96], index: 2, kind: input, shape index: {}]
  %s3 = inlined_call_operand.vmem [shape: f32[1,32], index: 3, kind: input, shape index: {}]
  %s4 = inlined_call_operand.vmem [shape: f32[1,32], index: 4, kind: input, shape index: {}]
  %s5 = inlined_call_operand.vmem [shape: bf16[16,96], index: 5, kind: output, shape index: {}]
  %s6 = sld [smem:[#allocation0]]
  $region65: #{partial_model_forward.15} parent=0
    _
  %s8 = ssub.s32 1, %s6
  %s9 = scalar_select 0, %s8, %s6
  loop: start=0, step=1, limit=4
  $region2: #{partial_model_forward.15} parent=0 // loop_pre_header
    _
  $region3: #{partial_model_forward.15} parent=0 // loop_header
    %s11 = sphi 0, %s15
    %p12 = scmp.ge.s32.totalorder %s11, 4
    %s18 = sphi 0, %s37
    %s19 = sphi 0, %s33
    %s20 = sphi 0, %s29
    %s21 = sphi 0, %s18
    %s22 = sphi 0, %s19
    %s23 = sphi 0, %s20
    %s24 = sphi 0, %s21
    %s25 = sphi 0, %s22
    %s26 = sphi 0, %s23
    %s40 = sphi 0, %s42
    %s43 = sphi 0, %s40
    %s44 = sphi 0, %s43
    %s60 = sphi 0, %s44
    %s68 = sphi 0, %s70
    %s71 = sphi 0, %s68
    %s72 = sphi 0, %s71
    %s88 = sphi 0, %s72
    %s94 = sphi 0, %s96
    %s97 = sphi 0, %s94
    %s98 = sphi 0, %s97
    %s114 = sphi 0, %s98
    %s118 = sphi 0, %s118
    %s120 = sphi 0, %s118
    %s121 = sphi 0, %s120
    %s135 = sphi 0, %s121
    %s139 = sphi 0, %s139
    %s141 = sphi 0, %s139
    %s142 = sphi 0, %s141
    %s156 = sphi 0, %s142
    %s164 = sphi 0, %s166
    %s167 = sphi 0, %s164
    %s168 = sphi 0, %s167
    %s184 = sphi 0, %s168
  $region4: #{partial_model_forward.15} parent=0 // loop_header_branch
    %14 = sbr.rel (%p12) target = $region8
  $region5: #{partial_model_forward.15} parent=0 // loop_body
    %s16 = ssub.s32 %s11, 1
    %s17 = ssub.s32 %s11, 2
    %s27 = sadd.s32 1, %s20
    %p28 = scmp.ge.s32.totalorder %s27, 1
    %s29 = scalar_select %p28, 0, %s27
    %s30 = sadd.s32 1, %s19
    %s31 = scalar_select %p28, %s30, %s19
    %p32 = scmp.ge.s32.totalorder %s31, 1
    %s33 = scalar_select %p32, 0, %s31
    %s34 = sadd.s32 1, %s18
    %s35 = scalar_select %p32, %s34, %s18
    %p36 = scmp.ge.s32.totalorder %s35, 2
    %s37 = scalar_select %p36, 0, %s35
    %s38 = ssub.s32 %s18, %s37
    %p39 = scmp.eq.s32.totalorder %s38, 0
    %s41 = sadd.s32 %s40, 1
    %s42 = scalar_select %p39, %s40, %s41
    %p45 = pneg %p39
    %p46 = scmp.eq.s32.totalorder %s11, 1
    %p47 = por %p45, %p46
    %p48 = scmp.ne.s32.totalorder %s40, %s43
    %p49 = scmp.eq.s32.totalorder %s11, 0
    %p50 = por %p48, %p49
    %p51 = scmp.ne.s32.totalorder %s40, %s43
    %p52 = scmp.eq.s32.totalorder %s16, 1
    %p53 = por %p51, %p52
    %p54 = scmp.ne.s32.totalorder %s43, %s44
    %p55 = scmp.eq.s32.totalorder %s16, 0
    %p56 = por %p54, %p55
    %p57 = scmp.ne.s32.totalorder %s43, %s44
    %p58 = scmp.eq.s32.totalorder %s17, 1
    %p59 = por %p57, %p58
    %p61 = scmp.ne.s32.totalorder %s44, %s60
    %p62 = scmp.eq.s32.totalorder %s17, 0
    %p63 = por %p61, %p62
    %s64 = ssub.s32 %s20, %s29
    %s65 = ssub.s32 %s19, %s33
    %s66 = sor.u32 %s64, %s65
    %p67 = scmp.eq.s32.totalorder %s66, 0
    %s69 = sadd.s32 %s68, 1
    %s70 = scalar_select %p67, %s68, %s69
    %p73 = pneg %p67
    %p74 = scmp.eq.s32.totalorder %s11, 1
    %p75 = por %p73, %p74
    %p76 = scmp.ne.s32.totalorder %s68, %s71
    %p77 = scmp.eq.s32.totalorder %s11, 0
    %p78 = por %p76, %p77
    %p79 = scmp.ne.s32.totalorder %s68, %s71
    %p80 = scmp.eq.s32.totalorder %s16, 1
    %p81 = por %p79, %p80
    %p82 = scmp.ne.s32.totalorder %s71, %s72
    %p83 = scmp.eq.s32.totalorder %s16, 0
    %p84 = por %p82, %p83
    %p85 = scmp.ne.s32.totalorder %s71, %s72
    %p86 = scmp.eq.s32.totalorder %s17, 1
    %p87 = por %p85, %p86
    %p89 = scmp.ne.s32.totalorder %s72, %s88
    %p90 = scmp.eq.s32.totalorder %s17, 0
    %p91 = por %p89, %p90
    %s92 = ssub.s32 %s19, %s33
    %p93 = scmp.eq.s32.totalorder %s92, 0
    %s95 = sadd.s32 %s94, 1
    %s96 = scalar_select %p93, %s94, %s95
    %p99 = pneg %p93
    %p100 = scmp.eq.s32.totalorder %s11, 1
    %p101 = por %p99, %p100
    %p102 = scmp.ne.s32.totalorder %s94, %s97
    %p103 = scmp.eq.s32.totalorder %s11, 0
    %p104 = por %p102, %p103
    %p105 = scmp.ne.s32.totalorder %s94, %s97
    %p106 = scmp.eq.s32.totalorder %s16, 1
    %p107 = por %p105, %p106
    %p108 = scmp.ne.s32.totalorder %s97, %s98
    %p109 = scmp.eq.s32.totalorder %s16, 0
    %p110 = por %p108, %p109
    %p111 = scmp.ne.s32.totalorder %s97, %s98
    %p112 = scmp.eq.s32.totalorder %s17, 1
    %p113 = por %p111, %p112
    %p115 = scmp.ne.s32.totalorder %s98, %s114
    %p116 = scmp.eq.s32.totalorder %s17, 0
    %p117 = por %p115, %p116
    %s119 = sadd.s32 %s118, 1
    %p122 = scmp.eq.s32.totalorder %s11, 1
    %p123 = scmp.ne.s32.totalorder %s118, %s120
    %p124 = scmp.eq.s32.totalorder %s11, 0
    %p125 = por %p123, %p124
    %p126 = scmp.ne.s32.totalorder %s118, %s120
    %p127 = scmp.eq.s32.totalorder %s16, 1
    %p128 = por %p126, %p127
    %p129 = scmp.ne.s32.totalorder %s120, %s121
    %p130 = scmp.eq.s32.totalorder %s16, 0
    %p131 = por %p129, %p130
    %p132 = scmp.ne.s32.totalorder %s120, %s121
    %p133 = scmp.eq.s32.totalorder %s17, 1
    %p134 = por %p132, %p133
    %p136 = scmp.ne.s32.totalorder %s121, %s135
    %p137 = scmp.eq.s32.totalorder %s17, 0
    %p138 = por %p136, %p137
    %s140 = sadd.s32 %s139, 1
    %p143 = scmp.eq.s32.totalorder %s11, 1
    %p144 = scmp.ne.s32.totalorder %s139, %s141
    %p145 = scmp.eq.s32.totalorder %s11, 0
    %p146 = por %p144, %p145
    %p147 = scmp.ne.s32.totalorder %s139, %s141
    %p148 = scmp.eq.s32.totalorder %s16, 1
    %p149 = por %p147, %p148
    %p150 = scmp.ne.s32.totalorder %s141, %s142
    %p151 = scmp.eq.s32.totalorder %s16, 0
    %p152 = por %p150, %p151
    %p153 = scmp.ne.s32.totalorder %s141, %s142
    %p154 = scmp.eq.s32.totalorder %s17, 1
    %p155 = por %p153, %p154
    %p157 = scmp.ne.s32.totalorder %s142, %s156
    %p158 = scmp.eq.s32.totalorder %s17, 0
    %p159 = por %p157, %p158
    %s160 = ssub.s32 %s18, %s37
    %s161 = ssub.s32 %s19, %s33
    %s162 = sor.u32 %s160, %s161
    %p163 = scmp.eq.s32.totalorder %s162, 0
    %s165 = sadd.s32 %s164, 1
    %s166 = scalar_select %p163, %s164, %s165
    %p169 = pneg %p163
    %p170 = scmp.eq.s32.totalorder %s11, 1
    %p171 = por %p169, %p170
    %p172 = scmp.ne.s32.totalorder %s164, %s167
    %p173 = scmp.eq.s32.totalorder %s11, 0
    %p174 = por %p172, %p173
    %p175 = scmp.ne.s32.totalorder %s164, %s167
    %p176 = scmp.eq.s32.totalorder %s16, 1
    %p177 = por %p175, %p176
    %p178 = scmp.ne.s32.totalorder %s167, %s168
    %p179 = scmp.eq.s32.totalorder %s16, 0
    %p180 = por %p178, %p179
    %p181 = scmp.ne.s32.totalorder %s167, %s168
    %p182 = scmp.eq.s32.totalorder %s17, 1
    %p183 = por %p181, %p182
    %p185 = scmp.ne.s32.totalorder %s168, %s184
    %p186 = scmp.eq.s32.totalorder %s17, 0
    %p187 = por %p185, %p186
    %p188 = scmp.le.s32.totalorder 1, %s11
    %p189 = scmp.lt.s32.totalorder %s11, 3
    %p190 = pnand %p188, %p189
    %p191 = pneg %p190
    // Predicated region
    $region9: #{partial_model_forward.15} parent=5 // pred_check
      _
    $region10: #{partial_model_forward.15} parent=5 // pred_check_branch
      %193 = sbr.rel (%p190) target = $region12
    $region11: #{partial_model_forward.15} parent=5 // pred_region
      %s194 = ssub.s32 %s11, 1
      // Predicated region
      $region13: #{partial_model_forward.15} parent=11 // pred_check
        %p195 = pneg %p84
      $region14: #{partial_model_forward.15} parent=11 // pred_check_branch
        %197 = sbr.rel (%p195) target = $region16
      $region15: #{partial_model_forward.15} parent=11 // pred_region
        %s198 = smul.u32 4, %s23
        %p199 = scmp.lt.s32.totalorder %s198, 3
        %s200 = scalar_select %p199, %s198, 3
        %p201 = scmp.lt.s32.totalorder %s22, 0
        %s202 = scalar_select %p201, %s22, 0
        %s203 = sadd.s32 %s202, %s200
        %s204 = smul.addr %s203, 4
        %s205 = scalar_lea.vmem %s1, %s204
        %s206 = smul.u32 4, %s23
      $region16: #{partial_model_forward.15} parent=11 // pred_fallthru
        _
      // Predicated region
      $region17: #{partial_model_forward.15} parent=11 // pred_check
        %p207 = pneg %p110
      $region18: #{partial_model_forward.15} parent=11 // pred_check_branch
        %209 = sbr.rel (%p207) target = $region20
      $region19: #{partial_model_forward.15} parent=11 // pred_region
        %p210 = scmp.lt.s32.totalorder %s22, 0
        %s211 = scalar_select %p210, %s22, 0
        %s212 = scalar_lea.vmem %s2, %s211
      $region20: #{partial_model_forward.15} parent=11 // pred_fallthru
        _
      // Predicated region
      $region21: #{partial_model_forward.15} parent=11 // pred_check
        %p213 = pneg %p131
      $region22: #{partial_model_forward.15} parent=11 // pred_check_branch
        %215 = sbr.rel (%p213) target = $region24
      $region23: #{partial_model_forward.15} parent=11 // pred_region
        _
      $region24: #{partial_model_forward.15} parent=11 // pred_fallthru
        _
      // Predicated region
      $region25: #{partial_model_forward.15} parent=11 // pred_check
        %p216 = pneg %p152
      $region26: #{partial_model_forward.15} parent=11 // pred_check_branch
        %218 = sbr.rel (%p216) target = $region28
      $region27: #{partial_model_forward.15} parent=11 // pred_region
        _
      $region28: #{partial_model_forward.15} parent=11 // pred_fallthru
        _
    $region12: #{partial_model_forward.15} parent=5 // pred_fallthru
      _
    %p219 = scmp.lt.s32.totalorder %s11, 2
    // Predicated region
    $region29: #{partial_model_forward.15} parent=5 // pred_check
      %p220 = pneg %p219
    $region30: #{partial_model_forward.15} parent=5 // pred_check_branch
      %222 = sbr.rel (%p220) target = $region32
    $region31: #{partial_model_forward.15} parent=5 // pred_region
      // Predicated region
      $region33: #{partial_model_forward.15} parent=31 // pred_check
        %p223 = pneg %p50
      $region34: #{partial_model_forward.15} parent=31 // pred_check_branch
        %225 = sbr.rel (%p223) target = $region36
      $region35: #{partial_model_forward.15} parent=31 // pred_region
        %p226 = scmp.lt.s32.totalorder %s18, 1
        %s227 = scalar_select %p226, %s18, 1
        %s228 = smul.addr %s227, 4
        %s229 = scalar_lea.vmem %s0, %s228
      $region36: #{partial_model_forward.15} parent=31 // pred_fallthru
        _
    $region32: #{partial_model_forward.15} parent=5 // pred_fallthru
      _
    %p230 = scmp.le.s32.totalorder 1, %s11
    %p231 = scmp.lt.s32.totalorder %s11, 3
    %p232 = pnand %p230, %p231
    %p233 = pneg %p232
    // Predicated region
    $region37: #{partial_model_forward.15} parent=5 // pred_check
      _
    $region38: #{partial_model_forward.15} parent=5 // pred_check_branch
      %235 = sbr.rel (%p232) target = $region40
    $region39: #{partial_model_forward.15} parent=5 // pred_region
      %s236 = ssub.s32 %s11, 1
      %p237 = scmp.lt.s32.totalorder %s21, 1
      %s238 = scalar_select %p237, %s21, 1
      %s239 = smul.addr %s238, 4
      %s240 = scalar_lea.vmem %s0, %s239
      %p241 = pneg %p56
      %p242 = pneg %p53
      %s243 = smul.u32 4, %s23
      %p244 = scmp.lt.s32.totalorder %s243, 3
      %s245 = scalar_select %p244, %s243, 3
      %p246 = scmp.lt.s32.totalorder %s22, 0
      %s247 = scalar_select %p246, %s22, 0
      %s248 = sadd.s32 %s247, %s245
      %s249 = smul.addr %s248, 4
      %s250 = scalar_lea.vmem %s1, %s249
      %p251 = pneg %p84
      %p252 = pneg %p81
      %p253 = scmp.lt.s32.totalorder %s22, 0
      %s254 = scalar_select %p253, %s22, 0
      %s255 = scalar_lea.vmem %s2, %s254
      %p256 = pneg %p110
      %p257 = pneg %p107
      %p258 = pneg %p131
      %p259 = pneg %p128
      %p260 = pneg %p152
      %p261 = pneg %p149
      %p262 = pneg %p180
      %p263 = pneg %p177
      %p264 = scmp.lt.s32.totalorder %s21, 1
      %s265 = scalar_select %p264, %s21, 1
      %p266 = scmp.lt.s32.totalorder %s22, 0
      %s267 = scalar_select %p266, %s22, 0
      %s268 = sadd.s32 %s267, %s265
      %s269 = smul.addr %s268, 4
      %s270 = scalar_lea.vmem %s5, %s269
      %p271 = scmp.lt.s32.totalorder %s21, 1
      %s272 = scalar_select %p271, %s21, 1
      %s273 = smul.addr %s272, 4
      %s274 = scalar_lea.vmem %s0, %s273
      %s275 = smul.u32 4, %s23
      %p276 = scmp.lt.s32.totalorder %s275, 3
      %s277 = scalar_select %p276, %s275, 3
      %p278 = scmp.lt.s32.totalorder %s22, 0
      %s279 = scalar_select %p278, %s22, 0
      %s280 = sadd.s32 %s279, %s277
      %s281 = smul.addr %s280, 4
      %s282 = scalar_lea.vmem %s1, %s281
      %s283 = smul.u32 4, %s23
      %p284 = scmp.lt.s32.totalorder %s22, 0
      %s285 = scalar_select %p284, %s22, 0
      %s286 = scalar_lea.vmem %s2, %s285
      %p287 = scmp.lt.s32.totalorder %s21, 1
      %s288 = scalar_select %p287, %s21, 1
      %p289 = scmp.lt.s32.totalorder %s22, 0
      %s290 = scalar_select %p289, %s22, 0
      %s291 = sadd.s32 %s290, %s288
      %s292 = smul.addr %s291, 4
      %s293 = scalar_lea.vmem %s5, %s292
      %p295 = scmp.eq.s32.totalorder %s23, 0
      // Predicated region
      $region41: #{partial_model_forward.15} parent=39 // pred_check
        %p296 = pneg %p295
      $region42: #{partial_model_forward.15} parent=39 // pred_check_branch
        %298 = sbr.rel (%p296) target = $region44
      $region43: #{partial_model_forward.15} parent=39 // pred_region
        %vm299 = vcmask 785408
        %300 = vst.msk [vmem:[#allocation2] sm:$0xff] %vm299, 0.0
      $region44: #{partial_model_forward.15} parent=39 // pred_fallthru
        _
      %p301 = scmp.eq.s32.totalorder %s22, 0
      // Predicated region
      $region45: #{partial_model_forward.15} parent=39 // pred_check
        %p302 = pneg %p301
      $region46: #{partial_model_forward.15} parent=39 // pred_check_branch
        %304 = sbr.rel (%p302) target = $region48
      $region47: #{partial_model_forward.15} parent=39 // pred_region
        %v305 = vld [vmem:[%s274] sm:$0xf]
        %v306 = vunpack.c.l.bf16 %v305
        %vm307 = vcmask 261120
        %v308 = vsel %vm307, %v306, 0.0
        %309 = vadd.xlane.f32.xlu0 %v308
        %v310 = vpop.xlane.xlu0 %309
        %v311 = vrcp.pop 32.0
        %v312 = vmul.f32 %v310, %v311
        %v313 = vsub.f32 %v306, %v312
        %v314 = vmul.f32 %v313, %v313
        %v315 = vsel %vm307, %v314, 0.0
        %316 = vadd.xlane.f32.xlu0 %v315
        %v317 = vpop.xlane.xlu0 %316
        %v318 = vmul.f32 %v317, %v311
        %v319 = vadd.f32 %v318, 1e-05
        %v320 = vrsqrt.pop %v319
        %v321 = vmul.f32 %v313, %v320
        %v322 = vld [vmem:[%s3] sm:$0x1]
        %v324 = vlaneseq
        %v325 = vshrl.u32 %v324, 7
        %v326 = vsub.s32 0, %v325
        %v327 = vrot.slane %v322, %v326
        %v329 = vmul.f32 %v321, %v327
        %v330 = vld [vmem:[%s4] sm:$0x1]
        %v332 = vlaneseq
        %v333 = vshrl.u32 %v332, 7
        %v334 = vsub.s32 0, %v333
        %v335 = vrot.slane %v330, %v334
        %v337 = vadd.f32 %v329, %v335
        %v338 = vpack.c.bf16 %v337, %v337
        %vm339 = vcmask 257024
        %340 = vst.msk [vmem:[#allocation3] sm:$0xf] %vm339, %v338
      $region48: #{partial_model_forward.15} parent=39 // pred_fallthru
        _
      %v341 = vld [vmem:[#allocation3] sm:$0xf]
      %v342 = vld [vmem:[#allocation2] sm:$0xff]
      %v343 = vld [vmem:[%s282] sm:$0xf]
      %v344 = vld [vmem:[%s282 + $0x4] sm:$0xf]
      %v345 = vld [vmem:[%s282 + $0x8] sm:$0xf]
      %v346 = vld [vmem:[%s282 + $0xc] sm:$0xf]
      %v351 = vunpack.c.l.b16 %v343
      %v352 = vunpack.c.l.b16 %v344
      %v353 = vunpack.c.l.b16 %v345
      %v354 = vunpack.c.l.b16 %v346
      %v355 = vpack.c.b16 %v352, %v351
      %v356 = vpack.c.b16 %v354, %v353
      %vm359 = vcmask 261120
      %v361 = vsel %vm359, %v341, 0
      %363 = vmatprep.subr.bf16.mxu0 0
      %364 = vmatpush1.bf16.msra.mxu0 %v355
      %365 = vmatprep.subr.bf16.mxu0 0
      %366 = vmatpush1.bf16.msra.mxu0 %v356
      %367 = vmatprep.subr.bf16.mxu0 0
      %368 = vmatpush1.bf16.msra.mxu0 0
      %369 = vmatprep.subr.bf16.mxu0 0
      %370 = vmatpush1.bf16.msra.mxu0 0
      %371 = vmatprep.subr.bf16.mxu0 0
      %372 = vmatpush1.bf16.msra.mxu0 0
      %373 = vmatprep.subr.bf16.mxu0 0
      %374 = vmatpush1.bf16.msra.mxu0 0
      %375 = vmatprep.subr.bf16.mxu0 0
      %376 = vmatpush1.bf16.msra.mxu0 0
      %377 = vmatprep.subr.bf16.mxu0 0
      %378 = vmatpush1.bf16.msra.mxu0 0
      %379 = vmatprep.subr.bf16.mxu0 0
      %380 = vmatpush1.bf16.msra.mxu0 0
      %381 = vmatprep.subr.bf16.mxu0 0
      %382 = vmatpush1.bf16.msra.mxu0 0
      %383 = vmatprep.subr.bf16.mxu0 0
      %384 = vmatpush1.bf16.msra.mxu0 0
      %385 = vmatprep.subr.bf16.mxu0 0
      %386 = vmatpush1.bf16.msra.mxu0 0
      %387 = vmatprep.subr.bf16.mxu0 0
      %388 = vmatpush1.bf16.msra.mxu0 0
      %389 = vmatprep.subr.bf16.mxu0 0
      %390 = vmatpush1.bf16.msra.mxu0 0
      %391 = vmatprep.subr.bf16.mxu0 0
      %392 = vmatpush1.bf16.msra.mxu0 0
      %393 = vmatprep.subr.bf16.mxu0 0
      %394 = vmatpush1.bf16.msra.mxu0 0
      %395 = vmatprep.mubr.bf16.mxu0 0
      %396 = vmatmul.mubr.bf16.gmra.mrb[0].mxu0 %v361
      %v397 = vpop.f32.mrb[0].mxu0
      %v398 = vadd.f32 0.0, %v397
      %v399 = vpop.f32.mrb[0].mxu0
      %v400 = vpop.f32.mrb[0].mxu0
      %v401 = vpop.f32.mrb[0].mxu0
      %402 = vdwg.mxu0
      %v403 = vadd.f32 %v342, %v398
      %vm404 = vcmask 785408
      %405 = vst.msk [vmem:[#allocation2] sm:$0xff] %vm404, %v403
      // Predicated region
      $region49: #{partial_model_forward.15} parent=39 // pred_check
        %p406 = pneg %p295
      $region50: #{partial_model_forward.15} parent=39 // pred_check_branch
        %408 = sbr.rel (%p406) target = $region52
      $region51: #{partial_model_forward.15} parent=39 // pred_region
        %v409 = vld [vmem:[#allocation2] sm:$0xff]
        %v410 = vld [vmem:[%s286] sm:$0x1]
        %v412 = vlaneseq
        %v413 = vshrl.u32 %v412, 7
        %v414 = vsub.s32 0, %v413
        %v415 = vrot.slane %v410, %v414
        %v417 = vadd.f32 %v409, %v415
        %v418 = vpack.c.bf16 %v417, %v417
        %vm419 = vcmask 781312
        %420 = vst.msk [vmem:[%s293] sm:$0xf] %vm419, %v418
      $region52: #{partial_model_forward.15} parent=39 // pred_fallthru
        _
      %p421 = scmp.lt.s32.totalorder %s21, 1
      %s422 = scalar_select %p421, %s21, 1
      %p423 = scmp.lt.s32.totalorder %s22, 0
      %s424 = scalar_select %p423, %s22, 0
      %s425 = sadd.s32 %s424, %s422
      %s426 = smul.addr %s425, 4
      %s427 = scalar_lea.vmem %s5, %s426
      // Predicated region
      $region53: #{partial_model_forward.15} parent=39 // pred_check
        %p428 = pneg %p177
      $region54: #{partial_model_forward.15} parent=39 // pred_check_branch
        %430 = sbr.rel (%p428) target = $region56
      $region55: #{partial_model_forward.15} parent=39 // pred_region
        _
      $region56: #{partial_model_forward.15} parent=39 // pred_fallthru
        _
    $region40: #{partial_model_forward.15} parent=5 // pred_fallthru
      _
    %p431 = scmp.le.s32.totalorder 2, %s11
    // Predicated region
    $region57: #{partial_model_forward.15} parent=5 // pred_check
      %p432 = pneg %p431
    $region58: #{partial_model_forward.15} parent=5 // pred_check_branch
      %434 = sbr.rel (%p432) target = $region60
    $region59: #{partial_model_forward.15} parent=5 // pred_region
      %s435 = ssub.s32 %s11, 2
      // Predicated region
      $region61: #{partial_model_forward.15} parent=59 // pred_check
        %p436 = pneg %p183
      $region62: #{partial_model_forward.15} parent=59 // pred_check_branch
        %438 = sbr.rel (%p436) target = $region64
      $region63: #{partial_model_forward.15} parent=59 // pred_region
        %p439 = scmp.lt.s32.totalorder %s24, 1
        %s440 = scalar_select %p439, %s24, 1
        %p441 = scmp.lt.s32.totalorder %s25, 0
        %s442 = scalar_select %p441, %s25, 0
        %s443 = sadd.s32 %s442, %s440
        %s444 = smul.addr %s443, 4
        %s445 = scalar_lea.vmem %s5, %s444
      $region64: #{partial_model_forward.15} parent=59 // pred_fallthru
        _
    $region60: #{partial_model_forward.15} parent=5 // pred_fallthru
      _
  $region6: #{partial_model_forward.15} parent=0 // loop_footer
    %s15 = sadd.s32 1, %s11
  $region7: #{partial_model_forward.15} parent=0 // loop_footer_branch
    %10 = sbr.rel target = $region3
  $region8: #{partial_model_forward.15} parent=0 // loop_exit
    _

// kernel: partial_model_forward.13
$region0: #{partial_model_forward.13}
  #allocation0 [shape = 'u32[]', space=smem, size = 0x4, offset = 0x4, fixed_abs, tag = 'smem constant byte address 0x4 - core index']
  #allocation1 [shape = 'u32[144,128]{1,0:T(1,128)}', space=vmem, size = 0x12000, scoped, tag = 'internal scratch']
  #allocation2 [shape = 'f32[8,32]{1,0:T(8,128)}', space=vmem, size = 0x1000, scoped, tag = 'scratch operand']
  %s0 = inlined_call_operand.vmem [shape: bf16[8,192], index: 0, kind: input, shape index: {}]
  %s1 = inlined_call_operand.vmem [shape: bf16[192,32], index: 1, kind: input, shape index: {}]
  %s2 = inlined_call_operand.vmem [shape: f32[1,32], index: 2, kind: input, shape index: {}]
  %s3 = inlined_call_operand.vmem [shape: bf16[8,32], index: 3, kind: output, shape index: {}]
  %s4 = sld [smem:[#allocation0]]
  $region30: #{partial_model_forward.13} parent=0
    _
  %s6 = ssub.s32 1, %s4
  %s7 = scalar_select 0, %s6, %s4
  // Predicated region
  $region2: #{partial_model_forward.13} parent=0 // pred_check
    _
  $region3: #{partial_model_forward.13} parent=0 // pred_check_branch
    %9 = sbr.rel (0) target = $region5
  $region4: #{partial_model_forward.13} parent=0 // pred_region
    _
  $region5: #{partial_model_forward.13} parent=0 // pred_fallthru
    _
  // Predicated region
  $region6: #{partial_model_forward.13} parent=0 // pred_check
    _
  $region7: #{partial_model_forward.13} parent=0 // pred_check_branch
    %11 = sbr.rel (0) target = $region9
  $region8: #{partial_model_forward.13} parent=0 // pred_region
    _
  $region9: #{partial_model_forward.13} parent=0 // pred_fallthru
    _
  // Predicated region
  $region10: #{partial_model_forward.13} parent=0 // pred_check
    _
  $region11: #{partial_model_forward.13} parent=0 // pred_check_branch
    %13 = sbr.rel (0) target = $region13
  $region12: #{partial_model_forward.13} parent=0 // pred_region
    _
  $region13: #{partial_model_forward.13} parent=0 // pred_fallthru
    _
  %p15 = scmp.eq.s32.totalorder 0, 0
  // Predicated region
  $region14: #{partial_model_forward.13} parent=0 // pred_check
    %p16 = pneg %p15
  $region15: #{partial_model_forward.13} parent=0 // pred_check_branch
    %18 = sbr.rel (%p16) target = $region17
  $region16: #{partial_model_forward.13} parent=0 // pred_region
    %vm19 = vcmask 261120
    %20 = vst.msk [vmem:[#allocation2] sm:$0xff] %vm19, 0.0
  $region17: #{partial_model_forward.13} parent=0 // pred_fallthru
    _
  %v21 = vld [vmem:[%s0] sm:$0xff]
  %v22 = vld [vmem:[#allocation2] sm:$0xff]
  %v23 = vld [vmem:[%s1] sm:$0xf]
  %v24 = vld [vmem:[%s1 + $0x4] sm:$0xf]
  %v25 = vld [vmem:[%s1 + $0x8] sm:$0xf]
  %v26 = vld [vmem:[%s1 + $0xc] sm:$0xf]
  %v27 = vld [vmem:[%s1 + $0x10] sm:$0xf]
  %v28 = vld [vmem:[%s1 + $0x14] sm:$0xf]
  %v29 = vld [vmem:[%s1 + $0x18] sm:$0xf]
  %v30 = vld [vmem:[%s1 + $0x1c] sm:$0xf]
  %v31 = vld [vmem:[%s1 + $0x20] sm:$0xf]
  %v32 = vld [vmem:[%s1 + $0x24] sm:$0xf]
  %v33 = vld [vmem:[%s1 + $0x28] sm:$0xf]
  %v34 = vld [vmem:[%s1 + $0x2c] sm:$0xf]
  %v35 = vld [vmem:[%s1 + $0x30] sm:$0xf]
  %v36 = vld [vmem:[%s1 + $0x34] sm:$0xf]
  %v37 = vld [vmem:[%s1 + $0x38] sm:$0xf]
  %v38 = vld [vmem:[%s1 + $0x3c] sm:$0xf]
  %v39 = vld [vmem:[%s1 + $0x40] sm:$0xf]
  %v40 = vld [vmem:[%s1 + $0x44] sm:$0xf]
  %v41 = vld [vmem:[%s1 + $0x48] sm:$0xf]
  %v42 = vld [vmem:[%s1 + $0x4c] sm:$0xf]
  %v43 = vld [vmem:[%s1 + $0x50] sm:$0xf]
  %v44 = vld [vmem:[%s1 + $0x54] sm:$0xf]
  %v45 = vld [vmem:[%s1 + $0x58] sm:$0xf]
  %v46 = vld [vmem:[%s1 + $0x5c] sm:$0xf]
  %v48 = vunpack.c.l.b16 %v21
  %v49 = vunpack.c.h.b16 %v21
  %v50 = vpack.c.b16 %v48, %v48
  %v51 = vpack.c.b16 %v49, %v49
  %v77 = vunpack.c.l.b16 %v23
  %v78 = vunpack.c.l.b16 %v24
  %v79 = vunpack.c.l.b16 %v25
  %v80 = vunpack.c.l.b16 %v26
  %v81 = vunpack.c.l.b16 %v27
  %v82 = vunpack.c.l.b16 %v28
  %v83 = vunpack.c.l.b16 %v29
  %v84 = vunpack.c.l.b16 %v30
  %v85 = vunpack.c.l.b16 %v31
  %v86 = vunpack.c.l.b16 %v32
  %v87 = vunpack.c.l.b16 %v33
  %v88 = vunpack.c.l.b16 %v34
  %v89 = vunpack.c.l.b16 %v35
  %v90 = vunpack.c.l.b16 %v36
  %v91 = vunpack.c.l.b16 %v37
  %v92 = vunpack.c.l.b16 %v38
  %v93 = vunpack.c.l.b16 %v39
  %v94 = vunpack.c.l.b16 %v40
  %v95 = vunpack.c.l.b16 %v41
  %v96 = vunpack.c.l.b16 %v42
  %v97 = vunpack.c.l.b16 %v43
  %v98 = vunpack.c.l.b16 %v44
  %v99 = vunpack.c.l.b16 %v45
  %v100 = vunpack.c.l.b16 %v46
  %v101 = vpack.c.b16 %v78, %v77
  %v102 = vpack.c.b16 %v80, %v79
  %v103 = vpack.c.b16 %v82, %v81
  %v104 = vpack.c.b16 %v84, %v83
  %v105 = vpack.c.b16 %v86, %v85
  %v106 = vpack.c.b16 %v88, %v87
  %v107 = vpack.c.b16 %v90, %v89
  %v108 = vpack.c.b16 %v92, %v91
  %v109 = vpack.c.b16 %v94, %v93
  %v110 = vpack.c.b16 %v96, %v95
  %v111 = vpack.c.b16 %v98, %v97
  %v112 = vpack.c.b16 %v100, %v99
  %vm125 = vcmask 523264
  %v127 = vsel %vm125, %v51, 0
  %129 = vmatprep.subr.bf16.mxu0 0
  %130 = vmatpush1.bf16.msra.mxu0 %v101
  %131 = vmatprep.subr.bf16.mxu0 0
  %132 = vmatpush1.bf16.msra.mxu0 %v102
  %133 = vmatprep.subr.bf16.mxu0 0
  %134 = vmatpush1.bf16.msra.mxu0 %v103
  %135 = vmatprep.subr.bf16.mxu0 0
  %136 = vmatpush1.bf16.msra.mxu0 %v104
  %137 = vmatprep.subr.bf16.mxu0 0
  %138 = vmatpush1.bf16.msra.mxu0 %v105
  %139 = vmatprep.subr.bf16.mxu0 0
  %140 = vmatpush1.bf16.msra.mxu0 %v106
  %141 = vmatprep.subr.bf16.mxu0 0
  %142 = vmatpush1.bf16.msra.mxu0 %v107
  %143 = vmatprep.subr.bf16.mxu0 0
  %144 = vmatpush1.bf16.msra.mxu0 %v108
  %145 = vmatprep.subr.bf16.mxu0 0
  %146 = vmatpush1.bf16.msra.mxu0 %v109
  %147 = vmatprep.subr.bf16.mxu0 0
  %148 = vmatpush1.bf16.msra.mxu0 %v110
  %149 = vmatprep.subr.bf16.mxu0 0
  %150 = vmatpush1.bf16.msra.mxu0 %v111
  %151 = vmatprep.subr.bf16.mxu0 0
  %152 = vmatpush1.bf16.msra.mxu0 %v112
  %153 = vmatprep.subr.bf16.mxu0 0
  %154 = vmatpush1.bf16.msra.mxu0 0
  %155 = vmatprep.subr.bf16.mxu0 0
  %156 = vmatpush1.bf16.msra.mxu0 0
  %157 = vmatprep.subr.bf16.mxu0 0
  %158 = vmatpush1.bf16.msra.mxu0 0
  %159 = vmatprep.subr.bf16.mxu0 0
  %160 = vmatpush1.bf16.msra.mxu0 0
  %161 = vmatprep.mubr.bf16.mxu0 %v127
  %162 = vmatmul.mubr.bf16.gmra.mrb[0].mxu0 %v50
  %v163 = vpop.f32.mrb[0].mxu0
  %v164 = vadd.f32 0.0, %v163
  %v165 = vpop.f32.mrb[0].mxu0
  %v166 = vpop.f32.mrb[0].mxu0
  %v167 = vpop.f32.mrb[0].mxu0
  %168 = vdwg.mxu0
  %v169 = vadd.f32 %v22, %v164
  %vm170 = vcmask 261120
  %171 = vst.msk [vmem:[#allocation2] sm:$0xff] %vm170, %v169
  // Predicated region
  $region18: #{partial_model_forward.13} parent=0 // pred_check
    %p172 = pneg %p15
  $region19: #{partial_model_forward.13} parent=0 // pred_check_branch
    %174 = sbr.rel (%p172) target = $region21
  $region20: #{partial_model_forward.13} parent=0 // pred_region
    %v175 = vld [vmem:[#allocation2] sm:$0xff]
    %v176 = vld [vmem:[%s2] sm:$0x1]
    %v178 = vlaneseq
    %v179 = vshrl.u32 %v178, 7
    %v180 = vsub.s32 0, %v179
    %v181 = vrot.slane %v176, %v180
    %v183 = vadd.f32 %v175, %v181
    %v184 = vpack.c.bf16 %v183, %v183
    %vm185 = vcmask 257024
    %186 = vst.msk [vmem:[%s3] sm:$0xf] %vm185, %v184
  $region21: #{partial_model_forward.13} parent=0 // pred_fallthru
    _
  // Predicated region
  $region22: #{partial_model_forward.13} parent=0 // pred_check
    _
  $region23: #{partial_model_forward.13} parent=0 // pred_check_branch
    %188 = sbr.rel (0) target = $region25
  $region24: #{partial_model_forward.13} parent=0 // pred_region
    _
  $region25: #{partial_model_forward.13} parent=0 // pred_fallthru
    _
  // Predicated region
  $region26: #{partial_model_forward.13} parent=0 // pred_check
    _
  $region27: #{partial_model_forward.13} parent=0 // pred_check_branch
    %190 = sbr.rel (0) target = $region29
  $region28: #{partial_model_forward.13} parent=0 // pred_region
    _
  $region29: #{partial_model_forward.13} parent=0 // pred_fallthru
    _

// kernel: partial_model_forward.16
$region0: #{partial_model_forward.16}
  #allocation0 [shape = 'u32[]', space=smem, size = 0x4, offset = 0x4, fixed_abs, tag = 'smem constant byte address 0x4 - core index']
  #allocation1 [shape = 'u32[144,128]{1,0:T(1,128)}', space=vmem, size = 0x12000, scoped, tag = 'internal scratch']
  %s0 = inlined_call_operand.vmem [shape: bf16[2,8,96], index: 0, kind: input, shape index: {}]
  %s1 = inlined_call_operand.vmem [shape: bf16[2,8,32], index: 1, kind: output, shape index: {}]
  %s2 = sld [smem:[#allocation0]]
  $region37: #{partial_model_forward.16} parent=0
    _
  %s4 = ssub.s32 1, %s2
  %s5 = scalar_select 0, %s4, %s2
  loop: start=0, step=1, limit=4
  $region2: #{partial_model_forward.16} parent=0 // loop_pre_header
    _
  $region3: #{partial_model_forward.16} parent=0 // loop_header
    %s7 = sphi 0, %s11
    %p8 = scmp.ge.s32.totalorder %s7, 4
    %s17 = sphi 0, %s19
    %s20 = sphi 0, %s17
    %s21 = sphi 0, %s20
    %s37 = sphi 0, %s21
    %s43 = sphi 0, %s45
    %s46 = sphi 0, %s43
    %s47 = sphi 0, %s46
    %s63 = sphi 0, %s47
  $region4: #{partial_model_forward.16} parent=0 // loop_header_branch
    %10 = sbr.rel (%p8) target = $region8
  $region5: #{partial_model_forward.16} parent=0 // loop_body
    %s12 = ssub.s32 %s7, 1
    %s13 = ssub.s32 %s7, 2
    %s14 = sadd.s32 %s7, 1
    %s15 = ssub.s32 %s7, %s14
    %p16 = scmp.eq.s32.totalorder %s15, 0
    %s18 = sadd.s32 %s17, 1
    %s19 = scalar_select %p16, %s17, %s18
    %p22 = pneg %p16
    %p23 = scmp.eq.s32.totalorder %s7, 1
    %p24 = por %p22, %p23
    %p25 = scmp.ne.s32.totalorder %s17, %s20
    %p26 = scmp.eq.s32.totalorder %s7, 0
    %p27 = por %p25, %p26
    %p28 = scmp.ne.s32.totalorder %s17, %s20
    %p29 = scmp.eq.s32.totalorder %s12, 1
    %p30 = por %p28, %p29
    %p31 = scmp.ne.s32.totalorder %s20, %s21
    %p32 = scmp.eq.s32.totalorder %s12, 0
    %p33 = por %p31, %p32
    %p34 = scmp.ne.s32.totalorder %s20, %s21
    %p35 = scmp.eq.s32.totalorder %s13, 1
    %p36 = por %p34, %p35
    %p38 = scmp.ne.s32.totalorder %s21, %s37
    %p39 = scmp.eq.s32.totalorder %s13, 0
    %p40 = por %p38, %p39
    %s41 = ssub.s32 %s7, %s14
    %p42 = scmp.eq.s32.totalorder %s41, 0
    %s44 = sadd.s32 %s43, 1
    %s45 = scalar_select %p42, %s43, %s44
    %p48 = pneg %p42
    %p49 = scmp.eq.s32.totalorder %s7, 1
    %p50 = por %p48, %p49
    %p51 = scmp.ne.s32.totalorder %s43, %s46
    %p52 = scmp.eq.s32.totalorder %s7, 0
    %p53 = por %p51, %p52
    %p54 = scmp.ne.s32.totalorder %s43, %s46
    %p55 = scmp.eq.s32.totalorder %s12, 1
    %p56 = por %p54, %p55
    %p57 = scmp.ne.s32.totalorder %s46, %s47
    %p58 = scmp.eq.s32.totalorder %s12, 0
    %p59 = por %p57, %p58
    %p60 = scmp.ne.s32.totalorder %s46, %s47
    %p61 = scmp.eq.s32.totalorder %s13, 1
    %p62 = por %p60, %p61
    %p64 = scmp.ne.s32.totalorder %s47, %s63
    %p65 = scmp.eq.s32.totalorder %s13, 0
    %p66 = por %p64, %p65
    %p67 = scmp.le.s32.totalorder 1, %s7
    %p68 = scmp.lt.s32.totalorder %s7, 3
    %p69 = pnand %p67, %p68
    %p70 = pneg %p69
    // Predicated region
    $region9: #{partial_model_forward.16} parent=5 // pred_check
      _
    $region10: #{partial_model_forward.16} parent=5 // pred_check_branch
      %72 = sbr.rel (%p69) target = $region12
    $region11: #{partial_model_forward.16} parent=5 // pred_region
      %s73 = ssub.s32 %s7, 1
    $region12: #{partial_model_forward.16} parent=5 // pred_fallthru
      _
    %p74 = scmp.lt.s32.totalorder %s7, 2
    // Predicated region
    $region13: #{partial_model_forward.16} parent=5 // pred_check
      %p75 = pneg %p74
    $region14: #{partial_model_forward.16} parent=5 // pred_check_branch
      %77 = sbr.rel (%p75) target = $region16
    $region15: #{partial_model_forward.16} parent=5 // pred_region
      // Predicated region
      $region17: #{partial_model_forward.16} parent=15 // pred_check
        %p78 = pneg %p27
      $region18: #{partial_model_forward.16} parent=15 // pred_check_branch
        %80 = sbr.rel (%p78) target = $region20
      $region19: #{partial_model_forward.16} parent=15 // pred_region
        %p81 = scmp.lt.s32.totalorder %s7, 1
        %s82 = scalar_select %p81, %s7, 1
        %s83 = smul.addr %s82, 4
        %s84 = scalar_lea.vmem %s0, %s83
      $region20: #{partial_model_forward.16} parent=15 // pred_fallthru
        _
    $region16: #{partial_model_forward.16} parent=5 // pred_fallthru
      _
    %p85 = scmp.le.s32.totalorder 1, %s7
    %p86 = scmp.lt.s32.totalorder %s7, 3
    %p87 = pnand %p85, %p86
    %p88 = pneg %p87
    // Predicated region
    $region21: #{partial_model_forward.16} parent=5 // pred_check
      _
    $region22: #{partial_model_forward.16} parent=5 // pred_check_branch
      %90 = sbr.rel (%p87) target = $region24
    $region23: #{partial_model_forward.16} parent=5 // pred_region
      %s91 = ssub.s32 %s7, 1
      %p92 = scmp.lt.s32.totalorder %s12, 1
      %s93 = scalar_select %p92, %s12, 1
      %s94 = smul.addr %s93, 4
      %s95 = scalar_lea.vmem %s0, %s94
      %p96 = pneg %p33
      %p97 = pneg %p30
      %p98 = pneg %p59
      %p99 = pneg %p56
      %p100 = scmp.lt.s32.totalorder %s12, 1
      %s101 = scalar_select %p100, %s12, 1
      %s102 = smul.addr %s101, 4
      %s103 = scalar_lea.vmem %s1, %s102
      %p104 = scmp.lt.s32.totalorder %s12, 1
      %s105 = scalar_select %p104, %s12, 1
      %s106 = smul.addr %s105, 4
      %s107 = scalar_lea.vmem %s0, %s106
      %p108 = scmp.lt.s32.totalorder %s12, 1
      %s109 = scalar_select %p108, %s12, 1
      %s110 = smul.addr %s109, 4
      %s111 = scalar_lea.vmem %s1, %s110
      %v113 = vld [vmem:[%s107] sm:$0xf]
      %v114 = vlaneseq
      %v115 = vand.u32 %v114, 127
      %vm116 = vcmp.lt.s32.totalorder %v115, 5
      %v118 = vunpack.c.l.b16 %v113
      %v119 = vpack.c.b16 %v118, %v118
      %120 = vrot.lane.b32.xlu0 %v119, 96
      %v121 = vpop.permute.xlu0 %120
      %vm122 = vcmask 64512
      %v124 = vsel %vm122, %v113, 0
      %v127 = vsel %vm122, %v121, 0
      %129 = vmatprep.subr.bf16.mxu0 0
      %130 = vmatpush1.bf16.xpose.msra.mxu0 %v127
      %131 = vmatprep.subr.bf16.mxu0 0
      %132 = vmatpush1.bf16.xpose.msra.mxu0 0
      %133 = vmatprep.subr.bf16.mxu0 0
      %134 = vmatpush1.bf16.xpose.msra.mxu0 0
      %135 = vmatprep.subr.bf16.mxu0 0
      %136 = vmatpush1.bf16.xpose.msra.mxu0 0
      %137 = vmatprep.subr.bf16.mxu0 0
      %138 = vmatpush1.bf16.xpose.msra.mxu0 0
      %139 = vmatprep.subr.bf16.mxu0 0
      %140 = vmatpush1.bf16.xpose.msra.mxu0 0
      %141 = vmatprep.subr.bf16.mxu0 0
      %142 = vmatpush1.bf16.xpose.msra.mxu0 0
      %143 = vmatprep.subr.bf16.mxu0 0
      %144 = vmatpush1.bf16.xpose.msra.mxu0 0
      %145 = vmatprep.subr.bf16.mxu0 0
      %146 = vmatpush1.bf16.xpose.msra.mxu0 0
      %147 = vmatprep.subr.bf16.mxu0 0
      %148 = vmatpush1.bf16.xpose.msra.mxu0 0
      %149 = vmatprep.subr.bf16.mxu0 0
      %150 = vmatpush1.bf16.xpose.msra.mxu0 0
      %151 = vmatprep.subr.bf16.mxu0 0
      %152 = vmatpush1.bf16.xpose.msra.mxu0 0
      %153 = vmatprep.subr.bf16.mxu0 0
      %154 = vmatpush1.bf16.xpose.msra.mxu0 0
      %155 = vmatprep.subr.bf16.mxu0 0
      %156 = vmatpush1.bf16.xpose.msra.mxu0 0
      %157 = vmatprep.subr.bf16.mxu0 0
      %158 = vmatpush1.bf16.xpose.msra.mxu0 0
      %159 = vmatprep.subr.bf16.mxu0 0
      %160 = vmatpush1.bf16.xpose.msra.mxu0 0
      %161 = vmatprep.mubr.bf16.mxu0 0
      %162 = vmatmul.mubr.bf16.gmra.mrb[0].mxu0 %v124
      %v163 = vpop.f32.mrb[0].mxu0
      %v164 = vadd.f32 0.0, %v163
      %v165 = vpop.f32.mrb[0].mxu0
      %v166 = vpop.f32.mrb[0].mxu0
      %v167 = vpop.f32.mrb[0].mxu0
      %168 = vdwg.mxu0
      %v169 = vmul.f32 %v164, 0.35355338
      %v170 = vsel %vm116, %v169, -1e+30
      %v171 = vsel %vm122, %v170, -inf
      %172 = vmax.xlane.f32.xlu0 %v171
      %v173 = vpop.xlane.xlu0 %172
      %v174 = vsub.f32 %v170, %v173
      %v175 = vmul.f32 %v174, 1.442695
      %v176 = vpow.pop %v175
      %v177 = vsel %vm122, %v176, 0.0
      %178 = vadd.xlane.f32.xlu0 %v177
      %v179 = vpop.xlane.xlu0 %178
      %v180 = vrcp.pop %v179
      %v181 = vmul.f32 %v176, %v180
      %v182 = vpack.c.bf16 %v181, %v181
      %183 = vrot.lane.b32.xlu0 %v119, 64
      %v184 = vpop.permute.xlu0 %183
      %v186 = vsel %vm122, %v182, 0
      %vm188 = vcmask 1043456
      %v190 = vsel %vm188, %v184, 0
      %192 = vmatprep.subr.bf16.mxu0 0
      %193 = vmatpush1.bf16.msra.mxu0 %v190
      %194 = vmatprep.subr.bf16.mxu0 0
      %195 = vmatpush1.bf16.msra.mxu0 0
      %196 = vmatprep.subr.bf16.mxu0 0
      %197 = vmatpush1.bf16.msra.mxu0 0
      %198 = vmatprep.subr.bf16.mxu0 0
      %199 = vmatpush1.bf16.msra.mxu0 0
      %200 = vmatprep.subr.bf16.mxu0 0
      %201 = vmatpush1.bf16.msra.mxu0 0
      %202 = vmatprep.subr.bf16.mxu0 0
      %203 = vmatpush1.bf16.msra.mxu0 0
      %204 = vmatprep.subr.bf16.mxu0 0
      %205 = vmatpush1.bf16.msra.mxu0 0
      %206 = vmatprep.subr.bf16.mxu0 0
      %207 = vmatpush1.bf16.msra.mxu0 0
      %208 = vmatprep.subr.bf16.mxu0 0
      %209 = vmatpush1.bf16.msra.mxu0 0
      %210 = vmatprep.subr.bf16.mxu0 0
      %211 = vmatpush1.bf16.msra.mxu0 0
      %212 = vmatprep.subr.bf16.mxu0 0
      %213 = vmatpush1.bf16.msra.mxu0 0
      %214 = vmatprep.subr.bf16.mxu0 0
      %215 = vmatpush1.bf16.msra.mxu0 0
      %216 = vmatprep.subr.bf16.mxu0 0
      %217 = vmatpush1.bf16.msra.mxu0 0
      %218 = vmatprep.subr.bf16.mxu0 0
      %219 = vmatpush1.bf16.msra.mxu0 0
      %220 = vmatprep.subr.bf16.mxu0 0
      %221 = vmatpush1.bf16.msra.mxu0 0
      %222 = vmatprep.subr.bf16.mxu0 0
      %223 = vmatpush1.bf16.msra.mxu0 0
      %224 = vmatprep.mubr.bf16.mxu0 0
      %225 = vmatmul.mubr.bf16.gmra.mrb[0].mxu0 %v186
      %v226 = vpop.f32.mrb[0].mxu0
      %v227 = vadd.f32 0.0, %v226
      %v228 = vpop.f32.mrb[0].mxu0
      %v229 = vpop.f32.mrb[0].mxu0
      %v230 = vpop.f32.mrb[0].mxu0
      %231 = vdwg.mxu0
      %v232 = vpack.c.bf16 %v227, %v227
      %vm233 = vcmask 60416
      %234 = vst.msk [vmem:[%s111] sm:$0xf] %vm233, %v232
      %235 = vrot.lane.b32.xlu0 %v119, 120
      %v236 = vpop.permute.xlu0 %235
      %237 = vrot.lane.b32.xlu0 %v119, 88
      %v238 = vpop.permute.xlu0 %237
      %v240 = vsel %vm122, %v236, 0
      %v243 = vsel %vm122, %v238, 0
      %245 = vmatprep.subr.bf16.mxu0 0
      %246 = vmatpush1.bf16.xpose.msra.mxu0 %v243
      %247 = vmatprep.subr.bf16.mxu0 0
      %248 = vmatpush1.bf16.xpose.msra.mxu0 0
      %249 = vmatprep.subr.bf16.mxu0 0
      %250 = vmatpush1.bf16.xpose.msra.mxu0 0
      %251 = vmatprep.subr.bf16.mxu0 0
      %252 = vmatpush1.bf16.xpose.msra.mxu0 0
      %253 = vmatprep.subr.bf16.mxu0 0
      %254 = vmatpush1.bf16.xpose.msra.mxu0 0
      %255 = vmatprep.subr.bf16.mxu0 0
      %256 = vmatpush1.bf16.xpose.msra.mxu0 0
      %257 = vmatprep.subr.bf16.mxu0 0
      %258 = vmatpush1.bf16.xpose.msra.mxu0 0
      %259 = vmatprep.subr.bf16.mxu0 0
      %260 = vmatpush1.bf16.xpose.msra.mxu0 0
      %261 = vmatprep.subr.bf16.mxu0 0
      %262 = vmatpush1.bf16.xpose.msra.mxu0 0
      %263 = vmatprep.subr.bf16.mxu0 0
      %264 = vmatpush1.bf16.xpose.msra.mxu0 0
      %265 = vmatprep.subr.bf16.mxu0 0
      %266 = vmatpush1.bf16.xpose.msra.mxu0 0
      %267 = vmatprep.subr.bf16.mxu0 0
      %268 = vmatpush1.bf16.xpose.msra.mxu0 0
      %269 = vmatprep.subr.bf16.mxu0 0
      %270 = vmatpush1.bf16.xpose.msra.mxu0 0
      %271 = vmatprep.subr.bf16.mxu0 0
      %272 = vmatpush1.bf16.xpose.msra.mxu0 0
      %273 = vmatprep.subr.bf16.mxu0 0
      %274 = vmatpush1.bf16.xpose.msra.mxu0 0
      %275 = vmatprep.subr.bf16.mxu0 0
      %276 = vmatpush1.bf16.xpose.msra.mxu0 0
      %277 = vmatprep.mubr.bf16.mxu0 0
      %278 = vmatmul.mubr.bf16.gmra.mrb[0].mxu0 %v240
      %v279 = vpop.f32.mrb[0].mxu0
      %v280 = vadd.f32 0.0, %v279
      %v281 = vpop.f32.mrb[0].mxu0
      %v282 = vpop.f32.mrb[0].mxu0
      %v283 = vpop.f32.mrb[0].mxu0
      %284 = vdwg.mxu0
      %v285 = vmul.f32 %v280, 0.35355338
      %v286 = vsel %vm116, %v285, -1e+30
      %v287 = vsel %vm122, %v286, -inf
      %288 = vmax.xlane.f32.xlu0 %v287
      %v289 = vpop.xlane.xlu0 %288
      %v290 = vsub.f32 %v286, %v289
      %v291 = vmul.f32 %v290, 1.442695
      %v292 = vpow.pop %v291
      %v293 = vsel %vm122, %v292, 0.0
      %294 = vadd.xlane.f32.xlu0 %v293
      %v295 = vpop.xlane.xlu0 %294
      %v296 = vrcp.pop %v295
      %v297 = vmul.f32 %v292, %v296
      %v298 = vpack.c.bf16 %v297, %v297
      %299 = vrot.lane.b32.xlu0 %v119, 56
      %v300 = vpop.permute.xlu0 %299
      %v302 = vsel %vm122, %v298, 0
      %v305 = vsel %vm188, %v300, 0
      %307 = vmatprep.subr.bf16.mxu0 0
      %308 = vmatpush1.bf16.msra.mxu0 %v305
      %309 = vmatprep.subr.bf16.mxu0 0
      %310 = vmatpush1.bf16.msra.mxu0 0
      %311 = vmatprep.subr.bf16.mxu0 0
      %312 = vmatpush1.bf16.msra.mxu0 0
      %313 = vmatprep.subr.bf16.mxu0 0
      %314 = vmatpush1.bf16.msra.mxu0 0
      %315 = vmatprep.subr.bf16.mxu0 0
      %316 = vmatpush1.bf16.msra.mxu0 0
      %317 = vmatprep.subr.bf16.mxu0 0
      %318 = vmatpush1.bf16.msra.mxu0 0
      %319 = vmatprep.subr.bf16.mxu0 0
      %320 = vmatpush1.bf16.msra.mxu0 0
      %321 = vmatprep.subr.bf16.mxu0 0
      %322 = vmatpush1.bf16.msra.mxu0 0
      %323 = vmatprep.subr.bf16.mxu0 0
      %324 = vmatpush1.bf16.msra.mxu0 0
      %325 = vmatprep.subr.bf16.mxu0 0
      %326 = vmatpush1.bf16.msra.mxu0 0
      %327 = vmatprep.subr.bf16.mxu0 0
      %328 = vmatpush1.bf16.msra.mxu0 0
      %329 = vmatprep.subr.bf16.mxu0 0
      %330 = vmatpush1.bf16.msra.mxu0 0
      %331 = vmatprep.subr.bf16.mxu0 0
      %332 = vmatpush1.bf16.msra.mxu0 0
      %333 = vmatprep.subr.bf16.mxu0 0
      %334 = vmatpush1.bf16.msra.mxu0 0
      %335 = vmatprep.subr.bf16.mxu0 0
      %336 = vmatpush1.bf16.msra.mxu0 0
      %337 = vmatprep.subr.bf16.mxu0 0
      %338 = vmatpush1.bf16.msra.mxu0 0
      %339 = vmatprep.mubr.bf16.mxu0 0
      %340 = vmatmul.mubr.bf16.gmra.mrb[0].mxu0 %v302
      %v341 = vpop.f32.mrb[0].mxu0
      %v342 = vadd.f32 0.0, %v341
      %v343 = vpop.f32.mrb[0].mxu0
      %v344 = vpop.f32.mrb[0].mxu0
      %v345 = vpop.f32.mrb[0].mxu0
      %346 = vdwg.mxu0
      %v347 = vpack.c.bf16 %v342, %v342
      %v349 = vunpack.c.l.b16 %v347
      %v350 = vpack.c.b16 %v349, %v349
      %351 = vrot.lane.b32.xlu0 %v350, 8
      %v352 = vpop.permute.xlu0 %351
      %vm354 = vcmask 126016
      %355 = vst.msk [vmem:[%s111] sm:$0xf] %vm354, %v352
      %356 = vrot.lane.b32.xlu0 %v119, 112
      %v357 = vpop.permute.xlu0 %356
      %358 = vrot.lane.b32.xlu0 %v119, 80
      %v359 = vpop.permute.xlu0 %358
      %v361 = vsel %vm122, %v357, 0
      %v364 = vsel %vm122, %v359, 0
      %366 = vmatprep.subr.bf16.mxu0 0
      %367 = vmatpush1.bf16.xpose.msra.mxu0 %v364
      %368 = vmatprep.subr.bf16.mxu0 0
      %369 = vmatpush1.bf16.xpose.msra.mxu0 0
      %370 = vmatprep.subr.bf16.mxu0 0
      %371 = vmatpush1.bf16.xpose.msra.mxu0 0
      %372 = vmatprep.subr.bf16.mxu0 0
      %373 = vmatpush1.bf16.xpose.msra.mxu0 0
      %374 = vmatprep.subr.bf16.mxu0 0
      %375 = vmatpush1.bf16.xpose.msra.mxu0 0
      %376 = vmatprep.subr.bf16.mxu0 0
      %377 = vmatpush1.bf16.xpose.msra.mxu0 0
      %378 = vmatprep.subr.bf16.mxu0 0
      %379 = vmatpush1.bf16.xpose.msra.mxu0 0
      %380 = vmatprep.subr.bf16.mxu0 0
      %381 = vmatpush1.bf16.xpose.msra.mxu0 0
      %382 = vmatprep.subr.bf16.mxu0 0
      %383 = vmatpush1.bf16.xpose.msra.mxu0 0
      %384 = vmatprep.subr.bf16.mxu0 0
      %385 = vmatpush1.bf16.xpose.msra.mxu0 0
      %386 = vmatprep.subr.bf16.mxu0 0
      %387 = vmatpush1.bf16.xpose.msra.mxu0 0
      %388 = vmatprep.subr.bf16.mxu0 0
      %389 = vmatpush1.bf16.xpose.msra.mxu0 0
      %390 = vmatprep.subr.bf16.mxu0 0
      %391 = vmatpush1.bf16.xpose.msra.mxu0 0
      %392 = vmatprep.subr.bf16.mxu0 0
      %393 = vmatpush1.bf16.xpose.msra.mxu0 0
      %394 = vmatprep.subr.bf16.mxu0 0
      %395 = vmatpush1.bf16.xpose.msra.mxu0 0
      %396 = vmatprep.subr.bf16.mxu0 0
      %397 = vmatpush1.bf16.xpose.msra.mxu0 0
      %398 = vmatprep.mubr.bf16.mxu0 0
      %399 = vmatmul.mubr.bf16.gmra.mrb[0].mxu0 %v361
      %v400 = vpop.f32.mrb[0].mxu0
      %v401 = vadd.f32 0.0, %v400
      %v402 = vpop.f32.mrb[0].mxu0
      %v403 = vpop.f32.mrb[0].mxu0
      %v404 = vpop.f32.mrb[0].mxu0
      %405 = vdwg.mxu0
      %v406 = vmul.f32 %v401, 0.35355338
      %v407 = vsel %vm116, %v406, -1e+30
      %v408 = vsel %vm122, %v407, -inf
      %409 = vmax.xlane.f32.xlu0 %v408
      %v410 = vpop.xlane.xlu0 %409
      %v411 = vsub.f32 %v407, %v410
      %v412 = vmul.f32 %v411, 1.442695
      %v413 = vpow.pop %v412
      %v414 = vsel %vm122, %v413, 0.0
      %415 = vadd.xlane.f32.xlu0 %v414
      %v416 = vpop.xlane.xlu0 %415
      %v417 = vrcp.pop %v416
      %v418 = vmul.f32 %v413, %v417
      %v419 = vpack.c.bf16 %v418, %v418
      %420 = vrot.lane.b32.xlu0 %v119, 48
      %v421 = vpop.permute.xlu0 %420
      %v423 = vsel %vm122, %v419, 0
      %v426 = vsel %vm188, %v421, 0
      %428 = vmatprep.subr.bf16.mxu0 0
      %429 = vmatpush1.bf16.msra.mxu0 %v426
      %430 = vmatprep.subr.bf16.mxu0 0
      %431 = vmatpush1.bf16.msra.mxu0 0
      %432 = vmatprep.subr.bf16.mxu0 0
      %433 = vmatpush1.bf16.msra.mxu0 0
      %434 = vmatprep.subr.bf16.mxu0 0
      %435 = vmatpush1.bf16.msra.mxu0 0
      %436 = vmatprep.subr.bf16.mxu0 0
      %437 = vmatpush1.bf16.msra.mxu0 0
      %438 = vmatprep.subr.bf16.mxu0 0
      %439 = vmatpush1.bf16.msra.mxu0 0
      %440 = vmatprep.subr.bf16.mxu0 0
      %441 = vmatpush1.bf16.msra.mxu0 0
      %442 = vmatprep.subr.bf16.mxu0 0
      %443 = vmatpush1.bf16.msra.mxu0 0
      %444 = vmatprep.subr.bf16.mxu0 0
      %445 = vmatpush1.bf16.msra.mxu0 0
      %446 = vmatprep.subr.bf16.mxu0 0
      %447 = vmatpush1.bf16.msra.mxu0 0
      %448 = vmatprep.subr.bf16.mxu0 0
      %449 = vmatpush1.bf16.msra.mxu0 0
      %450 = vmatprep.subr.bf16.mxu0 0
      %451 = vmatpush1.bf16.msra.mxu0 0
      %452 = vmatprep.subr.bf16.mxu0 0
      %453 = vmatpush1.bf16.msra.mxu0 0
      %454 = vmatprep.subr.bf16.mxu0 0
      %455 = vmatpush1.bf16.msra.mxu0 0
      %456 = vmatprep.subr.bf16.mxu0 0
      %457 = vmatpush1.bf16.msra.mxu0 0
      %458 = vmatprep.subr.bf16.mxu0 0
      %459 = vmatpush1.bf16.msra.mxu0 0
      %460 = vmatprep.mubr.bf16.mxu0 0
      %461 = vmatmul.mubr.bf16.gmra.mrb[0].mxu0 %v423
      %v462 = vpop.f32.mrb[0].mxu0
      %v463 = vadd.f32 0.0, %v462
      %v464 = vpop.f32.mrb[0].mxu0
      %v465 = vpop.f32.mrb[0].mxu0
      %v466 = vpop.f32.mrb[0].mxu0
      %467 = vdwg.mxu0
      %v468 = vpack.c.bf16 %v463, %v463
      %v470 = vunpack.c.l.b16 %v468
      %v471 = vpack.c.b16 %v470, %v470
      %472 = vrot.lane.b32.xlu0 %v471, 16
      %v473 = vpop.permute.xlu0 %472
      %vm475 = vcmask 191616
      %476 = vst.msk [vmem:[%s111] sm:$0xf] %vm475, %v473
      %477 = vrot.lane.b32.xlu0 %v119, 104
      %v478 = vpop.permute.xlu0 %477
      %479 = vrot.lane.b32.xlu0 %v119, 72
      %v480 = vpop.permute.xlu0 %479
      %v482 = vsel %vm122, %v478, 0
      %v485 = vsel %vm122, %v480, 0
      %487 = vmatprep.subr.bf16.mxu0 0
      %488 = vmatpush1.bf16.xpose.msra.mxu0 %v485
      %489 = vmatprep.subr.bf16.mxu0 0
      %490 = vmatpush1.bf16.xpose.msra.mxu0 0
      %491 = vmatprep.subr.bf16.mxu0 0
      %492 = vmatpush1.bf16.xpose.msra.mxu0 0
      %493 = vmatprep.subr.bf16.mxu0 0
      %494 = vmatpush1.bf16.xpose.msra.mxu0 0
      %495 = vmatprep.subr.bf16.mxu0 0
      %496 = vmatpush1.bf16.xpose.msra.mxu0 0
      %497 = vmatprep.subr.bf16.mxu0 0
      %498 = vmatpush1.bf16.xpose.msra.mxu0 0
      %499 = vmatprep.subr.bf16.mxu0 0
      %500 = vmatpush1.bf16.xpose.msra.mxu0 0
      %501 = vmatprep.subr.bf16.mxu0 0
      %502 = vmatpush1.bf16.xpose.msra.mxu0 0
      %503 = vmatprep.subr.bf16.mxu0 0
      %504 = vmatpush1.bf16.xpose.msra.mxu0 0
      %505 = vmatprep.subr.bf16.mxu0 0
      %506 = vmatpush1.bf16.xpose.msra.mxu0 0
      %507 = vmatprep.subr.bf16.mxu0 0
      %508 = vmatpush1.bf16.xpose.msra.mxu0 0
      %509 = vmatprep.subr.bf16.mxu0 0
      %510 = vmatpush1.bf16.xpose.msra.mxu0 0
      %511 = vmatprep.subr.bf16.mxu0 0
      %512 = vmatpush1.bf16.xpose.msra.mxu0 0
      %513 = vmatprep.subr.bf16.mxu0 0
      %514 = vmatpush1.bf16.xpose.msra.mxu0 0
      %515 = vmatprep.subr.bf16.mxu0 0
      %516 = vmatpush1.bf16.xpose.msra.mxu0 0
      %517 = vmatprep.subr.bf16.mxu0 0
      %518 = vmatpush1.bf16.xpose.msra.mxu0 0
      %519 = vmatprep.mubr.bf16.mxu0 0
      %520 = vmatmul.mubr.bf16.gmra.mrb[0].mxu0 %v482
      %v521 = vpop.f32.mrb[0].mxu0
      %v522 = vadd.f32 0.0, %v521
      %v523 = vpop.f32.mrb[0].mxu0
      %v524 = vpop.f32.mrb[0].mxu0
      %v525 = vpop.f32.mrb[0].mxu0
      %526 = vdwg.mxu0
      %v527 = vmul.f32 %v522, 0.35355338
      %v528 = vsel %vm116, %v527, -1e+30
      %v529 = vsel %vm122, %v528, -inf
      %530 = vmax.xlane.f32.xlu0 %v529
      %v531 = vpop.xlane.xlu0 %530
      %v532 = vsub.f32 %v528, %v531
      %v533 = vmul.f32 %v532, 1.442695
      %v534 = vpow.pop %v533
      %v535 = vsel %vm122, %v534, 0.0
      %536 = vadd.xlane.f32.xlu0 %v535
      %v537 = vpop.xlane.xlu0 %536
      %v538 = vrcp.pop %v537
      %v539 = vmul.f32 %v534, %v538
      %v540 = vpack.c.bf16 %v539, %v539
      %541 = vrot.lane.b32.xlu0 %v119, 40
      %v542 = vpop.permute.xlu0 %541
      %v544 = vsel %vm122, %v540, 0
      %v547 = vsel %vm188, %v542, 0
      %549 = vmatprep.subr.bf16.mxu0 0
      %550 = vmatpush1.bf16.msra.mxu0 %v547
      %551 = vmatprep.subr.bf16.mxu0 0
      %552 = vmatpush1.bf16.msra.mxu0 0
      %553 = vmatprep.subr.bf16.mxu0 0
      %554 = vmatpush1.bf16.msra.mxu0 0
      %555 = vmatprep.subr.bf16.mxu0 0
      %556 = vmatpush1.bf16.msra.mxu0 0
      %557 = vmatprep.subr.bf16.mxu0 0
      %558 = vmatpush1.bf16.msra.mxu0 0
      %559 = vmatprep.subr.bf16.mxu0 0
      %560 = vmatpush1.bf16.msra.mxu0 0
      %561 = vmatprep.subr.bf16.mxu0 0
      %562 = vmatpush1.bf16.msra.mxu0 0
      %563 = vmatprep.subr.bf16.mxu0 0
      %564 = vmatpush1.bf16.msra.mxu0 0
      %565 = vmatprep.subr.bf16.mxu0 0
      %566 = vmatpush1.bf16.msra.mxu0 0
      %567 = vmatprep.subr.bf16.mxu0 0
      %568 = vmatpush1.bf16.msra.mxu0 0
      %569 = vmatprep.subr.bf16.mxu0 0
      %570 = vmatpush1.bf16.msra.mxu0 0
      %571 = vmatprep.subr.bf16.mxu0 0
      %572 = vmatpush1.bf16.msra.mxu0 0
      %573 = vmatprep.subr.bf16.mxu0 0
      %574 = vmatpush1.bf16.msra.mxu0 0
      %575 = vmatprep.subr.bf16.mxu0 0
      %576 = vmatpush1.bf16.msra.mxu0 0
      %577 = vmatprep.subr.bf16.mxu0 0
      %578 = vmatpush1.bf16.msra.mxu0 0
      %579 = vmatprep.subr.bf16.mxu0 0
      %580 = vmatpush1.bf16.msra.mxu0 0
      %581 = vmatprep.mubr.bf16.mxu0 0
      %582 = vmatmul.mubr.bf16.gmra.mrb[0].mxu0 %v544
      %v583 = vpop.f32.mrb[0].mxu0
      %v584 = vadd.f32 0.0, %v583
      %v585 = vpop.f32.mrb[0].mxu0
      %v586 = vpop.f32.mrb[0].mxu0
      %v587 = vpop.f32.mrb[0].mxu0
      %588 = vdwg.mxu0
      %v589 = vpack.c.bf16 %v584, %v584
      %v591 = vunpack.c.l.b16 %v589
      %v592 = vpack.c.b16 %v591, %v591
      %593 = vrot.lane.b32.xlu0 %v592, 24
      %v594 = vpop.permute.xlu0 %593
      %vm596 = vcmask 257216
      %597 = vst.msk [vmem:[%s111] sm:$0xf] %vm596, %v594
      %p598 = scmp.lt.s32.totalorder %s12, 1
      %s599 = scalar_select %p598, %s12, 1
      %s600 = smul.addr %s599, 4
      %s601 = scalar_lea.vmem %s1, %s600
      // Predicated region
      $region25: #{partial_model_forward.16} parent=23 // pred_check
        %p602 = pneg %p56
      $region26: #{partial_model_forward.16} parent=23 // pred_check_branch
        %604 = sbr.rel (%p602) target = $region28
      $region27: #{partial_model_forward.16} parent=23 // pred_region
        _
      $region28: #{partial_model_forward.16} parent=23 // pred_fallthru
        _
    $region24: #{partial_model_forward.16} parent=5 // pred_fallthru
      _
    %p605 = scmp.le.s32.totalorder 2, %s7
    // Predicated region
    $region29: #{partial_model_forward.16} parent=5 // pred_check
      %p606 = pneg %p605
    $region30: #{partial_model_forward.16} parent=5 // pred_check_branch
      %608 = sbr.rel (%p606) target = $region32
    $region31: #{partial_model_forward.16} parent=5 // pred_region
      %s609 = ssub.s32 %s7, 2
      // Predicated region
      $region33: #{partial_model_forward.16} parent=31 // pred_check
        %p610 = pneg %p62
      $region34: #{partial_model_forward.16} parent=31 // pred_check_branch
        %612 = sbr.rel (%p610) target = $region36
      $region35: #{partial_model_forward.16} parent=31 // pred_region
        %p613 = scmp.lt.s32.totalorder %s13, 1
        %s614 = scalar_select %p613, %s13, 1
        %s615 = smul.addr %s614, 4
        %s616 = scalar_lea.vmem %s1, %s615
      $region36: #{partial_model_forward.16} parent=31 // pred_fallthru
        _
    $region32: #{partial_model_forward.16} parent=5 // pred_fallthru
      _
  $region6: #{partial_model_forward.16} parent=0 // loop_footer
    %s11 = sadd.s32 1, %s7
  $region7: #{partial_model_forward.16} parent=0 // loop_footer_branch
    %6 = sbr.rel target = $region3
  $region8: #{partial_model_forward.16} parent=0 // loop_exit
    _

// kernel: partial_model_forward.17
$region0: #{partial_model_forward.17}
  #allocation0 [shape = 'u32[]', space=smem, size = 0x4, offset = 0x4, fixed_abs, tag = 'smem constant byte address 0x4 - core index']
  #allocation1 [shape = 'u32[144,128]{1,0:T(1,128)}', space=vmem, size = 0x12000, scoped, tag = 'internal scratch']
  #allocation2 [shape = 'f32[8,32]{1,0:T(8,128)}', space=vmem, size = 0x1000, scoped, tag = 'scratch operand']
  %s0 = inlined_call_operand.vmem [shape: bf16[16,32], index: 0, kind: input, shape index: {}]
  %s1 = inlined_call_operand.vmem [shape: bf16[32,32], index: 1, kind: input, shape index: {}]
  %s2 = inlined_call_operand.vmem [shape: f32[1,32], index: 2, kind: input, shape index: {}]
  %s3 = inlined_call_operand.vmem [shape: bf16[16,32], index: 3, kind: input, shape index: {}]
  %s4 = inlined_call_operand.vmem [shape: bf16[16,32], index: 4, kind: output, shape index: {}]
  %s5 = sld [smem:[#allocation0]]
  $region57: #{partial_model_forward.17} parent=0
    _
  %s7 = ssub.s32 1, %s5
  %s8 = scalar_select 0, %s7, %s5
  loop: start=0, step=1, limit=4
  $region2: #{partial_model_forward.17} parent=0 // loop_pre_header
    _
  $region3: #{partial_model_forward.17} parent=0 // loop_header
    %s10 = sphi 0, %s14
    %p11 = scmp.ge.s32.totalorder %s10, 4
    %s17 = sphi 0, %s36
    %s18 = sphi 0, %s32
    %s19 = sphi 0, %s28
    %s20 = sphi 0, %s17
    %s21 = sphi 0, %s18
    %s22 = sphi 0, %s19
    %s23 = sphi 0, %s20
    %s24 = sphi 0, %s21
    %s25 = sphi 0, %s22
    %s41 = sphi 0, %s43
    %s44 = sphi 0, %s41
    %s45 = sphi 0, %s44
    %s61 = sphi 0, %s45
    %s69 = sphi 0, %s71
    %s72 = sphi 0, %s69
    %s73 = sphi 0, %s72
    %s89 = sphi 0, %s73
    %s95 = sphi 0, %s97
    %s98 = sphi 0, %s95
    %s99 = sphi 0, %s98
    %s115 = sphi 0, %s99
    %s123 = sphi 0, %s125
    %s126 = sphi 0, %s123
    %s127 = sphi 0, %s126
    %s143 = sphi 0, %s127
    %s151 = sphi 0, %s153
    %s154 = sphi 0, %s151
    %s155 = sphi 0, %s154
    %s171 = sphi 0, %s155
  $region4: #{partial_model_forward.17} parent=0 // loop_header_branch
    %13 = sbr.rel (%p11) target = $region8
  $region5: #{partial_model_forward.17} parent=0 // loop_body
    %s15 = ssub.s32 %s10, 1
    %s16 = ssub.s32 %s10, 2
    %s26 = sadd.s32 1, %s19
    %p27 = scmp.ge.s32.totalorder %s26, 1
    %s28 = scalar_select %p27, 0, %s26
    %s29 = sadd.s32 1, %s18
    %s30 = scalar_select %p27, %s29, %s18
    %p31 = scmp.ge.s32.totalorder %s30, 1
    %s32 = scalar_select %p31, 0, %s30
    %s33 = sadd.s32 1, %s17
    %s34 = scalar_select %p31, %s33, %s17
    %p35 = scmp.ge.s32.totalorder %s34, 2
    %s36 = scalar_select %p35, 0, %s34
    %s37 = ssub.s32 %s17, %s36
    %s38 = ssub.s32 %s19, %s28
    %s39 = sor.u32 %s37, %s38
    %p40 = scmp.eq.s32.totalorder %s39, 0
    %s42 = sadd.s32 %s41, 1
    %s43 = scalar_select %p40, %s41, %s42
    %p46 = pneg %p40
    %p47 = scmp.eq.s32.totalorder %s10, 1
    %p48 = por %p46, %p47
    %p49 = scmp.ne.s32.totalorder %s41, %s44
    %p50 = scmp.eq.s32.totalorder %s10, 0
    %p51 = por %p49, %p50
    %p52 = scmp.ne.s32.totalorder %s41, %s44
    %p53 = scmp.eq.s32.totalorder %s15, 1
    %p54 = por %p52, %p53
    %p55 = scmp.ne.s32.totalorder %s44, %s45
    %p56 = scmp.eq.s32.totalorder %s15, 0
    %p57 = por %p55, %p56
    %p58 = scmp.ne.s32.totalorder %s44, %s45
    %p59 = scmp.eq.s32.totalorder %s16, 1
    %p60 = por %p58, %p59
    %p62 = scmp.ne.s32.totalorder %s45, %s61
    %p63 = scmp.eq.s32.totalorder %s16, 0
    %p64 = por %p62, %p63
    %s65 = ssub.s32 %s19, %s28
    %s66 = ssub.s32 %s18, %s32
    %s67 = sor.u32 %s65, %s66
    %p68 = scmp.eq.s32.totalorder %s67, 0
    %s70 = sadd.s32 %s69, 1
    %s71 = scalar_select %p68, %s69, %s70
    %p74 = pneg %p68
    %p75 = scmp.eq.s32.totalorder %s10, 1
    %p76 = por %p74, %p75
    %p77 = scmp.ne.s32.totalorder %s69, %s72
    %p78 = scmp.eq.s32.totalorder %s10, 0
    %p79 = por %p77, %p78
    %p80 = scmp.ne.s32.totalorder %s69, %s72
    %p81 = scmp.eq.s32.totalorder %s15, 1
    %p82 = por %p80, %p81
    %p83 = scmp.ne.s32.totalorder %s72, %s73
    %p84 = scmp.eq.s32.totalorder %s15, 0
    %p85 = por %p83, %p84
    %p86 = scmp.ne.s32.totalorder %s72, %s73
    %p87 = scmp.eq.s32.totalorder %s16, 1
    %p88 = por %p86, %p87
    %p90 = scmp.ne.s32.totalorder %s73, %s89
    %p91 = scmp.eq.s32.totalorder %s16, 0
    %p92 = por %p90, %p91
    %s93 = ssub.s32 %s18, %s32
    %p94 = scmp.eq.s32.totalorder %s93, 0
    %s96 = sadd.s32 %s95, 1
    %s97 = scalar_select %p94, %s95, %s96
    %p100 = pneg %p94
    %p101 = scmp.eq.s32.totalorder %s10, 1
    %p102 = por %p100, %p101
    %p103 = scmp.ne.s32.totalorder %s95, %s98
    %p104 = scmp.eq.s32.totalorder %s10, 0
    %p105 = por %p103, %p104
    %p106 = scmp.ne.s32.totalorder %s95, %s98
    %p107 = scmp.eq.s32.totalorder %s15, 1
    %p108 = por %p106, %p107
    %p109 = scmp.ne.s32.totalorder %s98, %s99
    %p110 = scmp.eq.s32.totalorder %s15, 0
    %p111 = por %p109, %p110
    %p112 = scmp.ne.s32.totalorder %s98, %s99
    %p113 = scmp.eq.s32.totalorder %s16, 1
    %p114 = por %p112, %p113
    %p116 = scmp.ne.s32.totalorder %s99, %s115
    %p117 = scmp.eq.s32.totalorder %s16, 0
    %p118 = por %p116, %p117
    %s119 = ssub.s32 %s17, %s36
    %s120 = ssub.s32 %s18, %s32
    %s121 = sor.u32 %s119, %s120
    %p122 = scmp.eq.s32.totalorder %s121, 0
    %s124 = sadd.s32 %s123, 1
    %s125 = scalar_select %p122, %s123, %s124
    %p128 = pneg %p122
    %p129 = scmp.eq.s32.totalorder %s10, 1
    %p130 = por %p128, %p129
    %p131 = scmp.ne.s32.totalorder %s123, %s126
    %p132 = scmp.eq.s32.totalorder %s10, 0
    %p133 = por %p131, %p132
    %p134 = scmp.ne.s32.totalorder %s123, %s126
    %p135 = scmp.eq.s32.totalorder %s15, 1
    %p136 = por %p134, %p135
    %p137 = scmp.ne.s32.totalorder %s126, %s127
    %p138 = scmp.eq.s32.totalorder %s15, 0
    %p139 = por %p137, %p138
    %p140 = scmp.ne.s32.totalorder %s126, %s127
    %p141 = scmp.eq.s32.totalorder %s16, 1
    %p142 = por %p140, %p141
    %p144 = scmp.ne.s32.totalorder %s127, %s143
    %p145 = scmp.eq.s32.totalorder %s16, 0
    %p146 = por %p144, %p145
    %s147 = ssub.s32 %s17, %s36
    %s148 = ssub.s32 %s18, %s32
    %s149 = sor.u32 %s147, %s148
    %p150 = scmp.eq.s32.totalorder %s149, 0
    %s152 = sadd.s32 %s151, 1
    %s153 = scalar_select %p150, %s151, %s152
    %p156 = pneg %p150
    %p157 = scmp.eq.s32.totalorder %s10, 1
    %p158 = por %p156, %p157
    %p159 = scmp.ne.s32.totalorder %s151, %s154
    %p160 = scmp.eq.s32.totalorder %s10, 0
    %p161 = por %p159, %p160
    %p162 = scmp.ne.s32.totalorder %s151, %s154
    %p163 = scmp.eq.s32.totalorder %s15, 1
    %p164 = por %p162, %p163
    %p165 = scmp.ne.s32.totalorder %s154, %s155
    %p166 = scmp.eq.s32.totalorder %s15, 0
    %p167 = por %p165, %p166
    %p168 = scmp.ne.s32.totalorder %s154, %s155
    %p169 = scmp.eq.s32.totalorder %s16, 1
    %p170 = por %p168, %p169
    %p172 = scmp.ne.s32.totalorder %s155, %s171
    %p173 = scmp.eq.s32.totalorder %s16, 0
    %p174 = por %p172, %p173
    %p175 = scmp.le.s32.totalorder 1, %s10
    %p176 = scmp.lt.s32.totalorder %s10, 3
    %p177 = pnand %p175, %p176
    %p178 = pneg %p177
    // Predicated region
    $region9: #{partial_model_forward.17} parent=5 // pred_check
      _
    $region10: #{partial_model_forward.17} parent=5 // pred_check_branch
      %180 = sbr.rel (%p177) target = $region12
    $region11: #{partial_model_forward.17} parent=5 // pred_region
      %s181 = ssub.s32 %s10, 1
      // Predicated region
      $region13: #{partial_model_forward.17} parent=11 // pred_check
        %p182 = pneg %p85
      $region14: #{partial_model_forward.17} parent=11 // pred_check_branch
        %184 = sbr.rel (%p182) target = $region16
      $region15: #{partial_model_forward.17} parent=11 // pred_region
        %s185 = smul.u32 4, %s22
        %p186 = scmp.lt.s32.totalorder %s185, 3
        %s187 = scalar_select %p186, %s185, 3
        %p188 = scmp.lt.s32.totalorder %s21, 0
        %s189 = scalar_select %p188, %s21, 0
        %s190 = sadd.s32 %s189, %s187
        %s191 = smul.addr %s190, 4
        %s192 = scalar_lea.vmem %s1, %s191
        %s193 = smul.u32 4, %s22
      $region16: #{partial_model_forward.17} parent=11 // pred_fallthru
        _
      // Predicated region
      $region17: #{partial_model_forward.17} parent=11 // pred_check
        %p194 = pneg %p111
      $region18: #{partial_model_forward.17} parent=11 // pred_check_branch
        %196 = sbr.rel (%p194) target = $region20
      $region19: #{partial_model_forward.17} parent=11 // pred_region
        %p197 = scmp.lt.s32.totalorder %s21, 0
        %s198 = scalar_select %p197, %s21, 0
        %s199 = scalar_lea.vmem %s2, %s198
      $region20: #{partial_model_forward.17} parent=11 // pred_fallthru
        _
    $region12: #{partial_model_forward.17} parent=5 // pred_fallthru
      _
    %p200 = scmp.lt.s32.totalorder %s10, 2
    // Predicated region
    $region21: #{partial_model_forward.17} parent=5 // pred_check
      %p201 = pneg %p200
    $region22: #{partial_model_forward.17} parent=5 // pred_check_branch
      %203 = sbr.rel (%p201) target = $region24
    $region23: #{partial_model_forward.17} parent=5 // pred_region
      // Predicated region
      $region25: #{partial_model_forward.17} parent=23 // pred_check
        %p204 = pneg %p51
      $region26: #{partial_model_forward.17} parent=23 // pred_check_branch
        %206 = sbr.rel (%p204) target = $region28
      $region27: #{partial_model_forward.17} parent=23 // pred_region
        %p207 = scmp.lt.s32.totalorder %s17, 1
        %s208 = scalar_select %p207, %s17, 1
        %p209 = scmp.lt.s32.totalorder %s19, 0
        %s210 = scalar_select %p209, %s19, 0
        %s211 = sadd.s32 %s210, %s208
        %s212 = smul.addr %s211, 4
        %s213 = scalar_lea.vmem %s0, %s212
      $region28: #{partial_model_forward.17} parent=23 // pred_fallthru
        _
      // Predicated region
      $region29: #{partial_model_forward.17} parent=23 // pred_check
        %p214 = pneg %p133
      $region30: #{partial_model_forward.17} parent=23 // pred_check_branch
        %216 = sbr.rel (%p214) target = $region32
      $region31: #{partial_model_forward.17} parent=23 // pred_region
        %p217 = scmp.lt.s32.totalorder %s17, 1
        %s218 = scalar_select %p217, %s17, 1
        %p219 = scmp.lt.s32.totalorder %s18, 0
        %s220 = scalar_select %p219, %s18, 0
        %s221 = sadd.s32 %s220, %s218
        %s222 = smul.addr %s221, 4
        %s223 = scalar_lea.vmem %s3, %s222
      $region32: #{partial_model_forward.17} parent=23 // pred_fallthru
        _
    $region24: #{partial_model_forward.17} parent=5 // pred_fallthru
      _
    %p224 = scmp.le.s32.totalorder 1, %s10
    %p225 = scmp.lt.s32.totalorder %s10, 3
    %p226 = pnand %p224, %p225
    %p227 = pneg %p226
    // Predicated region
    $region33: #{partial_model_forward.17} parent=5 // pred_check
      _
    $region34: #{partial_model_forward.17} parent=5 // pred_check_branch
      %229 = sbr.rel (%p226) target = $region36
    $region35: #{partial_model_forward.17} parent=5 // pred_region
      %s230 = ssub.s32 %s10, 1
      %p231 = scmp.lt.s32.totalorder %s20, 1
      %s232 = scalar_select %p231, %s20, 1
      %p233 = scmp.lt.s32.totalorder %s22, 0
      %s234 = scalar_select %p233, %s22, 0
      %s235 = sadd.s32 %s234, %s232
      %s236 = smul.addr %s235, 4
      %s237 = scalar_lea.vmem %s0, %s236
      %p238 = pneg %p57
      %p239 = pneg %p54
      %s240 = smul.u32 4, %s22
      %p241 = scmp.lt.s32.totalorder %s240, 3
      %s242 = scalar_select %p241, %s240, 3
      %p243 = scmp.lt.s32.totalorder %s21, 0
      %s244 = scalar_select %p243, %s21, 0
      %s245 = sadd.s32 %s244, %s242
      %s246 = smul.addr %s245, 4
      %s247 = scalar_lea.vmem %s1, %s246
      %p248 = pneg %p85
      %p249 = pneg %p82
      %p250 = scmp.lt.s32.totalorder %s21, 0
      %s251 = scalar_select %p250, %s21, 0
      %s252 = scalar_lea.vmem %s2, %s251
      %p253 = pneg %p111
      %p254 = pneg %p108
      %p255 = scmp.lt.s32.totalorder %s20, 1
      %s256 = scalar_select %p255, %s20, 1
      %p257 = scmp.lt.s32.totalorder %s21, 0
      %s258 = scalar_select %p257, %s21, 0
      %s259 = sadd.s32 %s258, %s256
      %s260 = smul.addr %s259, 4
      %s261 = scalar_lea.vmem %s3, %s260
      %p262 = pneg %p139
      %p263 = pneg %p136
      %p264 = pneg %p167
      %p265 = pneg %p164
      %p266 = scmp.lt.s32.totalorder %s20, 1
      %s267 = scalar_select %p266, %s20, 1
      %p268 = scmp.lt.s32.totalorder %s21, 0
      %s269 = scalar_select %p268, %s21, 0
      %s270 = sadd.s32 %s269, %s267
      %s271 = smul.addr %s270, 4
      %s272 = scalar_lea.vmem %s4, %s271
      %p273 = scmp.lt.s32.totalorder %s20, 1
      %s274 = scalar_select %p273, %s20, 1
      %p275 = scmp.lt.s32.totalorder %s22, 0
      %s276 = scalar_select %p275, %s22, 0
      %s277 = sadd.s32 %s276, %s274
      %s278 = smul.addr %s277, 4
      %s279 = scalar_lea.vmem %s0, %s278
      %s280 = smul.u32 4, %s22
      %p281 = scmp.lt.s32.totalorder %s280, 3
      %s282 = scalar_select %p281, %s280, 3
      %p283 = scmp.lt.s32.totalorder %s21, 0
      %s284 = scalar_select %p283, %s21, 0
      %s285 = sadd.s32 %s284, %s282
      %s286 = smul.addr %s285, 4
      %s287 = scalar_lea.vmem %s1, %s286
      %s288 = smul.u32 4, %s22
      %p289 = scmp.lt.s32.totalorder %s21, 0
      %s290 = scalar_select %p289, %s21, 0
      %s291 = scalar_lea.vmem %s2, %s290
      %p292 = scmp.lt.s32.totalorder %s20, 1
      %s293 = scalar_select %p292, %s20, 1
      %p294 = scmp.lt.s32.totalorder %s21, 0
      %s295 = scalar_select %p294, %s21, 0
      %s296 = sadd.s32 %s295, %s293
      %s297 = smul.addr %s296, 4
      %s298 = scalar_lea.vmem %s3, %s297
      %p299 = scmp.lt.s32.totalorder %s20, 1
      %s300 = scalar_select %p299, %s20, 1
      %p301 = scmp.lt.s32.totalorder %s21, 0
      %s302 = scalar_select %p301, %s21, 0
      %s303 = sadd.s32 %s302, %s300
      %s304 = smul.addr %s303, 4
      %s305 = scalar_lea.vmem %s4, %s304
      %p307 = scmp.eq.s32.totalorder %s22, 0
      // Predicated region
      $region37: #{partial_model_forward.17} parent=35 // pred_check
        %p308 = pneg %p307
      $region38: #{partial_model_forward.17} parent=35 // pred_check_branch
        %310 = sbr.rel (%p308) target = $region40
      $region39: #{partial_model_forward.17} parent=35 // pred_region
        %vm311 = vcmask 261120
        %312 = vst.msk [vmem:[#allocation2] sm:$0xff] %vm311, 0.0
      $region40: #{partial_model_forward.17} parent=35 // pred_fallthru
        _
      %v313 = vld [vmem:[%s279] sm:$0xf]
      %v314 = vld [vmem:[#allocation2] sm:$0xff]
      %v315 = vld [vmem:[%s287] sm:$0xf]
      %v316 = vld [vmem:[%s287 + $0x4] sm:$0xf]
      %v317 = vld [vmem:[%s287 + $0x8] sm:$0xf]
      %v318 = vld [vmem:[%s287 + $0xc] sm:$0xf]
      %v323 = vunpack.c.l.b16 %v315
      %v324 = vunpack.c.l.b16 %v316
      %v325 = vunpack.c.l.b16 %v317
      %v326 = vunpack.c.l.b16 %v318
      %v327 = vpack.c.b16 %v324, %v323
      %v328 = vpack.c.b16 %v326, %v325
      %vm331 = vcmask 261120
      %v333 = vsel %vm331, %v313, 0
      %335 = vmatprep.subr.bf16.mxu0 0
      %336 = vmatpush1.bf16.msra.mxu0 %v327
      %337 = vmatprep.subr.bf16.mxu0 0
      %338 = vmatpush1.bf16.msra.mxu0 %v328
      %339 = vmatprep.subr.bf16.mxu0 0
      %340 = vmatpush1.bf16.msra.mxu0 0
      %341 = vmatprep.subr.bf16.mxu0 0
      %342 = vmatpush1.bf16.msra.mxu0 0
      %343 = vmatprep.subr.bf16.mxu0 0
      %344 = vmatpush1.bf16.msra.mxu0 0
      %345 = vmatprep.subr.bf16.mxu0 0
      %346 = vmatpush1.bf16.msra.mxu0 0
      %347 = vmatprep.subr.bf16.mxu0 0
      %348 = vmatpush1.bf16.msra.mxu0 0
      %349 = vmatprep.subr.bf16.mxu0 0
      %350 = vmatpush1.bf16.msra.mxu0 0
      %351 = vmatprep.subr.bf16.mxu0 0
      %352 = vmatpush1.bf16.msra.mxu0 0
      %353 = vmatprep.subr.bf16.mxu0 0
      %354 = vmatpush1.bf16.msra.mxu0 0
      %355 = vmatprep.subr.bf16.mxu0 0
      %356 = vmatpush1.bf16.msra.mxu0 0
      %357 = vmatprep.subr.bf16.mxu0 0
      %358 = vmatpush1.bf16.msra.mxu0 0
      %359 = vmatprep.subr.bf16.mxu0 0
      %360 = vmatpush1.bf16.msra.mxu0 0
      %361 = vmatprep.subr.bf16.mxu0 0
      %362 = vmatpush1.bf16.msra.mxu0 0
      %363 = vmatprep.subr.bf16.mxu0 0
      %364 = vmatpush1.bf16.msra.mxu0 0
      %365 = vmatprep.subr.bf16.mxu0 0
      %366 = vmatpush1.bf16.msra.mxu0 0
      %367 = vmatprep.mubr.bf16.mxu0 0
      %368 = vmatmul.mubr.bf16.gmra.mrb[0].mxu0 %v333
      %v369 = vpop.f32.mrb[0].mxu0
      %v370 = vadd.f32 0.0, %v369
      %v371 = vpop.f32.mrb[0].mxu0
      %v372 = vpop.f32.mrb[0].mxu0
      %v373 = vpop.f32.mrb[0].mxu0
      %374 = vdwg.mxu0
      %v375 = vadd.f32 %v314, %v370
      %376 = vst.msk [vmem:[#allocation2] sm:$0xff] %vm331, %v375
      // Predicated region
      $region41: #{partial_model_forward.17} parent=35 // pred_check
        %p377 = pneg %p307
      $region42: #{partial_model_forward.17} parent=35 // pred_check_branch
        %379 = sbr.rel (%p377) target = $region44
      $region43: #{partial_model_forward.17} parent=35 // pred_region
        %v380 = vld [vmem:[#allocation2] sm:$0xff]
        %v381 = vld [vmem:[%s291] sm:$0x1]
        %v383 = vlaneseq
        %v384 = vshrl.u32 %v383, 7
        %v385 = vsub.s32 0, %v384
        %v386 = vrot.slane %v381, %v385
        %v388 = vadd.f32 %v380, %v386
        %v389 = vld [vmem:[%s298] sm:$0xf]
        %v390 = vunpack.c.l.bf16 %v389
        %v391 = vadd.f32 %v388, %v390
        %v392 = vpack.c.bf16 %v391, %v391
        %vm393 = vcmask 257024
        %394 = vst.msk [vmem:[%s305] sm:$0xf] %vm393, %v392
      $region44: #{partial_model_forward.17} parent=35 // pred_fallthru
        _
      %p395 = scmp.lt.s32.totalorder %s20, 1
      %s396 = scalar_select %p395, %s20, 1
      %p397 = scmp.lt.s32.totalorder %s21, 0
      %s398 = scalar_select %p397, %s21, 0
      %s399 = sadd.s32 %s398, %s396
      %s400 = smul.addr %s399, 4
      %s401 = scalar_lea.vmem %s4, %s400
      // Predicated region
      $region45: #{partial_model_forward.17} parent=35 // pred_check
        %p402 = pneg %p164
      $region46: #{partial_model_forward.17} parent=35 // pred_check_branch
        %404 = sbr.rel (%p402) target = $region48
      $region47: #{partial_model_forward.17} parent=35 // pred_region
        _
      $region48: #{partial_model_forward.17} parent=35 // pred_fallthru
        _
    $region36: #{partial_model_forward.17} parent=5 // pred_fallthru
      _
    %p405 = scmp.le.s32.totalorder 2, %s10
    // Predicated region
    $region49: #{partial_model_forward.17} parent=5 // pred_check
      %p406 = pneg %p405
    $region50: #{partial_model_forward.17} parent=5 // pred_check_branch
      %408 = sbr.rel (%p406) target = $region52
    $region51: #{partial_model_forward.17} parent=5 // pred_region
      %s409 = ssub.s32 %s10, 2
      // Predicated region
      $region53: #{partial_model_forward.17} parent=51 // pred_check
        %p410 = pneg %p170
      $region54: #{partial_model_forward.17} parent=51 // pred_check_branch
        %412 = sbr.rel (%p410) target = $region56
      $region55: #{partial_model_forward.17} parent=51 // pred_region
        %p413 = scmp.lt.s32.totalorder %s23, 1
        %s414 = scalar_select %p413, %s23, 1
        %p415 = scmp.lt.s32.totalorder %s24, 0
        %s416 = scalar_select %p415, %s24, 0
        %s417 = sadd.s32 %s416, %s414
        %s418 = smul.addr %s417, 4
        %s419 = scalar_lea.vmem %s4, %s418
      $region56: #{partial_model_forward.17} parent=51 // pred_fallthru
        _
    $region52: #{partial_model_forward.17} parent=5 // pred_fallthru
      _
  $region6: #{partial_model_forward.17} parent=0 // loop_footer
    %s14 = sadd.s32 1, %s10
  $region7: #{partial_model_forward.17} parent=0 // loop_footer_branch
    %9 = sbr.rel target = $region3
  $region8: #{partial_model_forward.17} parent=0 // loop_exit
    _

// kernel: partial_model_forward.18
$region0: #{partial_model_forward.18}
  #allocation0 [shape = 'u32[]', space=smem, size = 0x4, offset = 0x4, fixed_abs, tag = 'smem constant byte address 0x4 - core index']
  #allocation1 [shape = 'u32[144,128]{1,0:T(1,128)}', space=vmem, size = 0x12000, scoped, tag = 'internal scratch']
  #allocation2 [shape = 'f32[8,64]{1,0:T(8,128)}', space=vmem, size = 0x1000, scoped, tag = 'scratch operand']
  #allocation3 [shape = 'bf16[8,32]{1,0:T(8,128)(2,1)}', space=vmem, size = 0x800, scoped, tag = 'scratch operand']
  %s0 = inlined_call_operand.vmem [shape: bf16[16,32], index: 0, kind: input, shape index: {}]
  %s1 = inlined_call_operand.vmem [shape: bf16[32,64], index: 1, kind: input, shape index: {}]
  %s2 = inlined_call_operand.vmem [shape: f32[1,64], index: 2, kind: input, shape index: {}]
  %s3 = inlined_call_operand.vmem [shape: f32[1,32], index: 3, kind: input, shape index: {}]
  %s4 = inlined_call_operand.vmem [shape: f32[1,32], index: 4, kind: input, shape index: {}]
  %s5 = inlined_call_operand.vmem [shape: bf16[16,64], index: 5, kind: output, shape index: {}]
  %s6 = sld [smem:[#allocation0]]
  $region65: #{partial_model_forward.18} parent=0
    _
  %s8 = ssub.s32 1, %s6
  %s9 = scalar_select 0, %s8, %s6
  loop: start=0, step=1, limit=4
  $region2: #{partial_model_forward.18} parent=0 // loop_pre_header
    _
  $region3: #{partial_model_forward.18} parent=0 // loop_header
    %s11 = sphi 0, %s15
    %p12 = scmp.ge.s32.totalorder %s11, 4
    %s18 = sphi 0, %s37
    %s19 = sphi 0, %s33
    %s20 = sphi 0, %s29
    %s21 = sphi 0, %s18
    %s22 = sphi 0, %s19
    %s23 = sphi 0, %s20
    %s24 = sphi 0, %s21
    %s25 = sphi 0, %s22
    %s26 = sphi 0, %s23
    %s40 = sphi 0, %s42
    %s43 = sphi 0, %s40
    %s44 = sphi 0, %s43
    %s60 = sphi 0, %s44
    %s68 = sphi 0, %s70
    %s71 = sphi 0, %s68
    %s72 = sphi 0, %s71
    %s88 = sphi 0, %s72
    %s94 = sphi 0, %s96
    %s97 = sphi 0, %s94
    %s98 = sphi 0, %s97
    %s114 = sphi 0, %s98
    %s118 = sphi 0, %s118
    %s120 = sphi 0, %s118
    %s121 = sphi 0, %s120
    %s135 = sphi 0, %s121
    %s139 = sphi 0, %s139
    %s141 = sphi 0, %s139
    %s142 = sphi 0, %s141
    %s156 = sphi 0, %s142
    %s164 = sphi 0, %s166
    %s167 = sphi 0, %s164
    %s168 = sphi 0, %s167
    %s184 = sphi 0, %s168
  $region4: #{partial_model_forward.18} parent=0 // loop_header_branch
    %14 = sbr.rel (%p12) target = $region8
  $region5: #{partial_model_forward.18} parent=0 // loop_body
    %s16 = ssub.s32 %s11, 1
    %s17 = ssub.s32 %s11, 2
    %s27 = sadd.s32 1, %s20
    %p28 = scmp.ge.s32.totalorder %s27, 1
    %s29 = scalar_select %p28, 0, %s27
    %s30 = sadd.s32 1, %s19
    %s31 = scalar_select %p28, %s30, %s19
    %p32 = scmp.ge.s32.totalorder %s31, 1
    %s33 = scalar_select %p32, 0, %s31
    %s34 = sadd.s32 1, %s18
    %s35 = scalar_select %p32, %s34, %s18
    %p36 = scmp.ge.s32.totalorder %s35, 2
    %s37 = scalar_select %p36, 0, %s35
    %s38 = ssub.s32 %s18, %s37
    %p39 = scmp.eq.s32.totalorder %s38, 0
    %s41 = sadd.s32 %s40, 1
    %s42 = scalar_select %p39, %s40, %s41
    %p45 = pneg %p39
    %p46 = scmp.eq.s32.totalorder %s11, 1
    %p47 = por %p45, %p46
    %p48 = scmp.ne.s32.totalorder %s40, %s43
    %p49 = scmp.eq.s32.totalorder %s11, 0
    %p50 = por %p48, %p49
    %p51 = scmp.ne.s32.totalorder %s40, %s43
    %p52 = scmp.eq.s32.totalorder %s16, 1
    %p53 = por %p51, %p52
    %p54 = scmp.ne.s32.totalorder %s43, %s44
    %p55 = scmp.eq.s32.totalorder %s16, 0
    %p56 = por %p54, %p55
    %p57 = scmp.ne.s32.totalorder %s43, %s44
    %p58 = scmp.eq.s32.totalorder %s17, 1
    %p59 = por %p57, %p58
    %p61 = scmp.ne.s32.totalorder %s44, %s60
    %p62 = scmp.eq.s32.totalorder %s17, 0
    %p63 = por %p61, %p62
    %s64 = ssub.s32 %s20, %s29
    %s65 = ssub.s32 %s19, %s33
    %s66 = sor.u32 %s64, %s65
    %p67 = scmp.eq.s32.totalorder %s66, 0
    %s69 = sadd.s32 %s68, 1
    %s70 = scalar_select %p67, %s68, %s69
    %p73 = pneg %p67
    %p74 = scmp.eq.s32.totalorder %s11, 1
    %p75 = por %p73, %p74
    %p76 = scmp.ne.s32.totalorder %s68, %s71
    %p77 = scmp.eq.s32.totalorder %s11, 0
    %p78 = por %p76, %p77
    %p79 = scmp.ne.s32.totalorder %s68, %s71
    %p80 = scmp.eq.s32.totalorder %s16, 1
    %p81 = por %p79, %p80
    %p82 = scmp.ne.s32.totalorder %s71, %s72
    %p83 = scmp.eq.s32.totalorder %s16, 0
    %p84 = por %p82, %p83
    %p85 = scmp.ne.s32.totalorder %s71, %s72
    %p86 = scmp.eq.s32.totalorder %s17, 1
    %p87 = por %p85, %p86
    %p89 = scmp.ne.s32.totalorder %s72, %s88
    %p90 = scmp.eq.s32.totalorder %s17, 0
    %p91 = por %p89, %p90
    %s92 = ssub.s32 %s19, %s33
    %p93 = scmp.eq.s32.totalorder %s92, 0
    %s95 = sadd.s32 %s94, 1
    %s96 = scalar_select %p93, %s94, %s95
    %p99 = pneg %p93
    %p100 = scmp.eq.s32.totalorder %s11, 1
    %p101 = por %p99, %p100
    %p102 = scmp.ne.s32.totalorder %s94, %s97
    %p103 = scmp.eq.s32.totalorder %s11, 0
    %p104 = por %p102, %p103
    %p105 = scmp.ne.s32.totalorder %s94, %s97
    %p106 = scmp.eq.s32.totalorder %s16, 1
    %p107 = por %p105, %p106
    %p108 = scmp.ne.s32.totalorder %s97, %s98
    %p109 = scmp.eq.s32.totalorder %s16, 0
    %p110 = por %p108, %p109
    %p111 = scmp.ne.s32.totalorder %s97, %s98
    %p112 = scmp.eq.s32.totalorder %s17, 1
    %p113 = por %p111, %p112
    %p115 = scmp.ne.s32.totalorder %s98, %s114
    %p116 = scmp.eq.s32.totalorder %s17, 0
    %p117 = por %p115, %p116
    %s119 = sadd.s32 %s118, 1
    %p122 = scmp.eq.s32.totalorder %s11, 1
    %p123 = scmp.ne.s32.totalorder %s118, %s120
    %p124 = scmp.eq.s32.totalorder %s11, 0
    %p125 = por %p123, %p124
    %p126 = scmp.ne.s32.totalorder %s118, %s120
    %p127 = scmp.eq.s32.totalorder %s16, 1
    %p128 = por %p126, %p127
    %p129 = scmp.ne.s32.totalorder %s120, %s121
    %p130 = scmp.eq.s32.totalorder %s16, 0
    %p131 = por %p129, %p130
    %p132 = scmp.ne.s32.totalorder %s120, %s121
    %p133 = scmp.eq.s32.totalorder %s17, 1
    %p134 = por %p132, %p133
    %p136 = scmp.ne.s32.totalorder %s121, %s135
    %p137 = scmp.eq.s32.totalorder %s17, 0
    %p138 = por %p136, %p137
    %s140 = sadd.s32 %s139, 1
    %p143 = scmp.eq.s32.totalorder %s11, 1
    %p144 = scmp.ne.s32.totalorder %s139, %s141
    %p145 = scmp.eq.s32.totalorder %s11, 0
    %p146 = por %p144, %p145
    %p147 = scmp.ne.s32.totalorder %s139, %s141
    %p148 = scmp.eq.s32.totalorder %s16, 1
    %p149 = por %p147, %p148
    %p150 = scmp.ne.s32.totalorder %s141, %s142
    %p151 = scmp.eq.s32.totalorder %s16, 0
    %p152 = por %p150, %p151
    %p153 = scmp.ne.s32.totalorder %s141, %s142
    %p154 = scmp.eq.s32.totalorder %s17, 1
    %p155 = por %p153, %p154
    %p157 = scmp.ne.s32.totalorder %s142, %s156
    %p158 = scmp.eq.s32.totalorder %s17, 0
    %p159 = por %p157, %p158
    %s160 = ssub.s32 %s18, %s37
    %s161 = ssub.s32 %s19, %s33
    %s162 = sor.u32 %s160, %s161
    %p163 = scmp.eq.s32.totalorder %s162, 0
    %s165 = sadd.s32 %s164, 1
    %s166 = scalar_select %p163, %s164, %s165
    %p169 = pneg %p163
    %p170 = scmp.eq.s32.totalorder %s11, 1
    %p171 = por %p169, %p170
    %p172 = scmp.ne.s32.totalorder %s164, %s167
    %p173 = scmp.eq.s32.totalorder %s11, 0
    %p174 = por %p172, %p173
    %p175 = scmp.ne.s32.totalorder %s164, %s167
    %p176 = scmp.eq.s32.totalorder %s16, 1
    %p177 = por %p175, %p176
    %p178 = scmp.ne.s32.totalorder %s167, %s168
    %p179 = scmp.eq.s32.totalorder %s16, 0
    %p180 = por %p178, %p179
    %p181 = scmp.ne.s32.totalorder %s167, %s168
    %p182 = scmp.eq.s32.totalorder %s17, 1
    %p183 = por %p181, %p182
    %p185 = scmp.ne.s32.totalorder %s168, %s184
    %p186 = scmp.eq.s32.totalorder %s17, 0
    %p187 = por %p185, %p186
    %p188 = scmp.le.s32.totalorder 1, %s11
    %p189 = scmp.lt.s32.totalorder %s11, 3
    %p190 = pnand %p188, %p189
    %p191 = pneg %p190
    // Predicated region
    $region9: #{partial_model_forward.18} parent=5 // pred_check
      _
    $region10: #{partial_model_forward.18} parent=5 // pred_check_branch
      %193 = sbr.rel (%p190) target = $region12
    $region11: #{partial_model_forward.18} parent=5 // pred_region
      %s194 = ssub.s32 %s11, 1
      // Predicated region
      $region13: #{partial_model_forward.18} parent=11 // pred_check
        %p195 = pneg %p84
      $region14: #{partial_model_forward.18} parent=11 // pred_check_branch
        %197 = sbr.rel (%p195) target = $region16
      $region15: #{partial_model_forward.18} parent=11 // pred_region
        %s198 = smul.u32 4, %s23
        %p199 = scmp.lt.s32.totalorder %s198, 3
        %s200 = scalar_select %p199, %s198, 3
        %p201 = scmp.lt.s32.totalorder %s22, 0
        %s202 = scalar_select %p201, %s22, 0
        %s203 = sadd.s32 %s202, %s200
        %s204 = smul.addr %s203, 4
        %s205 = scalar_lea.vmem %s1, %s204
        %s206 = smul.u32 4, %s23
      $region16: #{partial_model_forward.18} parent=11 // pred_fallthru
        _
      // Predicated region
      $region17: #{partial_model_forward.18} parent=11 // pred_check
        %p207 = pneg %p110
      $region18: #{partial_model_forward.18} parent=11 // pred_check_branch
        %209 = sbr.rel (%p207) target = $region20
      $region19: #{partial_model_forward.18} parent=11 // pred_region
        %p210 = scmp.lt.s32.totalorder %s22, 0
        %s211 = scalar_select %p210, %s22, 0
        %s212 = scalar_lea.vmem %s2, %s211
      $region20: #{partial_model_forward.18} parent=11 // pred_fallthru
        _
      // Predicated region
      $region21: #{partial_model_forward.18} parent=11 // pred_check
        %p213 = pneg %p131
      $region22: #{partial_model_forward.18} parent=11 // pred_check_branch
        %215 = sbr.rel (%p213) target = $region24
      $region23: #{partial_model_forward.18} parent=11 // pred_region
        _
      $region24: #{partial_model_forward.18} parent=11 // pred_fallthru
        _
      // Predicated region
      $region25: #{partial_model_forward.18} parent=11 // pred_check
        %p216 = pneg %p152
      $region26: #{partial_model_forward.18} parent=11 // pred_check_branch
        %218 = sbr.rel (%p216) target = $region28
      $region27: #{partial_model_forward.18} parent=11 // pred_region
        _
      $region28: #{partial_model_forward.18} parent=11 // pred_fallthru
        _
    $region12: #{partial_model_forward.18} parent=5 // pred_fallthru
      _
    %p219 = scmp.lt.s32.totalorder %s11, 2
    // Predicated region
    $region29: #{partial_model_forward.18} parent=5 // pred_check
      %p220 = pneg %p219
    $region30: #{partial_model_forward.18} parent=5 // pred_check_branch
      %222 = sbr.rel (%p220) target = $region32
    $region31: #{partial_model_forward.18} parent=5 // pred_region
      // Predicated region
      $region33: #{partial_model_forward.18} parent=31 // pred_check
        %p223 = pneg %p50
      $region34: #{partial_model_forward.18} parent=31 // pred_check_branch
        %225 = sbr.rel (%p223) target = $region36
      $region35: #{partial_model_forward.18} parent=31 // pred_region
        %p226 = scmp.lt.s32.totalorder %s18, 1
        %s227 = scalar_select %p226, %s18, 1
        %s228 = smul.addr %s227, 4
        %s229 = scalar_lea.vmem %s0, %s228
      $region36: #{partial_model_forward.18} parent=31 // pred_fallthru
        _
    $region32: #{partial_model_forward.18} parent=5 // pred_fallthru
      _
    %p230 = scmp.le.s32.totalorder 1, %s11
    %p231 = scmp.lt.s32.totalorder %s11, 3
    %p232 = pnand %p230, %p231
    %p233 = pneg %p232
    // Predicated region
    $region37: #{partial_model_forward.18} parent=5 // pred_check
      _
    $region38: #{partial_model_forward.18} parent=5 // pred_check_branch
      %235 = sbr.rel (%p232) target = $region40
    $region39: #{partial_model_forward.18} parent=5 // pred_region
      %s236 = ssub.s32 %s11, 1
      %p237 = scmp.lt.s32.totalorder %s21, 1
      %s238 = scalar_select %p237, %s21, 1
      %s239 = smul.addr %s238, 4
      %s240 = scalar_lea.vmem %s0, %s239
      %p241 = pneg %p56
      %p242 = pneg %p53
      %s243 = smul.u32 4, %s23
      %p244 = scmp.lt.s32.totalorder %s243, 3
      %s245 = scalar_select %p244, %s243, 3
      %p246 = scmp.lt.s32.totalorder %s22, 0
      %s247 = scalar_select %p246, %s22, 0
      %s248 = sadd.s32 %s247, %s245
      %s249 = smul.addr %s248, 4
      %s250 = scalar_lea.vmem %s1, %s249
      %p251 = pneg %p84
      %p252 = pneg %p81
      %p253 = scmp.lt.s32.totalorder %s22, 0
      %s254 = scalar_select %p253, %s22, 0
      %s255 = scalar_lea.vmem %s2, %s254
      %p256 = pneg %p110
      %p257 = pneg %p107
      %p258 = pneg %p131
      %p259 = pneg %p128
      %p260 = pneg %p152
      %p261 = pneg %p149
      %p262 = pneg %p180
      %p263 = pneg %p177
      %p264 = scmp.lt.s32.totalorder %s21, 1
      %s265 = scalar_select %p264, %s21, 1
      %p266 = scmp.lt.s32.totalorder %s22, 0
      %s267 = scalar_select %p266, %s22, 0
      %s268 = sadd.s32 %s267, %s265
      %s269 = smul.addr %s268, 4
      %s270 = scalar_lea.vmem %s5, %s269
      %p271 = scmp.lt.s32.totalorder %s21, 1
      %s272 = scalar_select %p271, %s21, 1
      %s273 = smul.addr %s272, 4
      %s274 = scalar_lea.vmem %s0, %s273
      %s275 = smul.u32 4, %s23
      %p276 = scmp.lt.s32.totalorder %s275, 3
      %s277 = scalar_select %p276, %s275, 3
      %p278 = scmp.lt.s32.totalorder %s22, 0
      %s279 = scalar_select %p278, %s22, 0
      %s280 = sadd.s32 %s279, %s277
      %s281 = smul.addr %s280, 4
      %s282 = scalar_lea.vmem %s1, %s281
      %s283 = smul.u32 4, %s23
      %p284 = scmp.lt.s32.totalorder %s22, 0
      %s285 = scalar_select %p284, %s22, 0
      %s286 = scalar_lea.vmem %s2, %s285
      %p287 = scmp.lt.s32.totalorder %s21, 1
      %s288 = scalar_select %p287, %s21, 1
      %p289 = scmp.lt.s32.totalorder %s22, 0
      %s290 = scalar_select %p289, %s22, 0
      %s291 = sadd.s32 %s290, %s288
      %s292 = smul.addr %s291, 4
      %s293 = scalar_lea.vmem %s5, %s292
      %p295 = scmp.eq.s32.totalorder %s23, 0
      // Predicated region
      $region41: #{partial_model_forward.18} parent=39 // pred_check
        %p296 = pneg %p295
      $region42: #{partial_model_forward.18} parent=39 // pred_check_branch
        %298 = sbr.rel (%p296) target = $region44
      $region43: #{partial_model_forward.18} parent=39 // pred_region
        %vm299 = vcmask 523264
        %300 = vst.msk [vmem:[#allocation2] sm:$0xff] %vm299, 0.0
      $region44: #{partial_model_forward.18} parent=39 // pred_fallthru
        _
      %p301 = scmp.eq.s32.totalorder %s22, 0
      // Predicated region
      $region45: #{partial_model_forward.18} parent=39 // pred_check
        %p302 = pneg %p301
      $region46: #{partial_model_forward.18} parent=39 // pred_check_branch
        %304 = sbr.rel (%p302) target = $region48
      $region47: #{partial_model_forward.18} parent=39 // pred_region
        %v305 = vld [vmem:[%s274] sm:$0xf]
        %v306 = vunpack.c.l.bf16 %v305
        %vm307 = vcmask 261120
        %v308 = vsel %vm307, %v306, 0.0
        %309 = vadd.xlane.f32.xlu0 %v308
        %v310 = vpop.xlane.xlu0 %309
        %v311 = vrcp.pop 32.0
        %v312 = vmul.f32 %v310, %v311
        %v313 = vsub.f32 %v306, %v312
        %v314 = vmul.f32 %v313, %v313
        %v315 = vsel %vm307, %v314, 0.0
        %316 = vadd.xlane.f32.xlu0 %v315
        %v317 = vpop.xlane.xlu0 %316
        %v318 = vmul.f32 %v317, %v311
        %v319 = vadd.f32 %v318, 1e-05
        %v320 = vrsqrt.pop %v319
        %v321 = vmul.f32 %v313, %v320
        %v322 = vld [vmem:[%s3] sm:$0x1]
        %v324 = vlaneseq
        %v325 = vshrl.u32 %v324, 7
        %v326 = vsub.s32 0, %v325
        %v327 = vrot.slane %v322, %v326
        %v329 = vmul.f32 %v321, %v327
        %v330 = vld [vmem:[%s4] sm:$0x1]
        %v332 = vlaneseq
        %v333 = vshrl.u32 %v332, 7
        %v334 = vsub.s32 0, %v333
        %v335 = vrot.slane %v330, %v334
        %v337 = vadd.f32 %v329, %v335
        %v338 = vpack.c.bf16 %v337, %v337
        %vm339 = vcmask 257024
        %340 = vst.msk [vmem:[#allocation3] sm:$0xf] %vm339, %v338
      $region48: #{partial_model_forward.18} parent=39 // pred_fallthru
        _
      %v341 = vld [vmem:[#allocation3] sm:$0xf]
      %v342 = vld [vmem:[#allocation2] sm:$0xff]
      %v343 = vld [vmem:[%s282] sm:$0xf]
      %v344 = vld [vmem:[%s282 + $0x4] sm:$0xf]
      %v345 = vld [vmem:[%s282 + $0x8] sm:$0xf]
      %v346 = vld [vmem:[%s282 + $0xc] sm:$0xf]
      %v351 = vunpack.c.l.b16 %v343
      %v352 = vunpack.c.l.b16 %v344
      %v353 = vunpack.c.l.b16 %v345
      %v354 = vunpack.c.l.b16 %v346
      %v355 = vpack.c.b16 %v352, %v351
      %v356 = vpack.c.b16 %v354, %v353
      %vm359 = vcmask 261120
      %v361 = vsel %vm359, %v341, 0
      %363 = vmatprep.subr.bf16.mxu0 0
      %364 = vmatpush1.bf16.msra.mxu0 %v355
      %365 = vmatprep.subr.bf16.mxu0 0
      %366 = vmatpush1.bf16.msra.mxu0 %v356
      %367 = vmatprep.subr.bf16.mxu0 0
      %368 = vmatpush1.bf16.msra.mxu0 0
      %369 = vmatprep.subr.bf16.mxu0 0
      %370 = vmatpush1.bf16.msra.mxu0 0
      %371 = vmatprep.subr.bf16.mxu0 0
      %372 = vmatpush1.bf16.msra.mxu0 0
      %373 = vmatprep.subr.bf16.mxu0 0
      %374 = vmatpush1.bf16.msra.mxu0 0
      %375 = vmatprep.subr.bf16.mxu0 0
      %376 = vmatpush1.bf16.msra.mxu0 0
      %377 = vmatprep.subr.bf16.mxu0 0
      %378 = vmatpush1.bf16.msra.mxu0 0
      %379 = vmatprep.subr.bf16.mxu0 0
      %380 = vmatpush1.bf16.msra.mxu0 0
      %381 = vmatprep.subr.bf16.mxu0 0
      %382 = vmatpush1.bf16.msra.mxu0 0
      %383 = vmatprep.subr.bf16.mxu0 0
      %384 = vmatpush1.bf16.msra.mxu0 0
      %385 = vmatprep.subr.bf16.mxu0 0
      %386 = vmatpush1.bf16.msra.mxu0 0
      %387 = vmatprep.subr.bf16.mxu0 0
      %388 = vmatpush1.bf16.msra.mxu0 0
      %389 = vmatprep.subr.bf16.mxu0 0
      %390 = vmatpush1.bf16.msra.mxu0 0
      %391 = vmatprep.subr.bf16.mxu0 0
      %392 = vmatpush1.bf16.msra.mxu0 0
      %393 = vmatprep.subr.bf16.mxu0 0
      %394 = vmatpush1.bf16.msra.mxu0 0
      %395 = vmatprep.mubr.bf16.mxu0 0
      %396 = vmatmul.mubr.bf16.gmra.mrb[0].mxu0 %v361
      %v397 = vpop.f32.mrb[0].mxu0
      %v398 = vadd.f32 0.0, %v397
      %v399 = vpop.f32.mrb[0].mxu0
      %v400 = vpop.f32.mrb[0].mxu0
      %v401 = vpop.f32.mrb[0].mxu0
      %402 = vdwg.mxu0
      %v403 = vadd.f32 %v342, %v398
      %vm404 = vcmask 523264
      %405 = vst.msk [vmem:[#allocation2] sm:$0xff] %vm404, %v403
      // Predicated region
      $region49: #{partial_model_forward.18} parent=39 // pred_check
        %p406 = pneg %p295
      $region50: #{partial_model_forward.18} parent=39 // pred_check_branch
        %408 = sbr.rel (%p406) target = $region52
      $region51: #{partial_model_forward.18} parent=39 // pred_region
        %v409 = vld [vmem:[#allocation2] sm:$0xff]
        %v410 = vld [vmem:[%s286] sm:$0x1]
        %v412 = vlaneseq
        %v413 = vshrl.u32 %v412, 7
        %v414 = vsub.s32 0, %v413
        %v415 = vrot.slane %v410, %v414
        %v417 = vadd.f32 %v409, %v415
        %v418 = vmul.f32 %v417, 1.702
        %v419 = vxor.u32 %v418, 2147483648
        %v420 = vmul.f32 %v419, 1.442695
        %v421 = vpow.pop %v420
        %v422 = vadd.f32 %v421, 1.0
        %v423 = vrcp.pop %v422
        %v424 = vmul.f32 1.0, %v423
        %v425 = vmul.f32 %v417, %v424
        %v426 = vpack.c.bf16 %v425, %v425
        %vm427 = vcmask 519168
        %428 = vst.msk [vmem:[%s293] sm:$0xf] %vm427, %v426
      $region52: #{partial_model_forward.18} parent=39 // pred_fallthru
        _
      %p429 = scmp.lt.s32.totalorder %s21, 1
      %s430 = scalar_select %p429, %s21, 1
      %p431 = scmp.lt.s32.totalorder %s22, 0
      %s432 = scalar_select %p431, %s22, 0
      %s433 = sadd.s32 %s432, %s430
      %s434 = smul.addr %s433, 4
      %s435 = scalar_lea.vmem %s5, %s434
      // Predicated region
      $region53: #{partial_model_forward.18} parent=39 // pred_check
        %p436 = pneg %p177
      $region54: #{partial_model_forward.18} parent=39 // pred_check_branch
        %438 = sbr.rel (%p436) target = $region56
      $region55: #{partial_model_forward.18} parent=39 // pred_region
        _
      $region56: #{partial_model_forward.18} parent=39 // pred_fallthru
        _
    $region40: #{partial_model_forward.18} parent=5 // pred_fallthru
      _
    %p439 = scmp.le.s32.totalorder 2, %s11
    // Predicated region
    $region57: #{partial_model_forward.18} parent=5 // pred_check
      %p440 = pneg %p439
    $region58: #{partial_model_forward.18} parent=5 // pred_check_branch
      %442 = sbr.rel (%p440) target = $region60
    $region59: #{partial_model_forward.18} parent=5 // pred_region
      %s443 = ssub.s32 %s11, 2
      // Predicated region
      $region61: #{partial_model_forward.18} parent=59 // pred_check
        %p444 = pneg %p183
      $region62: #{partial_model_forward.18} parent=59 // pred_check_branch
        %446 = sbr.rel (%p444) target = $region64
      $region63: #{partial_model_forward.18} parent=59 // pred_region
        %p447 = scmp.lt.s32.totalorder %s24, 1
        %s448 = scalar_select %p447, %s24, 1
        %p449 = scmp.lt.s32.totalorder %s25, 0
        %s450 = scalar_select %p449, %s25, 0
        %s451 = sadd.s32 %s450, %s448
        %s452 = smul.addr %s451, 4
        %s453 = scalar_lea.vmem %s5, %s452
      $region64: #{partial_model_forward.18} parent=59 // pred_fallthru
        _
    $region60: #{partial_model_forward.18} parent=5 // pred_fallthru
      _
  $region6: #{partial_model_forward.18} parent=0 // loop_footer
    %s15 = sadd.s32 1, %s11
  $region7: #{partial_model_forward.18} parent=0 // loop_footer_branch
    %10 = sbr.rel target = $region3
  $region8: #{partial_model_forward.18} parent=0 // loop_exit
    _

// kernel: partial_model_forward.19
$region0: #{partial_model_forward.19}
  #allocation0 [shape = 'u32[]', space=smem, size = 0x4, offset = 0x4, fixed_abs, tag = 'smem constant byte address 0x4 - core index']
  #allocation1 [shape = 'u32[144,128]{1,0:T(1,128)}', space=vmem, size = 0x12000, scoped, tag = 'internal scratch']
  #allocation2 [shape = 'f32[8,32]{1,0:T(8,128)}', space=vmem, size = 0x1000, scoped, tag = 'scratch operand']
  %s0 = inlined_call_operand.vmem [shape: bf16[16,64], index: 0, kind: input, shape index: {}]
  %s1 = inlined_call_operand.vmem [shape: bf16[64,32], index: 1, kind: input, shape index: {}]
  %s2 = inlined_call_operand.vmem [shape: f32[1,32], index: 2, kind: input, shape index: {}]
  %s3 = inlined_call_operand.vmem [shape: bf16[16,32], index: 3, kind: input, shape index: {}]
  %s4 = inlined_call_operand.vmem [shape: bf16[16,32], index: 4, kind: output, shape index: {}]
  %s5 = sld [smem:[#allocation0]]
  $region57: #{partial_model_forward.19} parent=0
    _
  %s7 = ssub.s32 1, %s5
  %s8 = scalar_select 0, %s7, %s5
  loop: start=0, step=1, limit=4
  $region2: #{partial_model_forward.19} parent=0 // loop_pre_header
    _
  $region3: #{partial_model_forward.19} parent=0 // loop_header
    %s10 = sphi 0, %s14
    %p11 = scmp.ge.s32.totalorder %s10, 4
    %s17 = sphi 0, %s36
    %s18 = sphi 0, %s32
    %s19 = sphi 0, %s28
    %s20 = sphi 0, %s17
    %s21 = sphi 0, %s18
    %s22 = sphi 0, %s19
    %s23 = sphi 0, %s20
    %s24 = sphi 0, %s21
    %s25 = sphi 0, %s22
    %s41 = sphi 0, %s43
    %s44 = sphi 0, %s41
    %s45 = sphi 0, %s44
    %s61 = sphi 0, %s45
    %s69 = sphi 0, %s71
    %s72 = sphi 0, %s69
    %s73 = sphi 0, %s72
    %s89 = sphi 0, %s73
    %s95 = sphi 0, %s97
    %s98 = sphi 0, %s95
    %s99 = sphi 0, %s98
    %s115 = sphi 0, %s99
    %s123 = sphi 0, %s125
    %s126 = sphi 0, %s123
    %s127 = sphi 0, %s126
    %s143 = sphi 0, %s127
    %s151 = sphi 0, %s153
    %s154 = sphi 0, %s151
    %s155 = sphi 0, %s154
    %s171 = sphi 0, %s155
  $region4: #{partial_model_forward.19} parent=0 // loop_header_branch
    %13 = sbr.rel (%p11) target = $region8
  $region5: #{partial_model_forward.19} parent=0 // loop_body
    %s15 = ssub.s32 %s10, 1
    %s16 = ssub.s32 %s10, 2
    %s26 = sadd.s32 1, %s19
    %p27 = scmp.ge.s32.totalorder %s26, 1
    %s28 = scalar_select %p27, 0, %s26
    %s29 = sadd.s32 1, %s18
    %s30 = scalar_select %p27, %s29, %s18
    %p31 = scmp.ge.s32.totalorder %s30, 1
    %s32 = scalar_select %p31, 0, %s30
    %s33 = sadd.s32 1, %s17
    %s34 = scalar_select %p31, %s33, %s17
    %p35 = scmp.ge.s32.totalorder %s34, 2
    %s36 = scalar_select %p35, 0, %s34
    %s37 = ssub.s32 %s17, %s36
    %s38 = ssub.s32 %s19, %s28
    %s39 = sor.u32 %s37, %s38
    %p40 = scmp.eq.s32.totalorder %s39, 0
    %s42 = sadd.s32 %s41, 1
    %s43 = scalar_select %p40, %s41, %s42
    %p46 = pneg %p40
    %p47 = scmp.eq.s32.totalorder %s10, 1
    %p48 = por %p46, %p47
    %p49 = scmp.ne.s32.totalorder %s41, %s44
    %p50 = scmp.eq.s32.totalorder %s10, 0
    %p51 = por %p49, %p50
    %p52 = scmp.ne.s32.totalorder %s41, %s44
    %p53 = scmp.eq.s32.totalorder %s15, 1
    %p54 = por %p52, %p53
    %p55 = scmp.ne.s32.totalorder %s44, %s45
    %p56 = scmp.eq.s32.totalorder %s15, 0
    %p57 = por %p55, %p56
    %p58 = scmp.ne.s32.totalorder %s44, %s45
    %p59 = scmp.eq.s32.totalorder %s16, 1
    %p60 = por %p58, %p59
    %p62 = scmp.ne.s32.totalorder %s45, %s61
    %p63 = scmp.eq.s32.totalorder %s16, 0
    %p64 = por %p62, %p63
    %s65 = ssub.s32 %s19, %s28
    %s66 = ssub.s32 %s18, %s32
    %s67 = sor.u32 %s65, %s66
    %p68 = scmp.eq.s32.totalorder %s67, 0
    %s70 = sadd.s32 %s69, 1
    %s71 = scalar_select %p68, %s69, %s70
    %p74 = pneg %p68
    %p75 = scmp.eq.s32.totalorder %s10, 1
    %p76 = por %p74, %p75
    %p77 = scmp.ne.s32.totalorder %s69, %s72
    %p78 = scmp.eq.s32.totalorder %s10, 0
    %p79 = por %p77, %p78
    %p80 = scmp.ne.s32.totalorder %s69, %s72
    %p81 = scmp.eq.s32.totalorder %s15, 1
    %p82 = por %p80, %p81
    %p83 = scmp.ne.s32.totalorder %s72, %s73
    %p84 = scmp.eq.s32.totalorder %s15, 0
    %p85 = por %p83, %p84
    %p86 = scmp.ne.s32.totalorder %s72, %s73
    %p87 = scmp.eq.s32.totalorder %s16, 1
    %p88 = por %p86, %p87
    %p90 = scmp.ne.s32.totalorder %s73, %s89
    %p91 = scmp.eq.s32.totalorder %s16, 0
    %p92 = por %p90, %p91
    %s93 = ssub.s32 %s18, %s32
    %p94 = scmp.eq.s32.totalorder %s93, 0
    %s96 = sadd.s32 %s95, 1
    %s97 = scalar_select %p94, %s95, %s96
    %p100 = pneg %p94
    %p101 = scmp.eq.s32.totalorder %s10, 1
    %p102 = por %p100, %p101
    %p103 = scmp.ne.s32.totalorder %s95, %s98
    %p104 = scmp.eq.s32.totalorder %s10, 0
    %p105 = por %p103, %p104
    %p106 = scmp.ne.s32.totalorder %s95, %s98
    %p107 = scmp.eq.s32.totalorder %s15, 1
    %p108 = por %p106, %p107
    %p109 = scmp.ne.s32.totalorder %s98, %s99
    %p110 = scmp.eq.s32.totalorder %s15, 0
    %p111 = por %p109, %p110
    %p112 = scmp.ne.s32.totalorder %s98, %s99
    %p113 = scmp.eq.s32.totalorder %s16, 1
    %p114 = por %p112, %p113
    %p116 = scmp.ne.s32.totalorder %s99, %s115
    %p117 = scmp.eq.s32.totalorder %s16, 0
    %p118 = por %p116, %p117
    %s119 = ssub.s32 %s17, %s36
    %s120 = ssub.s32 %s18, %s32
    %s121 = sor.u32 %s119, %s120
    %p122 = scmp.eq.s32.totalorder %s121, 0
    %s124 = sadd.s32 %s123, 1
    %s125 = scalar_select %p122, %s123, %s124
    %p128 = pneg %p122
    %p129 = scmp.eq.s32.totalorder %s10, 1
    %p130 = por %p128, %p129
    %p131 = scmp.ne.s32.totalorder %s123, %s126
    %p132 = scmp.eq.s32.totalorder %s10, 0
    %p133 = por %p131, %p132
    %p134 = scmp.ne.s32.totalorder %s123, %s126
    %p135 = scmp.eq.s32.totalorder %s15, 1
    %p136 = por %p134, %p135
    %p137 = scmp.ne.s32.totalorder %s126, %s127
    %p138 = scmp.eq.s32.totalorder %s15, 0
    %p139 = por %p137, %p138
    %p140 = scmp.ne.s32.totalorder %s126, %s127
    %p141 = scmp.eq.s32.totalorder %s16, 1
    %p142 = por %p140, %p141
    %p144 = scmp.ne.s32.totalorder %s127, %s143
    %p145 = scmp.eq.s32.totalorder %s16, 0
    %p146 = por %p144, %p145
    %s147 = ssub.s32 %s17, %s36
    %s148 = ssub.s32 %s18, %s32
    %s149 = sor.u32 %s147, %s148
    %p150 = scmp.eq.s32.totalorder %s149, 0
    %s152 = sadd.s32 %s151, 1
    %s153 = scalar_select %p150, %s151, %s152
    %p156 = pneg %p150
    %p157 = scmp.eq.s32.totalorder %s10, 1
    %p158 = por %p156, %p157
    %p159 = scmp.ne.s32.totalorder %s151, %s154
    %p160 = scmp.eq.s32.totalorder %s10, 0
    %p161 = por %p159, %p160
    %p162 = scmp.ne.s32.totalorder %s151, %s154
    %p163 = scmp.eq.s32.totalorder %s15, 1
    %p164 = por %p162, %p163
    %p165 = scmp.ne.s32.totalorder %s154, %s155
    %p166 = scmp.eq.s32.totalorder %s15, 0
    %p167 = por %p165, %p166
    %p168 = scmp.ne.s32.totalorder %s154, %s155
    %p169 = scmp.eq.s32.totalorder %s16, 1
    %p170 = por %p168, %p169
    %p172 = scmp.ne.s32.totalorder %s155, %s171
    %p173 = scmp.eq.s32.totalorder %s16, 0
    %p174 = por %p172, %p173
    %p175 = scmp.le.s32.totalorder 1, %s10
    %p176 = scmp.lt.s32.totalorder %s10, 3
    %p177 = pnand %p175, %p176
    %p178 = pneg %p177
    // Predicated region
    $region9: #{partial_model_forward.19} parent=5 // pred_check
      _
    $region10: #{partial_model_forward.19} parent=5 // pred_check_branch
      %180 = sbr.rel (%p177) target = $region12
    $region11: #{partial_model_forward.19} parent=5 // pred_region
      %s181 = ssub.s32 %s10, 1
      // Predicated region
      $region13: #{partial_model_forward.19} parent=11 // pred_check
        %p182 = pneg %p85
      $region14: #{partial_model_forward.19} parent=11 // pred_check_branch
        %184 = sbr.rel (%p182) target = $region16
      $region15: #{partial_model_forward.19} parent=11 // pred_region
        %s185 = smul.u32 8, %s22
        %p186 = scmp.lt.s32.totalorder %s185, 7
        %s187 = scalar_select %p186, %s185, 7
        %p188 = scmp.lt.s32.totalorder %s21, 0
        %s189 = scalar_select %p188, %s21, 0
        %s190 = sadd.s32 %s189, %s187
        %s191 = smul.addr %s190, 4
        %s192 = scalar_lea.vmem %s1, %s191
        %s193 = smul.u32 8, %s22
      $region16: #{partial_model_forward.19} parent=11 // pred_fallthru
        _
      // Predicated region
      $region17: #{partial_model_forward.19} parent=11 // pred_check
        %p194 = pneg %p111
      $region18: #{partial_model_forward.19} parent=11 // pred_check_branch
        %196 = sbr.rel (%p194) target = $region20
      $region19: #{partial_model_forward.19} parent=11 // pred_region
        %p197 = scmp.lt.s32.totalorder %s21, 0
        %s198 = scalar_select %p197, %s21, 0
        %s199 = scalar_lea.vmem %s2, %s198
      $region20: #{partial_model_forward.19} parent=11 // pred_fallthru
        _
    $region12: #{partial_model_forward.19} parent=5 // pred_fallthru
      _
    %p200 = scmp.lt.s32.totalorder %s10, 2
    // Predicated region
    $region21: #{partial_model_forward.19} parent=5 // pred_check
      %p201 = pneg %p200
    $region22: #{partial_model_forward.19} parent=5 // pred_check_branch
      %203 = sbr.rel (%p201) target = $region24
    $region23: #{partial_model_forward.19} parent=5 // pred_region
      // Predicated region
      $region25: #{partial_model_forward.19} parent=23 // pred_check
        %p204 = pneg %p51
      $region26: #{partial_model_forward.19} parent=23 // pred_check_branch
        %206 = sbr.rel (%p204) target = $region28
      $region27: #{partial_model_forward.19} parent=23 // pred_region
        %p207 = scmp.lt.s32.totalorder %s17, 1
        %s208 = scalar_select %p207, %s17, 1
        %p209 = scmp.lt.s32.totalorder %s19, 0
        %s210 = scalar_select %p209, %s19, 0
        %s211 = sadd.s32 %s210, %s208
        %s212 = smul.addr %s211, 4
        %s213 = scalar_lea.vmem %s0, %s212
      $region28: #{partial_model_forward.19} parent=23 // pred_fallthru
        _
      // Predicated region
      $region29: #{partial_model_forward.19} parent=23 // pred_check
        %p214 = pneg %p133
      $region30: #{partial_model_forward.19} parent=23 // pred_check_branch
        %216 = sbr.rel (%p214) target = $region32
      $region31: #{partial_model_forward.19} parent=23 // pred_region
        %p217 = scmp.lt.s32.totalorder %s17, 1
        %s218 = scalar_select %p217, %s17, 1
        %p219 = scmp.lt.s32.totalorder %s18, 0
        %s220 = scalar_select %p219, %s18, 0
        %s221 = sadd.s32 %s220, %s218
        %s222 = smul.addr %s221, 4
        %s223 = scalar_lea.vmem %s3, %s222
      $region32: #{partial_model_forward.19} parent=23 // pred_fallthru
        _
    $region24: #{partial_model_forward.19} parent=5 // pred_fallthru
      _
    %p224 = scmp.le.s32.totalorder 1, %s10
    %p225 = scmp.lt.s32.totalorder %s10, 3
    %p226 = pnand %p224, %p225
    %p227 = pneg %p226
    // Predicated region
    $region33: #{partial_model_forward.19} parent=5 // pred_check
      _
    $region34: #{partial_model_forward.19} parent=5 // pred_check_branch
      %229 = sbr.rel (%p226) target = $region36
    $region35: #{partial_model_forward.19} parent=5 // pred_region
      %s230 = ssub.s32 %s10, 1
      %p231 = scmp.lt.s32.totalorder %s20, 1
      %s232 = scalar_select %p231, %s20, 1
      %p233 = scmp.lt.s32.totalorder %s22, 0
      %s234 = scalar_select %p233, %s22, 0
      %s235 = sadd.s32 %s234, %s232
      %s236 = smul.addr %s235, 4
      %s237 = scalar_lea.vmem %s0, %s236
      %p238 = pneg %p57
      %p239 = pneg %p54
      %s240 = smul.u32 8, %s22
      %p241 = scmp.lt.s32.totalorder %s240, 7
      %s242 = scalar_select %p241, %s240, 7
      %p243 = scmp.lt.s32.totalorder %s21, 0
      %s244 = scalar_select %p243, %s21, 0
      %s245 = sadd.s32 %s244, %s242
      %s246 = smul.addr %s245, 4
      %s247 = scalar_lea.vmem %s1, %s246
      %p248 = pneg %p85
      %p249 = pneg %p82
      %p250 = scmp.lt.s32.totalorder %s21, 0
      %s251 = scalar_select %p250, %s21, 0
      %s252 = scalar_lea.vmem %s2, %s251
      %p253 = pneg %p111
      %p254 = pneg %p108
      %p255 = scmp.lt.s32.totalorder %s20, 1
      %s256 = scalar_select %p255, %s20, 1
      %p257 = scmp.lt.s32.totalorder %s21, 0
      %s258 = scalar_select %p257, %s21, 0
      %s259 = sadd.s32 %s258, %s256
      %s260 = smul.addr %s259, 4
      %s261 = scalar_lea.vmem %s3, %s260
      %p262 = pneg %p139
      %p263 = pneg %p136
      %p264 = pneg %p167
      %p265 = pneg %p164
      %p266 = scmp.lt.s32.totalorder %s20, 1
      %s267 = scalar_select %p266, %s20, 1
      %p268 = scmp.lt.s32.totalorder %s21, 0
      %s269 = scalar_select %p268, %s21, 0
      %s270 = sadd.s32 %s269, %s267
      %s271 = smul.addr %s270, 4
      %s272 = scalar_lea.vmem %s4, %s271
      %p273 = scmp.lt.s32.totalorder %s20, 1
      %s274 = scalar_select %p273, %s20, 1
      %p275 = scmp.lt.s32.totalorder %s22, 0
      %s276 = scalar_select %p275, %s22, 0
      %s277 = sadd.s32 %s276, %s274
      %s278 = smul.addr %s277, 4
      %s279 = scalar_lea.vmem %s0, %s278
      %s280 = smul.u32 8, %s22
      %p281 = scmp.lt.s32.totalorder %s280, 7
      %s282 = scalar_select %p281, %s280, 7
      %p283 = scmp.lt.s32.totalorder %s21, 0
      %s284 = scalar_select %p283, %s21, 0
      %s285 = sadd.s32 %s284, %s282
      %s286 = smul.addr %s285, 4
      %s287 = scalar_lea.vmem %s1, %s286
      %s288 = smul.u32 8, %s22
      %p289 = scmp.lt.s32.totalorder %s21, 0
      %s290 = scalar_select %p289, %s21, 0
      %s291 = scalar_lea.vmem %s2, %s290
      %p292 = scmp.lt.s32.totalorder %s20, 1
      %s293 = scalar_select %p292, %s20, 1
      %p294 = scmp.lt.s32.totalorder %s21, 0
      %s295 = scalar_select %p294, %s21, 0
      %s296 = sadd.s32 %s295, %s293
      %s297 = smul.addr %s296, 4
      %s298 = scalar_lea.vmem %s3, %s297
      %p299 = scmp.lt.s32.totalorder %s20, 1
      %s300 = scalar_select %p299, %s20, 1
      %p301 = scmp.lt.s32.totalorder %s21, 0
      %s302 = scalar_select %p301, %s21, 0
      %s303 = sadd.s32 %s302, %s300
      %s304 = smul.addr %s303, 4
      %s305 = scalar_lea.vmem %s4, %s304
      %p307 = scmp.eq.s32.totalorder %s22, 0
      // Predicated region
      $region37: #{partial_model_forward.19} parent=35 // pred_check
        %p308 = pneg %p307
      $region38: #{partial_model_forward.19} parent=35 // pred_check_branch
        %310 = sbr.rel (%p308) target = $region40
      $region39: #{partial_model_forward.19} parent=35 // pred_region
        %vm311 = vcmask 261120
        %312 = vst.msk [vmem:[#allocation2] sm:$0xff] %vm311, 0.0
      $region40: #{partial_model_forward.19} parent=35 // pred_fallthru
        _
      %v313 = vld [vmem:[%s279] sm:$0xf]
      %v314 = vld [vmem:[#allocation2] sm:$0xff]
      %v315 = vld [vmem:[%s287] sm:$0xf]
      %v316 = vld [vmem:[%s287 + $0x4] sm:$0xf]
      %v317 = vld [vmem:[%s287 + $0x8] sm:$0xf]
      %v318 = vld [vmem:[%s287 + $0xc] sm:$0xf]
      %v319 = vld [vmem:[%s287 + $0x10] sm:$0xf]
      %v320 = vld [vmem:[%s287 + $0x14] sm:$0xf]
      %v321 = vld [vmem:[%s287 + $0x18] sm:$0xf]
      %v322 = vld [vmem:[%s287 + $0x1c] sm:$0xf]
      %v331 = vunpack.c.l.b16 %v315
      %v332 = vunpack.c.l.b16 %v316
      %v333 = vunpack.c.l.b16 %v317
      %v334 = vunpack.c.l.b16 %v318
      %v335 = vunpack.c.l.b16 %v319
      %v336 = vunpack.c.l.b16 %v320
      %v337 = vunpack.c.l.b16 %v321
      %v338 = vunpack.c.l.b16 %v322
      %v339 = vpack.c.b16 %v332, %v331
      %v340 = vpack.c.b16 %v334, %v333
      %v341 = vpack.c.b16 %v336, %v335
      %v342 = vpack.c.b16 %v338, %v337
      %vm347 = vcmask 523264
      %v349 = vsel %vm347, %v313, 0
      %351 = vmatprep.subr.bf16.mxu0 0
      %352 = vmatpush1.bf16.msra.mxu0 %v339
      %353 = vmatprep.subr.bf16.mxu0 0
      %354 = vmatpush1.bf16.msra.mxu0 %v340
      %355 = vmatprep.subr.bf16.mxu0 0
      %356 = vmatpush1.bf16.msra.mxu0 %v341
      %357 = vmatprep.subr.bf16.mxu0 0
      %358 = vmatpush1.bf16.msra.mxu0 %v342
      %359 = vmatprep.subr.bf16.mxu0 0
      %360 = vmatpush1.bf16.msra.mxu0 0
      %361 = vmatprep.subr.bf16.mxu0 0
      %362 = vmatpush1.bf16.msra.mxu0 0
      %363 = vmatprep.subr.bf16.mxu0 0
      %364 = vmatpush1.bf16.msra.mxu0 0
      %365 = vmatprep.subr.bf16.mxu0 0
      %366 = vmatpush1.bf16.msra.mxu0 0
      %367 = vmatprep.subr.bf16.mxu0 0
      %368 = vmatpush1.bf16.msra.mxu0 0
      %369 = vmatprep.subr.bf16.mxu0 0
      %370 = vmatpush1.bf16.msra.mxu0 0
      %371 = vmatprep.subr.bf16.mxu0 0
      %372 = vmatpush1.bf16.msra.mxu0 0
      %373 = vmatprep.subr.bf16.mxu0 0
      %374 = vmatpush1.bf16.msra.mxu0 0
      %375 = vmatprep.subr.bf16.mxu0 0
      %376 = vmatpush1.bf16.msra.mxu0 0
      %377 = vmatprep.subr.bf16.mxu0 0
      %378 = vmatpush1.bf16.msra.mxu0 0
      %379 = vmatprep.subr.bf16.mxu0 0
      %380 = vmatpush1.bf16.msra.mxu0 0
      %381 = vmatprep.subr.bf16.mxu0 0
      %382 = vmatpush1.bf16.msra.mxu0 0
      %383 = vmatprep.mubr.bf16.mxu0 0
      %384 = vmatmul.mubr.bf16.gmra.mrb[0].mxu0 %v349
      %v385 = vpop.f32.mrb[0].mxu0
      %v386 = vadd.f32 0.0, %v385
      %v387 = vpop.f32.mrb[0].mxu0
      %v388 = vpop.f32.mrb[0].mxu0
      %v389 = vpop.f32.mrb[0].mxu0
      %390 = vdwg.mxu0
      %v391 = vadd.f32 %v314, %v386
      %vm392 = vcmask 261120
      %393 = vst.msk [vmem:[#allocation2] sm:$0xff] %vm392, %v391
      // Predicated region
      $region41: #{partial_model_forward.19} parent=35 // pred_check
        %p394 = pneg %p307
      $region42: #{partial_model_forward.19} parent=35 // pred_check_branch
        %396 = sbr.rel (%p394) target = $region44
      $region43: #{partial_model_forward.19} parent=35 // pred_region
        %v397 = vld [vmem:[#allocation2] sm:$0xff]
        %v398 = vld [vmem:[%s291] sm:$0x1]
        %v400 = vlaneseq
        %v401 = vshrl.u32 %v400, 7
        %v402 = vsub.s32 0, %v401
        %v403 = vrot.slane %v398, %v402
        %v405 = vadd.f32 %v397, %v403
        %v406 = vld [vmem:[%s298] sm:$0xf]
        %v407 = vunpack.c.l.bf16 %v406
        %v408 = vadd.f32 %v405, %v407
        %v409 = vpack.c.bf16 %v408, %v408
        %vm410 = vcmask 257024
        %411 = vst.msk [vmem:[%s305] sm:$0xf] %vm410, %v409
      $region44: #{partial_model_forward.19} parent=35 // pred_fallthru
        _
      %p412 = scmp.lt.s32.totalorder %s20, 1
      %s413 = scalar_select %p412, %s20, 1
      %p414 = scmp.lt.s32.totalorder %s21, 0
      %s415 = scalar_select %p414, %s21, 0
      %s416 = sadd.s32 %s415, %s413
      %s417 = smul.addr %s416, 4
      %s418 = scalar_lea.vmem %s4, %s417
      // Predicated region
      $region45: #{partial_model_forward.19} parent=35 // pred_check
        %p419 = pneg %p164
      $region46: #{partial_model_forward.19} parent=35 // pred_check_branch
        %421 = sbr.rel (%p419) target = $region48
      $region47: #{partial_model_forward.19} parent=35 // pred_region
        _
      $region48: #{partial_model_forward.19} parent=35 // pred_fallthru
        _
    $region36: #{partial_model_forward.19} parent=5 // pred_fallthru
      _
    %p422 = scmp.le.s32.totalorder 2, %s10
    // Predicated region
    $region49: #{partial_model_forward.19} parent=5 // pred_check
      %p423 = pneg %p422
    $region50: #{partial_model_forward.19} parent=5 // pred_check_branch
      %425 = sbr.rel (%p423) target = $region52
    $region51: #{partial_model_forward.19} parent=5 // pred_region
      %s426 = ssub.s32 %s10, 2
      // Predicated region
      $region53: #{partial_model_forward.19} parent=51 // pred_check
        %p427 = pneg %p170
      $region54: #{partial_model_forward.19} parent=51 // pred_check_branch
        %429 = sbr.rel (%p427) target = $region56
      $region55: #{partial_model_forward.19} parent=51 // pred_region
        %p430 = scmp.lt.s32.totalorder %s23, 1
        %s431 = scalar_select %p430, %s23, 1
        %p432 = scmp.lt.s32.totalorder %s24, 0
        %s433 = scalar_select %p432, %s24, 0
        %s434 = sadd.s32 %s433, %s431
        %s435 = smul.addr %s434, 4
        %s436 = scalar_lea.vmem %s4, %s435
      $region56: #{partial_model_forward.19} parent=51 // pred_fallthru
        _
    $region52: #{partial_model_forward.19} parent=5 // pred_fallthru
      _
  $region6: #{partial_model_forward.19} parent=0 // loop_footer
    %s14 = sadd.s32 1, %s10
  $region7: #{partial_model_forward.19} parent=0 // loop_footer_branch
    %9 = sbr.rel target = $region3
  $region8: #{partial_model_forward.19} parent=0 // loop_exit
    _

// kernel: partial_model_forward.25
$region0: #{partial_model_forward.25}
  #allocation0 [shape = 'u32[]', space=smem, size = 0x4, offset = 0x4, fixed_abs, tag = 'smem constant byte address 0x4 - core index']
  #allocation1 [shape = 'u32[144,128]{1,0:T(1,128)}', space=vmem, size = 0x12000, scoped, tag = 'internal scratch']
  #allocation2 [shape = 'f32[2,32]{1,0:T(2,128)}', space=vmem, size = 0x400, scoped, tag = 'scratch operand']
  %s0 = inlined_call_operand.vmem [shape: bf16[2,32], index: 0, kind: input, shape index: {}]
  %s1 = inlined_call_operand.vmem [shape: f32[1,32], index: 1, kind: input, shape index: {}]
  %s2 = inlined_call_operand.vmem [shape: bf16[32,64], index: 2, kind: input, shape index: {}]
  %s3 = inlined_call_operand.vmem [shape: f32[1,64], index: 3, kind: input, shape index: {}]
  %s4 = inlined_call_operand.vmem [shape: bf16[64,32], index: 4, kind: input, shape index: {}]
  %s5 = inlined_call_operand.vmem [shape: f32[1,2,32], index: 5, kind: output, shape index: {}]
  %s6 = sld [smem:[#allocation0]]
  $region38: #{partial_model_forward.25} parent=0
    _
  %s8 = ssub.s32 1, %s6
  %s9 = scalar_select 0, %s8, %s6
  // Predicated region
  $region2: #{partial_model_forward.25} parent=0 // pred_check
    _
  $region3: #{partial_model_forward.25} parent=0 // pred_check_branch
    %11 = sbr.rel (0) target = $region5
  $region4: #{partial_model_forward.25} parent=0 // pred_region
    _
  $region5: #{partial_model_forward.25} parent=0 // pred_fallthru
    _
  // Predicated region
  $region6: #{partial_model_forward.25} parent=0 // pred_check
    _
  $region7: #{partial_model_forward.25} parent=0 // pred_check_branch
    %13 = sbr.rel (0) target = $region9
  $region8: #{partial_model_forward.25} parent=0 // pred_region
    _
  $region9: #{partial_model_forward.25} parent=0 // pred_fallthru
    _
  // Predicated region
  $region10: #{partial_model_forward.25} parent=0 // pred_check
    _
  $region11: #{partial_model_forward.25} parent=0 // pred_check_branch
    %15 = sbr.rel (0) target = $region13
  $region12: #{partial_model_forward.25} parent=0 // pred_region
    %s16 = sadd.s32 0, 0
    %p17 = scmp.lt.s32.totalorder %s16, 0
    %s18 = scalar_select %p17, %s16, 0
    %s19 = smul.addr %s18, 4
    %s20 = scalar_lea.vmem %s2, %s19
    %s21 = sadd.s32 0, 0
  $region13: #{partial_model_forward.25} parent=0 // pred_fallthru
    _
  // Predicated region
  $region14: #{partial_model_forward.25} parent=0 // pred_check
    _
  $region15: #{partial_model_forward.25} parent=0 // pred_check_branch
    %23 = sbr.rel (0) target = $region17
  $region16: #{partial_model_forward.25} parent=0 // pred_region
    %s24 = sadd.s32 0, 0
    %p25 = scmp.lt.s32.totalorder %s24, 0
    %s26 = scalar_select %p25, %s24, 0
    %s27 = scalar_lea.vmem %s3, %s26
    %s28 = sadd.s32 0, 0
  $region17: #{partial_model_forward.25} parent=0 // pred_fallthru
    _
  // Predicated region
  $region18: #{partial_model_forward.25} parent=0 // pred_check
    _
  $region19: #{partial_model_forward.25} parent=0 // pred_check_branch
    %30 = sbr.rel (0) target = $region21
  $region20: #{partial_model_forward.25} parent=0 // pred_region
    %s31 = sadd.s32 0, 0
    %s32 = smul.u32 8, %s31
    %p33 = scmp.lt.s32.totalorder %s32, 7
    %s34 = scalar_select %p33, %s32, 7
    %s35 = smul.addr %s34, 4
    %s36 = scalar_lea.vmem %s4, %s35
    %s37 = sadd.s32 0, 0
    %s38 = smul.u32 8, %s37
  $region21: #{partial_model_forward.25} parent=0 // pred_fallthru
    _
  %s39 = sadd.s32 0, 0
  %p40 = scmp.lt.s32.totalorder %s39, 0
  %s41 = scalar_select %p40, %s39, 0
  %s42 = smul.addr %s41, 4
  %s43 = scalar_lea.vmem %s2, %s42
  %s44 = sadd.s32 0, 0
  %p45 = scmp.lt.s32.totalorder %s44, 0
  %s46 = scalar_select %p45, %s44, 0
  %s47 = scalar_lea.vmem %s3, %s46
  %s48 = sadd.s32 0, 0
  %s49 = smul.u32 8, %s48
  %p50 = scmp.lt.s32.totalorder %s49, 7
  %s51 = scalar_select %p50, %s49, 7
  %s52 = smul.addr %s51, 4
  %s53 = scalar_lea.vmem %s4, %s52
  %s54 = sadd.s32 0, 0
  %p55 = scmp.lt.s32.totalorder %s54, 0
  %s56 = scalar_select %p55, %s54, 0
  %s57 = smul.addr %s56, 4
  %s58 = scalar_lea.vmem %s2, %s57
  %s59 = sadd.s32 0, 0
  %s60 = sadd.s32 0, 0
  %p61 = scmp.lt.s32.totalorder %s60, 0
  %s62 = scalar_select %p61, %s60, 0
  %s63 = scalar_lea.vmem %s3, %s62
  %s64 = sadd.s32 0, 0
  %s65 = sadd.s32 0, 0
  %s66 = smul.u32 8, %s65
  %p67 = scmp.lt.s32.totalorder %s66, 7
  %s68 = scalar_select %p67, %s66, 7
  %s69 = smul.addr %s68, 4
  %s70 = scalar_lea.vmem %s4, %s69
  %s71 = sadd.s32 0, 0
  %s72 = smul.u32 8, %s71
  %p74 = scmp.eq.s32.totalorder 0, 0
  // Predicated region
  $region22: #{partial_model_forward.25} parent=0 // pred_check
    %p75 = pneg %p74
  $region23: #{partial_model_forward.25} parent=0 // pred_check_branch
    %77 = sbr.rel (%p75) target = $region25
  $region24: #{partial_model_forward.25} parent=0 // pred_region
    %vm78 = vcmask 254976
    %79 = vst.msk [vmem:[#allocation2] sm:$0x3] %vm78, 0.0
  $region25: #{partial_model_forward.25} parent=0 // pred_fallthru
    _
  %v80 = vld [vmem:[%s0] sm:$0x1]
  %v81 = vunpack.c.l.bf16 %v80
  %v82 = vld [vmem:[%s1] sm:$0x1]
  %v84 = vlaneseq
  %v85 = vshrl.u32 %v84, 7
  %v86 = vsub.s32 0, %v85
  %v87 = vrot.slane %v82, %v86
  %v89 = vsub.f32 %v81, %v87
  %v90 = vpack.c.bf16 %v89, %v89
  %v91 = vld [vmem:[%s58] sm:$0xf]
  %v92 = vld [vmem:[%s58 + $0x4] sm:$0xf]
  %v93 = vld [vmem:[%s58 + $0x8] sm:$0xf]
  %v94 = vld [vmem:[%s58 + $0xc] sm:$0xf]
  %v95 = vld [vmem:[%s63] sm:$0x1]
  %v97 = vlaneseq
  %v98 = vshrl.u32 %v97, 7
  %v99 = vsub.s32 0, %v98
  %v100 = vrot.slane %v95, %v99
  %v106 = vunpack.c.l.b16 %v91
  %v107 = vunpack.c.l.b16 %v92
  %v108 = vunpack.c.l.b16 %v93
  %v109 = vunpack.c.l.b16 %v94
  %v110 = vpack.c.b16 %v107, %v106
  %v111 = vpack.c.b16 %v109, %v108
  %vm114 = vcmask 261120
  %v116 = vsel %vm114, %v90, 0
  %118 = vmatprep.subr.bf16.mxu0 0
  %119 = vmatpush1.bf16.msra.mxu0 %v110
  %120 = vmatprep.subr.bf16.mxu0 0
  %121 = vmatpush1.bf16.msra.mxu0 %v111
  %122 = vmatprep.subr.bf16.mxu0 0
  %123 = vmatpush1.bf16.msra.mxu0 0
  %124 = vmatprep.subr.bf16.mxu0 0
  %125 = vmatpush1.bf16.msra.mxu0 0
  %126 = vmatprep.subr.bf16.mxu0 0
  %127 = vmatpush1.bf16.msra.mxu0 0
  %128 = vmatprep.subr.bf16.mxu0 0
  %129 = vmatpush1.bf16.msra.mxu0 0
  %130 = vmatprep.subr.bf16.mxu0 0
  %131 = vmatpush1.bf16.msra.mxu0 0
  %132 = vmatprep.subr.bf16.mxu0 0
  %133 = vmatpush1.bf16.msra.mxu0 0
  %134 = vmatprep.subr.bf16.mxu0 0
  %135 = vmatpush1.bf16.msra.mxu0 0
  %136 = vmatprep.subr.bf16.mxu0 0
  %137 = vmatpush1.bf16.msra.mxu0 0
  %138 = vmatprep.subr.bf16.mxu0 0
  %139 = vmatpush1.bf16.msra.mxu0 0
  %140 = vmatprep.subr.bf16.mxu0 0
  %141 = vmatpush1.bf16.msra.mxu0 0
  %142 = vmatprep.subr.bf16.mxu0 0
  %143 = vmatpush1.bf16.msra.mxu0 0
  %144 = vmatprep.subr.bf16.mxu0 0
  %145 = vmatpush1.bf16.msra.mxu0 0
  %146 = vmatprep.subr.bf16.mxu0 0
  %147 = vmatpush1.bf16.msra.mxu0 0
  %148 = vmatprep.subr.bf16.mxu0 0
  %149 = vmatpush1.bf16.msra.mxu0 0
  %150 = vmatprep.mubr.bf16.mxu0 0
  %151 = vmatmul.mubr.bf16.gmra.mrb[0].mxu0 %v116
  %v152 = vpop.f32.mrb[0].mxu0
  %v153 = vadd.f32 %v100, %v152
  %v154 = vpop.f32.mrb[0].mxu0
  %v155 = vpop.f32.mrb[0].mxu0
  %v156 = vpop.f32.mrb[0].mxu0
  %157 = vdwg.mxu0
  %v158 = vmax.f32 %v153, 0.0
  %v159 = vld [vmem:[#allocation2] sm:$0x3]
  %v160 = vpack.c.bf16 %v158, %v158
  %v161 = vld [vmem:[%s70] sm:$0xf]
  %v162 = vld [vmem:[%s70 + $0x4] sm:$0xf]
  %v163 = vld [vmem:[%s70 + $0x8] sm:$0xf]
  %v164 = vld [vmem:[%s70 + $0xc] sm:$0xf]
  %v165 = vld [vmem:[%s70 + $0x10] sm:$0xf]
  %v166 = vld [vmem:[%s70 + $0x14] sm:$0xf]
  %v167 = vld [vmem:[%s70 + $0x18] sm:$0xf]
  %v168 = vld [vmem:[%s70 + $0x1c] sm:$0xf]
  %v177 = vunpack.c.l.b16 %v161
  %v178 = vunpack.c.l.b16 %v162
  %v179 = vunpack.c.l.b16 %v163
  %v180 = vunpack.c.l.b16 %v164
  %v181 = vunpack.c.l.b16 %v165
  %v182 = vunpack.c.l.b16 %v166
  %v183 = vunpack.c.l.b16 %v167
  %v184 = vunpack.c.l.b16 %v168
  %v185 = vpack.c.b16 %v178, %v177
  %v186 = vpack.c.b16 %v180, %v179
  %v187 = vpack.c.b16 %v182, %v181
  %v188 = vpack.c.b16 %v184, %v183
  %vm193 = vcmask 523264
  %v195 = vsel %vm193, %v160, 0
  %197 = vmatprep.subr.bf16.mxu0 0
  %198 = vmatpush1.bf16.msra.mxu0 %v185
  %199 = vmatprep.subr.bf16.mxu0 0
  %200 = vmatpush1.bf16.msra.mxu0 %v186
  %201 = vmatprep.subr.bf16.mxu0 0
  %202 = vmatpush1.bf16.msra.mxu0 %v187
  %203 = vmatprep.subr.bf16.mxu0 0
  %204 = vmatpush1.bf16.msra.mxu0 %v188
  %205 = vmatprep.subr.bf16.mxu0 0
  %206 = vmatpush1.bf16.msra.mxu0 0
  %207 = vmatprep.subr.bf16.mxu0 0
  %208 = vmatpush1.bf16.msra.mxu0 0
  %209 = vmatprep.subr.bf16.mxu0 0
  %210 = vmatpush1.bf16.msra.mxu0 0
  %211 = vmatprep.subr.bf16.mxu0 0
  %212 = vmatpush1.bf16.msra.mxu0 0
  %213 = vmatprep.subr.bf16.mxu0 0
  %214 = vmatpush1.bf16.msra.mxu0 0
  %215 = vmatprep.subr.bf16.mxu0 0
  %216 = vmatpush1.bf16.msra.mxu0 0
  %217 = vmatprep.subr.bf16.mxu0 0
  %218 = vmatpush1.bf16.msra.mxu0 0
  %219 = vmatprep.subr.bf16.mxu0 0
  %220 = vmatpush1.bf16.msra.mxu0 0
  %221 = vmatprep.subr.bf16.mxu0 0
  %222 = vmatpush1.bf16.msra.mxu0 0
  %223 = vmatprep.subr.bf16.mxu0 0
  %224 = vmatpush1.bf16.msra.mxu0 0
  %225 = vmatprep.subr.bf16.mxu0 0
  %226 = vmatpush1.bf16.msra.mxu0 0
  %227 = vmatprep.subr.bf16.mxu0 0
  %228 = vmatpush1.bf16.msra.mxu0 0
  %229 = vmatprep.mubr.bf16.mxu0 0
  %230 = vmatmul.mubr.bf16.gmra.mrb[0].mxu0 %v195
  %v231 = vpop.f32.mrb[0].mxu0
  %v232 = vadd.f32 0.0, %v231
  %v233 = vpop.f32.mrb[0].mxu0
  %v234 = vpop.f32.mrb[0].mxu0
  %v235 = vpop.f32.mrb[0].mxu0
  %236 = vdwg.mxu0
  %v237 = vadd.f32 %v159, %v232
  %vm238 = vcmask 254976
  %239 = vst.msk [vmem:[#allocation2] sm:$0x3] %vm238, %v237
  // Predicated region
  $region26: #{partial_model_forward.25} parent=0 // pred_check
    %p240 = pneg %p74
  $region27: #{partial_model_forward.25} parent=0 // pred_check_branch
    %242 = sbr.rel (%p240) target = $region29
  $region28: #{partial_model_forward.25} parent=0 // pred_region
    %v243 = vld [vmem:[#allocation2] sm:$0x3]
    %244 = vst.msk [vmem:[%s5] sm:$0x3] %vm238, %v243
  $region29: #{partial_model_forward.25} parent=0 // pred_fallthru
    _
  // Predicated region
  $region30: #{partial_model_forward.25} parent=0 // pred_check
    _
  $region31: #{partial_model_forward.25} parent=0 // pred_check_branch
    %246 = sbr.rel (0) target = $region33
  $region32: #{partial_model_forward.25} parent=0 // pred_region
    _
  $region33: #{partial_model_forward.25} parent=0 // pred_fallthru
    _
  // Predicated region
  $region34: #{partial_model_forward.25} parent=0 // pred_check
    _
  $region35: #{partial_model_forward.25} parent=0 // pred_check_branch
    %248 = sbr.rel (0) target = $region37
  $region36: #{partial_model_forward.25} parent=0 // pred_region
    _
  $region37: #{partial_model_forward.25} parent=0 // pred_fallthru
    _

</llo_original>
